<compile_context>
chip_gen: v5e
topology: v5e:2x2
jax: 0.10.0
libtpu: 0.0.40
codegen_flags: <defaults>
</compile_context>

<pallas_src>
import jax
import jax.numpy as jnp
from jax import lax
from jax.experimental import pallas as pl
from jax.experimental.pallas import tpu as pltpu

# ---- small config standing in for vit_base_patch16_224 (synthetic weights) ----
B = 2              # batch
C = 3              # image channels
IMG = 32           # image size (224 in the real model)
PATCH = 16         # patch size (same as vit_base_patch16)
D = 64             # embed dim (768 in vit_base)
HEADS = 4          # 12 in vit_base
DEPTH = 2          # 12 in vit_base
MLP = 4 * D        # mlp hidden dim (mlp_ratio = 4)
NUM_CLASSES = 8    # replaced head: nn.Linear(in_features, num_classes)
HEAD_DIM = D // HEADS
N_PATCH = (IMG // PATCH) ** 2
N_TOK = N_PATCH + 1
CPP = C * PATCH * PATCH
LN_EPS = 1e-6
ATT_SCALE = float(HEAD_DIM) ** -0.5
OUT_PAD = 128      # lane-dense padded logits width (sliced to NUM_CLASSES outside)


# ----------------------------- in-kernel helpers --------------------------------

def _mm(a, b):
    """bf16 MXU matmul with f32 accumulation (casts are no-ops if already bf16)."""
    return jnp.dot(a.astype(jnp.bfloat16), b.astype(jnp.bfloat16),
                   preferred_element_type=jnp.float32)


def _mm_nt(a, b):
    """A @ B^T via dot_general contracting dims (no materialized transpose)."""
    return lax.dot_general(a.astype(jnp.bfloat16), b.astype(jnp.bfloat16),
                           dimension_numbers=(((1,), (1,)), ((), ())),
                           preferred_element_type=jnp.float32)


def _layernorm(x, g, b):
    mu = jnp.mean(x, axis=-1, keepdims=True)
    xc = x - mu
    var = jnp.mean(xc * xc, axis=-1, keepdims=True)
    return xc * lax.rsqrt(var + LN_EPS) * g + b


def _gelu(x):
    # TODO(synk): timm ViT uses exact (erf) GELU; tanh approximation used here.
    c = jnp.float32(0.7978845608028654)  # sqrt(2/pi)
    return 0.5 * x * (1.0 + jnp.tanh(c * (x + 0.044715 * x * x * x)))


# ----------------------------- fused ViT kernel ---------------------------------

def _vit_fused_kernel(
    patches_ref,                 # (BT, CPP)  bf16 (cls rows are zeros)
    mask_ref,                    # (BT, BT)   f32  block-diagonal additive mask
    addend_ref,                  # (BT, D)    f32  cls/patch bias + pos embed
    patch_w_ref,                 # (CPP, D)   bf16
    n1g_ref, n1b_ref,            # (DEPTH, 1, D)  f32
    qw_ref, kw_ref, vw_ref,      # (DEPTH*HEADS, D, HEAD_DIM)  bf16
    qb_ref, kb_ref, vb_ref,      # (DEPTH*HEADS, 1, HEAD_DIM)  f32
    pw_ref,                      # (DEPTH*HEADS, HEAD_DIM, D)  bf16
    pb_ref,                      # (DEPTH, 1, D)  f32
    n2g_ref, n2b_ref,            # (DEPTH, 1, D)  f32
    fc1w_ref,                    # (DEPTH, D, MLP) bf16
    fc1b_ref,                    # (DEPTH, 1, MLP) f32
    fc2w_ref,                    # (DEPTH, MLP, D) bf16
    fc2b_ref,                    # (DEPTH, 1, D)   f32
    ng_ref, nb_ref,              # (1, D)          f32
    headw_ref,                   # (D, OUT_PAD)    bf16 (zero-padded past NUM_CLASSES)
    headb_ref,                   # (1, OUT_PAD)    f32
    out_ref,                     # (BT, OUT_PAD)   f32
):
    mask = mask_ref[...]                                              # (BT, BT)

    # --- patch embedding + cls token + positional embedding (whole batch) -------
    x = _mm(patches_ref[...], patch_w_ref[...]) + addend_ref[...]     # (BT, D) f32

    # --- transformer blocks (DEPTH / HEADS small & static -> unrolled) ----------
    for d in range(DEPTH):
        # ---- attention sub-block --------------------------------------------
        h = _layernorm(x, n1g_ref[d], n1b_ref[d]).astype(jnp.bfloat16)

        # per-head projections, staged so MXU pushes batch up
        qs, ks, vs = [], [], []
        for hh in range(HEADS):
            dh = d * HEADS + hh
            qs.append(_mm(h, qw_ref[dh]) + qb_ref[dh])                 # (BT, HD) f32
            ks.append(_mm(h, kw_ref[dh]) + kb_ref[dh])
            vs.append((_mm(h, vw_ref[dh]) + vb_ref[dh]).astype(jnp.bfloat16))

        ss = [_mm_nt(qs[hh], ks[hh]) * jnp.float32(ATT_SCALE) + mask
              for hh in range(HEADS)]                                  # (BT, BT)

        ps = []
        for s in ss:
            m = jnp.max(s, axis=-1, keepdims=True)
            p = jnp.exp(s - m)
            p = p * pl.reciprocal(jnp.sum(p, axis=-1, keepdims=True), approx=False)
            ps.append(p.astype(jnp.bfloat16))

        os_ = [_mm(ps[hh], vs[hh]).astype(jnp.bfloat16) for hh in range(HEADS)]

        attn = pb_ref[d]                                               # (1, D) bias
        for hh in range(HEADS):
            attn = attn + _mm(os_[hh], pw_ref[d * HEADS + hh])         # (BT, D)
        x = x + attn                                                   # residual

        # ---- MLP sub-block ----------------------------------------------------
        h = _layernorm(x, n2g_ref[d], n2b_ref[d])
        h = _gelu(_mm(h, fc1w_ref[d]) + fc1b_ref[d])
        x = x + _mm(h, fc2w_ref[d]) + fc2b_ref[d]                      # residual

    # --- final norm + replaced classifier head (all tokens; cls sliced outside) -
    y = _layernorm(x, ng_ref[...], nb_ref[...])
    out_ref[...] = (_mm(y, headw_ref[...]) + headb_ref[...]).astype(out_ref.dtype)


# ----------------------------- one-time weight prep ------------------------------

def prepare_params(params):
    """Stack / split / cast / pad all weights once (do NOT call per forward)."""
    bf16 = jnp.bfloat16
    pos = params["pos_embed"][0]                                       # (N_TOK, D)
    addend = jnp.concatenate(
        [params["cls_token"].reshape(1, D) + pos[0:1],
         params["patch_b"].reshape(1, D) + pos[1:]], axis=0)           # (N_TOK, D)

    qw, kw, vw, qb, kb, vb, pw = [], [], [], [], [], [], []
    n1g, n1b, n2g, n2b, pb = [], [], [], [], []
    fc1w, fc1b, fc2w, fc2b = [], [], [], []
    for blk in params["blocks"]:
        w, bqkv = blk["qkv_w"], blk["qkv_b"]
        for dst, col in ((qw, 0), (kw, 1), (vw, 2)):
            dst.append(w[:, col * D:(col + 1) * D]
                       .reshape(D, HEADS, HEAD_DIM).transpose(1, 0, 2))  # (H, D, HD)
        for dst, col in ((qb, 0), (kb, 1), (vb, 2)):
            dst.append(bqkv[col * D:(col + 1) * D].reshape(HEADS, 1, HEAD_DIM))
        pw.append(blk["proj_w"].reshape(HEADS, HEAD_DIM, D))
        pb.append(blk["proj_b"].reshape(1, D))
        n1g.append(blk["norm1_g"].reshape(1, D)); n1b.append(blk["norm1_b"].reshape(1, D))
        n2g.append(blk["norm2_g"].reshape(1, D)); n2b.append(blk["norm2_b"].reshape(1, D))
        fc1w.append(blk["fc1_w"]); fc1b.append(blk["fc1_b"].reshape(1, MLP))
        fc2w.append(blk["fc2_w"]); fc2b.append(blk["fc2_b"].reshape(1, D))

    st = jnp.stack
    merge = lambda xs: jnp.concatenate(xs, axis=0)     # (DEPTH*HEADS, ...)
    pad_c = OUT_PAD - NUM_CLASSES
    return {
        "patch_w": params["patch_w"].astype(bf16),
        "addend": addend,
        "n1g": st(n1g), "n1b": st(n1b),
        "qw": merge(qw).astype(bf16), "kw": merge(kw).astype(bf16),
        "vw": merge(vw).astype(bf16),
        "qb": merge(qb), "kb": merge(kb), "vb": merge(vb),
        "pw": merge(pw).astype(bf16), "pb": st(pb),
        "n2g": st(n2g), "n2b": st(n2b),
        "fc1w": st(fc1w).astype(bf16), "fc1b": st(fc1b),
        "fc2w": st(fc2w).astype(bf16), "fc2b": st(fc2b),
        "ng": params["norm_g"].reshape(1, D), "nb": params["norm_b"].reshape(1, D),
        "headw": jnp.pad(params["head_w"], ((0, 0), (0, pad_c))).astype(bf16),
        "headb": jnp.pad(params["head_b"].reshape(1, -1), ((0, 0), (0, pad_c))),
    }


# ----------------------------- forward wrapper -----------------------------------

def vit_forward(x, pp):
    """x: (B, C, IMG, IMG) NCHW float32, pp: prepare_params(...) -> (B, NUM_CLASSES)."""
    Bx = x.shape[0]
    BT = Bx * N_TOK
    bf16 = jnp.bfloat16

    # Unfold into per-patch pixel vectors; prepend a zero row per image so the
    # patch-embed matmul also produces a (zero) row for the cls-token slot.
    p = x.reshape(Bx, C, IMG // PATCH, PATCH, IMG // PATCH, PATCH)
    p = p.transpose(0, 2, 4, 1, 3, 5).reshape(Bx, N_PATCH, CPP)
    patches = jnp.concatenate([jnp.zeros((Bx, 1, CPP), p.dtype), p], axis=1)
    patches = patches.reshape(BT, CPP).astype(bf16)

    # Per-token additive term tiled over the batch, and the block-diagonal
    # attention mask that keeps the folded batch's images independent.
    addend = jnp.tile(pp["addend"], (Bx, 1))                           # (BT, D)
    img = jnp.repeat(jnp.arange(Bx), N_TOK)
    mask = jnp.where(img[:, None] == img[None, :],
                     jnp.float32(0.0), jnp.float32(-1e30))             # (BT, BT)

    args = [
        patches, mask, addend, pp["patch_w"],
        pp["n1g"], pp["n1b"],
        pp["qw"], pp["kw"], pp["vw"], pp["qb"], pp["kb"], pp["vb"],
        pp["pw"], pp["pb"],
        pp["n2g"], pp["n2b"],
        pp["fc1w"], pp["fc1b"], pp["fc2w"], pp["fc2b"],
        pp["ng"], pp["nb"], pp["headw"], pp["headb"],
    ]

    def _full(a):
        nd = a.ndim
        return pl.BlockSpec(a.shape, lambda i, _nd=nd: (0,) * _nd)

    out = pl.pallas_call(
        _vit_fused_kernel,
        out_shape=jax.ShapeDtypeStruct((BT, OUT_PAD), jnp.float32),
        grid=(1,),                                   # whole batch in one step
        in_specs=[_full(a) for a in args],
        out_specs=pl.BlockSpec((BT, OUT_PAD), lambda i: (0, 0)),
        compiler_params=pltpu.CompilerParams(
            dimension_semantics=("arbitrary",)),
    )(*args)

    # cls-token row of each image, first NUM_CLASSES lanes.
    return out.reshape(Bx, N_TOK, OUT_PAD)[:, 0, :NUM_CLASSES]


# ----------------------------- pure-JAX reference --------------------------------

def vit_reference(x, params):
    Bx = x.shape[0]
    p = x.reshape(Bx, C, IMG // PATCH, PATCH, IMG // PATCH, PATCH)
    p = p.transpose(0, 2, 4, 1, 3, 5).reshape(Bx, N_PATCH, CPP)
    tok = p @ params["patch_w"] + params["patch_b"]
    cls = jnp.broadcast_to(params["cls_token"], (Bx, 1, D))
    xs = jnp.concatenate([cls, tok], axis=1) + params["pos_embed"]

    def ln(v, g, b):
        mu = v.mean(-1, keepdims=True)
        vc = v - mu
        var = (vc * vc).mean(-1, keepdims=True)
        return vc / jnp.sqrt(var + LN_EPS) * g + b

    cgelu = 0.7978845608028654
    for blk in params["blocks"]:
        h = ln(xs, blk["norm1_g"], blk["norm1_b"])
        qkv = h @ blk["qkv_w"] + blk["qkv_b"]
        qkv = qkv.reshape(Bx, N_TOK, 3, HEADS, HEAD_DIM).transpose(2, 0, 3, 1, 4)
        q, k, v = qkv[0], qkv[1], qkv[2]
        s = jnp.einsum("bhqd,bhkd->bhqk", q, k) * ATT_SCALE
        a = jax.nn.softmax(s, axis=-1)
        o = jnp.einsum("bhqk,bhkd->bhqd", a, v)
        o = o.transpose(0, 2, 1, 3).reshape(Bx, N_TOK, D)
        xs = xs + o @ blk["proj_w"] + blk["proj_b"]
        h = ln(xs, blk["norm2_g"], blk["norm2_b"])
        h = h @ blk["fc1_w"] + blk["fc1_b"]
        h = 0.5 * h * (1.0 + jnp.tanh(cgelu * (h + 0.044715 * h ** 3)))
        xs = xs + h @ blk["fc2_w"] + blk["fc2_b"]
    xs = ln(xs, params["norm_g"], params["norm_b"])
    return xs[:, 0] @ params["head_w"] + params["head_b"]


# ----------------------------- synthetic parameters -----------------------------
# TODO(synk): real module loads pretrained timm weights; here they are synthetic.

def init_params(key):
    def nrm(k, shape, scale=0.02):
        return (scale * jax.random.normal(k, shape)).astype(jnp.float32)

    keys = iter(jax.random.split(key, 64))
    params = {
        "patch_w": nrm(next(keys), (CPP, D)),
        "patch_b": jnp.zeros((D,), jnp.float32),
        "cls_token": nrm(next(keys), (1, 1, D)),
        "pos_embed": nrm(next(keys), (1, N_TOK, D)),
        "norm_g": jnp.ones((D,), jnp.float32),
        "norm_b": jnp.zeros((D,), jnp.float32),
        "head_w": nrm(next(keys), (D, NUM_CLASSES)),
        "head_b": jnp.zeros((NUM_CLASSES,), jnp.float32),
        "blocks": [],
    }
    for _ in range(DEPTH):
        params["blocks"].append({
            "norm1_g": jnp.ones((D,), jnp.float32),
            "norm1_b": jnp.zeros((D,), jnp.float32),
            "qkv_w": nrm(next(keys), (D, 3 * D)),
            "qkv_b": jnp.zeros((3 * D,), jnp.float32),
            "proj_w": nrm(next(keys), (D, D)),
            "proj_b": jnp.zeros((D,), jnp.float32),
            "norm2_g": jnp.ones((D,), jnp.float32),
            "norm2_b": jnp.zeros((D,), jnp.float32),
            "fc1_w": nrm(next(keys), (D, MLP)),
            "fc1_b": jnp.zeros((MLP,), jnp.float32),
            "fc2_w": nrm(next(keys), (MLP, D)),
            "fc2_b": jnp.zeros((D,), jnp.float32),
        })
    return params


if __name__ == "__main__":
    key = jax.random.PRNGKey(0)
    pkey, xkey = jax.random.split(key)
    params = init_params(pkey)
    x = jax.random.normal(xkey, (B, C, IMG, IMG), dtype=jnp.float32)

    # One-time weight prep (stack / per-head split / bf16 cast / head padding).
    prepped = jax.tree_util.tree_map(jax.block_until_ready, prepare_params(params))

    fwd = jax.jit(vit_forward)
    logits = jax.block_until_ready(fwd(x, prepped))
    assert logits.shape == (B, NUM_CLASSES), logits.shape
    assert bool(jnp.all(jnp.isfinite(logits)))

    ref = vit_reference(x, params)
    max_err = jnp.max(jnp.abs(logits - ref))
    assert bool(jnp.allclose(logits, ref, atol=5e-2, rtol=5e-2)), float(max_err)
    print("KERNEL_OK")
</pallas_src>

<mosaic_0001>
module attributes {stable_mosaic.version = 11 : i64} {
  func.func @_vit_fused_kernel(%arg0: i32, %arg1: memref<10x768xbf16, #tpu.memory_space<vmem>>, %arg2: memref<10x10xf32, #tpu.memory_space<vmem>>, %arg3: memref<10x64xf32, #tpu.memory_space<vmem>>, %arg4: memref<768x64xbf16, #tpu.memory_space<vmem>>, %arg5: memref<2x1x64xf32, #tpu.memory_space<vmem>>, %arg6: memref<2x1x64xf32, #tpu.memory_space<vmem>>, %arg7: memref<8x64x16xbf16, #tpu.memory_space<vmem>>, %arg8: memref<8x64x16xbf16, #tpu.memory_space<vmem>>, %arg9: memref<8x64x16xbf16, #tpu.memory_space<vmem>>, %arg10: memref<8x1x16xf32, #tpu.memory_space<vmem>>, %arg11: memref<8x1x16xf32, #tpu.memory_space<vmem>>, %arg12: memref<8x1x16xf32, #tpu.memory_space<vmem>>, %arg13: memref<8x16x64xbf16, #tpu.memory_space<vmem>>, %arg14: memref<2x1x64xf32, #tpu.memory_space<vmem>>, %arg15: memref<2x1x64xf32, #tpu.memory_space<vmem>>, %arg16: memref<2x1x64xf32, #tpu.memory_space<vmem>>, %arg17: memref<2x64x256xbf16, #tpu.memory_space<vmem>>, %arg18: memref<2x1x256xf32, #tpu.memory_space<vmem>>, %arg19: memref<2x256x64xbf16, #tpu.memory_space<vmem>>, %arg20: memref<2x1x64xf32, #tpu.memory_space<vmem>>, %arg21: memref<1x64xf32, #tpu.memory_space<vmem>>, %arg22: memref<1x64xf32, #tpu.memory_space<vmem>>, %arg23: memref<64x128xbf16, #tpu.memory_space<vmem>>, %arg24: memref<1x128xf32, #tpu.memory_space<vmem>>, %arg25: memref<10x128xf32, #tpu.memory_space<vmem>>) attributes {dimension_semantics = [#tpu.dimension_semantics<arbitrary>], iteration_bounds = array<i64: 1>, scalar_prefetch = 0 : i64, scratch_operands = 0 : i64, tpu.core_type = #tpu.core_type<tc>, window_params = [{pipeline_mode = #tpu.pipeline_mode<synchronous>, transform_indices = @transform_0, window_bounds = array<i64: 10, 768>}, {pipeline_mode = #tpu.pipeline_mode<synchronous>, transform_indices = @transform_1, window_bounds = array<i64: 10, 10>}, {pipeline_mode = #tpu.pipeline_mode<synchronous>, transform_indices = @transform_2, window_bounds = array<i64: 10, 64>}, {pipeline_mode = #tpu.pipeline_mode<synchronous>, transform_indices = @transform_3, window_bounds = array<i64: 768, 64>}, {pipeline_mode = #tpu.pipeline_mode<synchronous>, transform_indices = @transform_4, window_bounds = array<i64: 2, 1, 64>}, {pipeline_mode = #tpu.pipeline_mode<synchronous>, transform_indices = @transform_5, window_bounds = array<i64: 2, 1, 64>}, {pipeline_mode = #tpu.pipeline_mode<synchronous>, transform_indices = @transform_6, window_bounds = array<i64: 8, 64, 16>}, {pipeline_mode = #tpu.pipeline_mode<synchronous>, transform_indices = @transform_7, window_bounds = array<i64: 8, 64, 16>}, {pipeline_mode = #tpu.pipeline_mode<synchronous>, transform_indices = @transform_8, window_bounds = array<i64: 8, 64, 16>}, {pipeline_mode = #tpu.pipeline_mode<synchronous>, transform_indices = @transform_9, window_bounds = array<i64: 8, 1, 16>}, {pipeline_mode = #tpu.pipeline_mode<synchronous>, transform_indices = @transform_10, window_bounds = array<i64: 8, 1, 16>}, {pipeline_mode = #tpu.pipeline_mode<synchronous>, transform_indices = @transform_11, window_bounds = array<i64: 8, 1, 16>}, {pipeline_mode = #tpu.pipeline_mode<synchronous>, transform_indices = @transform_12, window_bounds = array<i64: 8, 16, 64>}, {pipeline_mode = #tpu.pipeline_mode<synchronous>, transform_indices = @transform_13, window_bounds = array<i64: 2, 1, 64>}, {pipeline_mode = #tpu.pipeline_mode<synchronous>, transform_indices = @transform_14, window_bounds = array<i64: 2, 1, 64>}, {pipeline_mode = #tpu.pipeline_mode<synchronous>, transform_indices = @transform_15, window_bounds = array<i64: 2, 1, 64>}, {pipeline_mode = #tpu.pipeline_mode<synchronous>, transform_indices = @transform_16, window_bounds = array<i64: 2, 64, 256>}, {pipeline_mode = #tpu.pipeline_mode<synchronous>, transform_indices = @transform_17, window_bounds = array<i64: 2, 1, 256>}, {pipeline_mode = #tpu.pipeline_mode<synchronous>, transform_indices = @transform_18, window_bounds = array<i64: 2, 256, 64>}, {pipeline_mode = #tpu.pipeline_mode<synchronous>, transform_indices = @transform_19, window_bounds = array<i64: 2, 1, 64>}, {pipeline_mode = #tpu.pipeline_mode<synchronous>, transform_indices = @transform_20, window_bounds = array<i64: 1, 64>}, {pipeline_mode = #tpu.pipeline_mode<synchronous>, transform_indices = @transform_21, window_bounds = array<i64: 1, 64>}, {pipeline_mode = #tpu.pipeline_mode<synchronous>, transform_indices = @transform_22, window_bounds = array<i64: 64, 128>}, {pipeline_mode = #tpu.pipeline_mode<synchronous>, transform_indices = @transform_23, window_bounds = array<i64: 1, 128>}, {pipeline_mode = #tpu.pipeline_mode<synchronous>, transform_indices = @transform_24, window_bounds = array<i64: 10, 128>}]} {
    %c0 = arith.constant 0 : index
    %c0_0 = arith.constant 0 : index
    %0 = vector.load %arg2[%c0, %c0_0] : memref<10x10xf32, #tpu.memory_space<vmem>>, vector<10x10xf32>
    %c0_1 = arith.constant 0 : index
    %c0_2 = arith.constant 0 : index
    %1 = vector.load %arg1[%c0_1, %c0_2] : memref<10x768xbf16, #tpu.memory_space<vmem>>, vector<10x768xbf16>
    %c0_3 = arith.constant 0 : index
    %c0_4 = arith.constant 0 : index
    %2 = vector.load %arg4[%c0_3, %c0_4] : memref<768x64xbf16, #tpu.memory_space<vmem>>, vector<768x64xbf16>
    %cst = arith.constant dense<0.000000e+00> : vector<10x64xf32>
    %3 = tpu.matmul %1, %2, %cst {dimension_numbers = #tpu.dot_dimension_numbers<[1], [0], [0], [1], [0, 0, 1, 1], [], []>} : vector<10x768xbf16>, vector<768x64xbf16>, vector<10x64xf32> -> vector<10x64xf32>
    %c0_5 = arith.constant 0 : index
    %c0_6 = arith.constant 0 : index
    %4 = vector.load %arg3[%c0_5, %c0_6] : memref<10x64xf32, #tpu.memory_space<vmem>>, vector<10x64xf32>
    %5 = arith.addf %3, %4 : vector<10x64xf32>
    %c0_7 = arith.constant 0 : index
    %c0_8 = arith.constant 0 : index
    %c0_9 = arith.constant 0 : index
    %6 = vector.load %arg5[%c0_7, %c0_8, %c0_9] : memref<2x1x64xf32, #tpu.memory_space<vmem>>, vector<1x1x64xf32>
    %7 = vector.shape_cast %6 : vector<1x1x64xf32> to vector<1x64xf32>
    %c0_10 = arith.constant 0 : index
    %c0_11 = arith.constant 0 : index
    %c0_12 = arith.constant 0 : index
    %8 = vector.load %arg6[%c0_10, %c0_11, %c0_12] : memref<2x1x64xf32, #tpu.memory_space<vmem>>, vector<1x1x64xf32>
    %9 = vector.shape_cast %8 : vector<1x1x64xf32> to vector<1x64xf32>
    %cst_13 = arith.constant dense<0.000000e+00> : vector<10xf32>
    %10 = vector.multi_reduction <add>, %5, %cst_13 [1] : vector<10x64xf32> to vector<10xf32>
    %11 = vector.shape_cast %10 : vector<10xf32> to vector<10x1xf32>
    %cst_14 = arith.constant 6.400000e+01 : f32
    %12 = vector.broadcast %cst_14 : f32 to vector<10x1xf32>
    %13 = arith.divf %11, %12 : vector<10x1xf32>
    %14 = vector.broadcast %13 : vector<10x1xf32> to vector<10x64xf32>
    %15 = arith.subf %5, %14 : vector<10x64xf32>
    %16 = arith.mulf %15, %15 : vector<10x64xf32>
    %cst_15 = arith.constant dense<0.000000e+00> : vector<10xf32>
    %17 = vector.multi_reduction <add>, %16, %cst_15 [1] : vector<10x64xf32> to vector<10xf32>
    %18 = vector.shape_cast %17 : vector<10xf32> to vector<10x1xf32>
    %cst_16 = arith.constant 6.400000e+01 : f32
    %19 = vector.broadcast %cst_16 : f32 to vector<10x1xf32>
    %20 = arith.divf %18, %19 : vector<10x1xf32>
    %cst_17 = arith.constant 9.99999997E-7 : f32
    %21 = vector.broadcast %cst_17 : f32 to vector<10x1xf32>
    %22 = arith.addf %20, %21 : vector<10x1xf32>
    %23 = math.rsqrt %22 : vector<10x1xf32>
    %24 = vector.broadcast %23 : vector<10x1xf32> to vector<10x64xf32>
    %25 = arith.mulf %15, %24 : vector<10x64xf32>
    %26 = vector.broadcast %7 : vector<1x64xf32> to vector<10x64xf32>
    %27 = arith.mulf %25, %26 : vector<10x64xf32>
    %28 = vector.broadcast %9 : vector<1x64xf32> to vector<10x64xf32>
    %29 = arith.addf %27, %28 : vector<10x64xf32>
    %30 = arith.truncf %29 : vector<10x64xf32> to vector<10x64xbf16>
    %c0_18 = arith.constant 0 : index
    %c0_19 = arith.constant 0 : index
    %c0_20 = arith.constant 0 : index
    %31 = vector.load %arg7[%c0_18, %c0_19, %c0_20] : memref<8x64x16xbf16, #tpu.memory_space<vmem>>, vector<1x64x16xbf16>
    %32 = vector.shape_cast %31 : vector<1x64x16xbf16> to vector<64x16xbf16>
    %cst_21 = arith.constant dense<0.000000e+00> : vector<10x16xf32>
    %33 = tpu.matmul %30, %32, %cst_21 {dimension_numbers = #tpu.dot_dimension_numbers<[1], [0], [0], [1], [0, 0, 1, 1], [], []>} : vector<10x64xbf16>, vector<64x16xbf16>, vector<10x16xf32> -> vector<10x16xf32>
    %c0_22 = arith.constant 0 : index
    %c0_23 = arith.constant 0 : index
    %c0_24 = arith.constant 0 : index
    %34 = vector.load %arg10[%c0_22, %c0_23, %c0_24] : memref<8x1x16xf32, #tpu.memory_space<vmem>>, vector<1x1x16xf32>
    %35 = vector.shape_cast %34 : vector<1x1x16xf32> to vector<1x16xf32>
    %36 = vector.broadcast %35 : vector<1x16xf32> to vector<10x16xf32>
    %37 = arith.addf %33, %36 : vector<10x16xf32>
    %c0_25 = arith.constant 0 : index
    %c0_26 = arith.constant 0 : index
    %c0_27 = arith.constant 0 : index
    %38 = vector.load %arg8[%c0_25, %c0_26, %c0_27] : memref<8x64x16xbf16, #tpu.memory_space<vmem>>, vector<1x64x16xbf16>
    %39 = vector.shape_cast %38 : vector<1x64x16xbf16> to vector<64x16xbf16>
    %cst_28 = arith.constant dense<0.000000e+00> : vector<10x16xf32>
    %40 = tpu.matmul %30, %39, %cst_28 {dimension_numbers = #tpu.dot_dimension_numbers<[1], [0], [0], [1], [0, 0, 1, 1], [], []>} : vector<10x64xbf16>, vector<64x16xbf16>, vector<10x16xf32> -> vector<10x16xf32>
    %c0_29 = arith.constant 0 : index
    %c0_30 = arith.constant 0 : index
    %c0_31 = arith.constant 0 : index
    %41 = vector.load %arg11[%c0_29, %c0_30, %c0_31] : memref<8x1x16xf32, #tpu.memory_space<vmem>>, vector<1x1x16xf32>
    %42 = vector.shape_cast %41 : vector<1x1x16xf32> to vector<1x16xf32>
    %43 = vector.broadcast %42 : vector<1x16xf32> to vector<10x16xf32>
    %44 = arith.addf %40, %43 : vector<10x16xf32>
    %c0_32 = arith.constant 0 : index
    %c0_33 = arith.constant 0 : index
    %c0_34 = arith.constant 0 : index
    %45 = vector.load %arg9[%c0_32, %c0_33, %c0_34] : memref<8x64x16xbf16, #tpu.memory_space<vmem>>, vector<1x64x16xbf16>
    %46 = vector.shape_cast %45 : vector<1x64x16xbf16> to vector<64x16xbf16>
    %cst_35 = arith.constant dense<0.000000e+00> : vector<10x16xf32>
    %47 = tpu.matmul %30, %46, %cst_35 {dimension_numbers = #tpu.dot_dimension_numbers<[1], [0], [0], [1], [0, 0, 1, 1], [], []>} : vector<10x64xbf16>, vector<64x16xbf16>, vector<10x16xf32> -> vector<10x16xf32>
    %c0_36 = arith.constant 0 : index
    %c0_37 = arith.constant 0 : index
    %c0_38 = arith.constant 0 : index
    %48 = vector.load %arg12[%c0_36, %c0_37, %c0_38] : memref<8x1x16xf32, #tpu.memory_space<vmem>>, vector<1x1x16xf32>
    %49 = vector.shape_cast %48 : vector<1x1x16xf32> to vector<1x16xf32>
    %50 = vector.broadcast %49 : vector<1x16xf32> to vector<10x16xf32>
    %51 = arith.addf %47, %50 : vector<10x16xf32>
    %52 = arith.truncf %51 : vector<10x16xf32> to vector<10x16xbf16>
    %c1 = arith.constant 1 : index
    %c0_39 = arith.constant 0 : index
    %c0_40 = arith.constant 0 : index
    %53 = vector.load %arg7[%c1, %c0_39, %c0_40] : memref<8x64x16xbf16, #tpu.memory_space<vmem>>, vector<1x64x16xbf16>
    %54 = vector.shape_cast %53 : vector<1x64x16xbf16> to vector<64x16xbf16>
    %cst_41 = arith.constant dense<0.000000e+00> : vector<10x16xf32>
    %55 = tpu.matmul %30, %54, %cst_41 {dimension_numbers = #tpu.dot_dimension_numbers<[1], [0], [0], [1], [0, 0, 1, 1], [], []>} : vector<10x64xbf16>, vector<64x16xbf16>, vector<10x16xf32> -> vector<10x16xf32>
    %c1_42 = arith.constant 1 : index
    %c0_43 = arith.constant 0 : index
    %c0_44 = arith.constant 0 : index
    %56 = vector.load %arg10[%c1_42, %c0_43, %c0_44] : memref<8x1x16xf32, #tpu.memory_space<vmem>>, vector<1x1x16xf32>
    %57 = vector.shape_cast %56 : vector<1x1x16xf32> to vector<1x16xf32>
    %58 = vector.broadcast %57 : vector<1x16xf32> to vector<10x16xf32>
    %59 = arith.addf %55, %58 : vector<10x16xf32>
    %c1_45 = arith.constant 1 : index
    %c0_46 = arith.constant 0 : index
    %c0_47 = arith.constant 0 : index
    %60 = vector.load %arg8[%c1_45, %c0_46, %c0_47] : memref<8x64x16xbf16, #tpu.memory_space<vmem>>, vector<1x64x16xbf16>
    %61 = vector.shape_cast %60 : vector<1x64x16xbf16> to vector<64x16xbf16>
    %cst_48 = arith.constant dense<0.000000e+00> : vector<10x16xf32>
    %62 = tpu.matmul %30, %61, %cst_48 {dimension_numbers = #tpu.dot_dimension_numbers<[1], [0], [0], [1], [0, 0, 1, 1], [], []>} : vector<10x64xbf16>, vector<64x16xbf16>, vector<10x16xf32> -> vector<10x16xf32>
    %c1_49 = arith.constant 1 : index
    %c0_50 = arith.constant 0 : index
    %c0_51 = arith.constant 0 : index
    %63 = vector.load %arg11[%c1_49, %c0_50, %c0_51] : memref<8x1x16xf32, #tpu.memory_space<vmem>>, vector<1x1x16xf32>
    %64 = vector.shape_cast %63 : vector<1x1x16xf32> to vector<1x16xf32>
    %65 = vector.broadcast %64 : vector<1x16xf32> to vector<10x16xf32>
    %66 = arith.addf %62, %65 : vector<10x16xf32>
    %c1_52 = arith.constant 1 : index
    %c0_53 = arith.constant 0 : index
    %c0_54 = arith.constant 0 : index
    %67 = vector.load %arg9[%c1_52, %c0_53, %c0_54] : memref<8x64x16xbf16, #tpu.memory_space<vmem>>, vector<1x64x16xbf16>
    %68 = vector.shape_cast %67 : vector<1x64x16xbf16> to vector<64x16xbf16>
    %cst_55 = arith.constant dense<0.000000e+00> : vector<10x16xf32>
    %69 = tpu.matmul %30, %68, %cst_55 {dimension_numbers = #tpu.dot_dimension_numbers<[1], [0], [0], [1], [0, 0, 1, 1], [], []>} : vector<10x64xbf16>, vector<64x16xbf16>, vector<10x16xf32> -> vector<10x16xf32>
    %c1_56 = arith.constant 1 : index
    %c0_57 = arith.constant 0 : index
    %c0_58 = arith.constant 0 : index
    %70 = vector.load %arg12[%c1_56, %c0_57, %c0_58] : memref<8x1x16xf32, #tpu.memory_space<vmem>>, vector<1x1x16xf32>
    %71 = vector.shape_cast %70 : vector<1x1x16xf32> to vector<1x16xf32>
    %72 = vector.broadcast %71 : vector<1x16xf32> to vector<10x16xf32>
    %73 = arith.addf %69, %72 : vector<10x16xf32>
    %74 = arith.truncf %73 : vector<10x16xf32> to vector<10x16xbf16>
    %c2 = arith.constant 2 : index
    %c0_59 = arith.constant 0 : index
    %c0_60 = arith.constant 0 : index
    %75 = vector.load %arg7[%c2, %c0_59, %c0_60] : memref<8x64x16xbf16, #tpu.memory_space<vmem>>, vector<1x64x16xbf16>
    %76 = vector.shape_cast %75 : vector<1x64x16xbf16> to vector<64x16xbf16>
    %cst_61 = arith.constant dense<0.000000e+00> : vector<10x16xf32>
    %77 = tpu.matmul %30, %76, %cst_61 {dimension_numbers = #tpu.dot_dimension_numbers<[1], [0], [0], [1], [0, 0, 1, 1], [], []>} : vector<10x64xbf16>, vector<64x16xbf16>, vector<10x16xf32> -> vector<10x16xf32>
    %c2_62 = arith.constant 2 : index
    %c0_63 = arith.constant 0 : index
    %c0_64 = arith.constant 0 : index
    %78 = vector.load %arg10[%c2_62, %c0_63, %c0_64] : memref<8x1x16xf32, #tpu.memory_space<vmem>>, vector<1x1x16xf32>
    %79 = vector.shape_cast %78 : vector<1x1x16xf32> to vector<1x16xf32>
    %80 = vector.broadcast %79 : vector<1x16xf32> to vector<10x16xf32>
    %81 = arith.addf %77, %80 : vector<10x16xf32>
    %c2_65 = arith.constant 2 : index
    %c0_66 = arith.constant 0 : index
    %c0_67 = arith.constant 0 : index
    %82 = vector.load %arg8[%c2_65, %c0_66, %c0_67] : memref<8x64x16xbf16, #tpu.memory_space<vmem>>, vector<1x64x16xbf16>
    %83 = vector.shape_cast %82 : vector<1x64x16xbf16> to vector<64x16xbf16>
    %cst_68 = arith.constant dense<0.000000e+00> : vector<10x16xf32>
    %84 = tpu.matmul %30, %83, %cst_68 {dimension_numbers = #tpu.dot_dimension_numbers<[1], [0], [0], [1], [0, 0, 1, 1], [], []>} : vector<10x64xbf16>, vector<64x16xbf16>, vector<10x16xf32> -> vector<10x16xf32>
    %c2_69 = arith.constant 2 : index
    %c0_70 = arith.constant 0 : index
    %c0_71 = arith.constant 0 : index
    %85 = vector.load %arg11[%c2_69, %c0_70, %c0_71] : memref<8x1x16xf32, #tpu.memory_space<vmem>>, vector<1x1x16xf32>
    %86 = vector.shape_cast %85 : vector<1x1x16xf32> to vector<1x16xf32>
    %87 = vector.broadcast %86 : vector<1x16xf32> to vector<10x16xf32>
    %88 = arith.addf %84, %87 : vector<10x16xf32>
    %c2_72 = arith.constant 2 : index
    %c0_73 = arith.constant 0 : index
    %c0_74 = arith.constant 0 : index
    %89 = vector.load %arg9[%c2_72, %c0_73, %c0_74] : memref<8x64x16xbf16, #tpu.memory_space<vmem>>, vector<1x64x16xbf16>
    %90 = vector.shape_cast %89 : vector<1x64x16xbf16> to vector<64x16xbf16>
    %cst_75 = arith.constant dense<0.000000e+00> : vector<10x16xf32>
    %91 = tpu.matmul %30, %90, %cst_75 {dimension_numbers = #tpu.dot_dimension_numbers<[1], [0], [0], [1], [0, 0, 1, 1], [], []>} : vector<10x64xbf16>, vector<64x16xbf16>, vector<10x16xf32> -> vector<10x16xf32>
    %c2_76 = arith.constant 2 : index
    %c0_77 = arith.constant 0 : index
    %c0_78 = arith.constant 0 : index
    %92 = vector.load %arg12[%c2_76, %c0_77, %c0_78] : memref<8x1x16xf32, #tpu.memory_space<vmem>>, vector<1x1x16xf32>
    %93 = vector.shape_cast %92 : vector<1x1x16xf32> to vector<1x16xf32>
    %94 = vector.broadcast %93 : vector<1x16xf32> to vector<10x16xf32>
    %95 = arith.addf %91, %94 : vector<10x16xf32>
    %96 = arith.truncf %95 : vector<10x16xf32> to vector<10x16xbf16>
    %c3 = arith.constant 3 : index
    %c0_79 = arith.constant 0 : index
    %c0_80 = arith.constant 0 : index
    %97 = vector.load %arg7[%c3, %c0_79, %c0_80] : memref<8x64x16xbf16, #tpu.memory_space<vmem>>, vector<1x64x16xbf16>
    %98 = vector.shape_cast %97 : vector<1x64x16xbf16> to vector<64x16xbf16>
    %cst_81 = arith.constant dense<0.000000e+00> : vector<10x16xf32>
    %99 = tpu.matmul %30, %98, %cst_81 {dimension_numbers = #tpu.dot_dimension_numbers<[1], [0], [0], [1], [0, 0, 1, 1], [], []>} : vector<10x64xbf16>, vector<64x16xbf16>, vector<10x16xf32> -> vector<10x16xf32>
    %c3_82 = arith.constant 3 : index
    %c0_83 = arith.constant 0 : index
    %c0_84 = arith.constant 0 : index
    %100 = vector.load %arg10[%c3_82, %c0_83, %c0_84] : memref<8x1x16xf32, #tpu.memory_space<vmem>>, vector<1x1x16xf32>
    %101 = vector.shape_cast %100 : vector<1x1x16xf32> to vector<1x16xf32>
    %102 = vector.broadcast %101 : vector<1x16xf32> to vector<10x16xf32>
    %103 = arith.addf %99, %102 : vector<10x16xf32>
    %c3_85 = arith.constant 3 : index
    %c0_86 = arith.constant 0 : index
    %c0_87 = arith.constant 0 : index
    %104 = vector.load %arg8[%c3_85, %c0_86, %c0_87] : memref<8x64x16xbf16, #tpu.memory_space<vmem>>, vector<1x64x16xbf16>
    %105 = vector.shape_cast %104 : vector<1x64x16xbf16> to vector<64x16xbf16>
    %cst_88 = arith.constant dense<0.000000e+00> : vector<10x16xf32>
    %106 = tpu.matmul %30, %105, %cst_88 {dimension_numbers = #tpu.dot_dimension_numbers<[1], [0], [0], [1], [0, 0, 1, 1], [], []>} : vector<10x64xbf16>, vector<64x16xbf16>, vector<10x16xf32> -> vector<10x16xf32>
    %c3_89 = arith.constant 3 : index
    %c0_90 = arith.constant 0 : index
    %c0_91 = arith.constant 0 : index
    %107 = vector.load %arg11[%c3_89, %c0_90, %c0_91] : memref<8x1x16xf32, #tpu.memory_space<vmem>>, vector<1x1x16xf32>
    %108 = vector.shape_cast %107 : vector<1x1x16xf32> to vector<1x16xf32>
    %109 = vector.broadcast %108 : vector<1x16xf32> to vector<10x16xf32>
    %110 = arith.addf %106, %109 : vector<10x16xf32>
    %c3_92 = arith.constant 3 : index
    %c0_93 = arith.constant 0 : index
    %c0_94 = arith.constant 0 : index
    %111 = vector.load %arg9[%c3_92, %c0_93, %c0_94] : memref<8x64x16xbf16, #tpu.memory_space<vmem>>, vector<1x64x16xbf16>
    %112 = vector.shape_cast %111 : vector<1x64x16xbf16> to vector<64x16xbf16>
    %cst_95 = arith.constant dense<0.000000e+00> : vector<10x16xf32>
    %113 = tpu.matmul %30, %112, %cst_95 {dimension_numbers = #tpu.dot_dimension_numbers<[1], [0], [0], [1], [0, 0, 1, 1], [], []>} : vector<10x64xbf16>, vector<64x16xbf16>, vector<10x16xf32> -> vector<10x16xf32>
    %c3_96 = arith.constant 3 : index
    %c0_97 = arith.constant 0 : index
    %c0_98 = arith.constant 0 : index
    %114 = vector.load %arg12[%c3_96, %c0_97, %c0_98] : memref<8x1x16xf32, #tpu.memory_space<vmem>>, vector<1x1x16xf32>
    %115 = vector.shape_cast %114 : vector<1x1x16xf32> to vector<1x16xf32>
    %116 = vector.broadcast %115 : vector<1x16xf32> to vector<10x16xf32>
    %117 = arith.addf %113, %116 : vector<10x16xf32>
    %118 = arith.truncf %117 : vector<10x16xf32> to vector<10x16xbf16>
    %119 = arith.truncf %37 : vector<10x16xf32> to vector<10x16xbf16>
    %120 = arith.truncf %44 : vector<10x16xf32> to vector<10x16xbf16>
    %cst_99 = arith.constant dense<0.000000e+00> : vector<10x10xf32>
    %121 = tpu.matmul %119, %120, %cst_99 {dimension_numbers = #tpu.dot_dimension_numbers<[1], [1], [0], [0], [0, 0, 1, 0], [], []>} : vector<10x16xbf16>, vector<10x16xbf16>, vector<10x10xf32> -> vector<10x10xf32>
    %cst_100 = arith.constant 2.500000e-01 : f32
    %122 = vector.broadcast %cst_100 : f32 to vector<10x10xf32>
    %123 = arith.mulf %121, %122 : vector<10x10xf32>
    %124 = arith.addf %123, %0 : vector<10x10xf32>
    %125 = arith.truncf %59 : vector<10x16xf32> to vector<10x16xbf16>
    %126 = arith.truncf %66 : vector<10x16xf32> to vector<10x16xbf16>
    %cst_101 = arith.constant dense<0.000000e+00> : vector<10x10xf32>
    %127 = tpu.matmul %125, %126, %cst_101 {dimension_numbers = #tpu.dot_dimension_numbers<[1], [1], [0], [0], [0, 0, 1, 0], [], []>} : vector<10x16xbf16>, vector<10x16xbf16>, vector<10x10xf32> -> vector<10x10xf32>
    %cst_102 = arith.constant 2.500000e-01 : f32
    %128 = vector.broadcast %cst_102 : f32 to vector<10x10xf32>
    %129 = arith.mulf %127, %128 : vector<10x10xf32>
    %130 = arith.addf %129, %0 : vector<10x10xf32>
    %131 = arith.truncf %81 : vector<10x16xf32> to vector<10x16xbf16>
    %132 = arith.truncf %88 : vector<10x16xf32> to vector<10x16xbf16>
    %cst_103 = arith.constant dense<0.000000e+00> : vector<10x10xf32>
    %133 = tpu.matmul %131, %132, %cst_103 {dimension_numbers = #tpu.dot_dimension_numbers<[1], [1], [0], [0], [0, 0, 1, 0], [], []>} : vector<10x16xbf16>, vector<10x16xbf16>, vector<10x10xf32> -> vector<10x10xf32>
    %cst_104 = arith.constant 2.500000e-01 : f32
    %134 = vector.broadcast %cst_104 : f32 to vector<10x10xf32>
    %135 = arith.mulf %133, %134 : vector<10x10xf32>
    %136 = arith.addf %135, %0 : vector<10x10xf32>
    %137 = arith.truncf %103 : vector<10x16xf32> to vector<10x16xbf16>
    %138 = arith.truncf %110 : vector<10x16xf32> to vector<10x16xbf16>
    %cst_105 = arith.constant dense<0.000000e+00> : vector<10x10xf32>
    %139 = tpu.matmul %137, %138, %cst_105 {dimension_numbers = #tpu.dot_dimension_numbers<[1], [1], [0], [0], [0, 0, 1, 0], [], []>} : vector<10x16xbf16>, vector<10x16xbf16>, vector<10x10xf32> -> vector<10x10xf32>
    %cst_106 = arith.constant 2.500000e-01 : f32
    %140 = vector.broadcast %cst_106 : f32 to vector<10x10xf32>
    %141 = arith.mulf %139, %140 : vector<10x10xf32>
    %142 = arith.addf %141, %0 : vector<10x10xf32>
    %cst_107 = arith.constant dense<0xFF800000> : vector<10xf32>
    %143 = vector.multi_reduction <maximumf>, %124, %cst_107 [1] : vector<10x10xf32> to vector<10xf32>
    %144 = vector.shape_cast %143 : vector<10xf32> to vector<10x1xf32>
    %145 = vector.broadcast %144 : vector<10x1xf32> to vector<10x10xf32>
    %146 = arith.subf %124, %145 : vector<10x10xf32>
    %147 = math.exp %146 : vector<10x10xf32>
    %cst_108 = arith.constant dense<0.000000e+00> : vector<10xf32>
    %148 = vector.multi_reduction <add>, %147, %cst_108 [1] : vector<10x10xf32> to vector<10xf32>
    %149 = vector.shape_cast %148 : vector<10xf32> to vector<10x1xf32>
    %150 = tpu.reciprocal %149 : vector<10x1xf32> -> vector<10x1xf32>
    %151 = vector.broadcast %150 : vector<10x1xf32> to vector<10x10xf32>
    %152 = arith.mulf %147, %151 : vector<10x10xf32>
    %153 = arith.truncf %152 : vector<10x10xf32> to vector<10x10xbf16>
    %cst_109 = arith.constant dense<0xFF800000> : vector<10xf32>
    %154 = vector.multi_reduction <maximumf>, %130, %cst_109 [1] : vector<10x10xf32> to vector<10xf32>
    %155 = vector.shape_cast %154 : vector<10xf32> to vector<10x1xf32>
    %156 = vector.broadcast %155 : vector<10x1xf32> to vector<10x10xf32>
    %157 = arith.subf %130, %156 : vector<10x10xf32>
    %158 = math.exp %157 : vector<10x10xf32>
    %cst_110 = arith.constant dense<0.000000e+00> : vector<10xf32>
    %159 = vector.multi_reduction <add>, %158, %cst_110 [1] : vector<10x10xf32> to vector<10xf32>
    %160 = vector.shape_cast %159 : vector<10xf32> to vector<10x1xf32>
    %161 = tpu.reciprocal %160 : vector<10x1xf32> -> vector<10x1xf32>
    %162 = vector.broadcast %161 : vector<10x1xf32> to vector<10x10xf32>
    %163 = arith.mulf %158, %162 : vector<10x10xf32>
    %164 = arith.truncf %163 : vector<10x10xf32> to vector<10x10xbf16>
    %cst_111 = arith.constant dense<0xFF800000> : vector<10xf32>
    %165 = vector.multi_reduction <maximumf>, %136, %cst_111 [1] : vector<10x10xf32> to vector<10xf32>
    %166 = vector.shape_cast %165 : vector<10xf32> to vector<10x1xf32>
    %167 = vector.broadcast %166 : vector<10x1xf32> to vector<10x10xf32>
    %168 = arith.subf %136, %167 : vector<10x10xf32>
    %169 = math.exp %168 : vector<10x10xf32>
    %cst_112 = arith.constant dense<0.000000e+00> : vector<10xf32>
    %170 = vector.multi_reduction <add>, %169, %cst_112 [1] : vector<10x10xf32> to vector<10xf32>
    %171 = vector.shape_cast %170 : vector<10xf32> to vector<10x1xf32>
    %172 = tpu.reciprocal %171 : vector<10x1xf32> -> vector<10x1xf32>
    %173 = vector.broadcast %172 : vector<10x1xf32> to vector<10x10xf32>
    %174 = arith.mulf %169, %173 : vector<10x10xf32>
    %175 = arith.truncf %174 : vector<10x10xf32> to vector<10x10xbf16>
    %cst_113 = arith.constant dense<0xFF800000> : vector<10xf32>
    %176 = vector.multi_reduction <maximumf>, %142, %cst_113 [1] : vector<10x10xf32> to vector<10xf32>
    %177 = vector.shape_cast %176 : vector<10xf32> to vector<10x1xf32>
    %178 = vector.broadcast %177 : vector<10x1xf32> to vector<10x10xf32>
    %179 = arith.subf %142, %178 : vector<10x10xf32>
    %180 = math.exp %179 : vector<10x10xf32>
    %cst_114 = arith.constant dense<0.000000e+00> : vector<10xf32>
    %181 = vector.multi_reduction <add>, %180, %cst_114 [1] : vector<10x10xf32> to vector<10xf32>
    %182 = vector.shape_cast %181 : vector<10xf32> to vector<10x1xf32>
    %183 = tpu.reciprocal %182 : vector<10x1xf32> -> vector<10x1xf32>
    %184 = vector.broadcast %183 : vector<10x1xf32> to vector<10x10xf32>
    %185 = arith.mulf %180, %184 : vector<10x10xf32>
    %186 = arith.truncf %185 : vector<10x10xf32> to vector<10x10xbf16>
    %cst_115 = arith.constant dense<0.000000e+00> : vector<10x16xf32>
    %187 = tpu.matmul %153, %52, %cst_115 {dimension_numbers = #tpu.dot_dimension_numbers<[1], [0], [0], [1], [0, 0, 1, 1], [], []>} : vector<10x10xbf16>, vector<10x16xbf16>, vector<10x16xf32> -> vector<10x16xf32>
    %188 = arith.truncf %187 : vector<10x16xf32> to vector<10x16xbf16>
    %cst_116 = arith.constant dense<0.000000e+00> : vector<10x16xf32>
    %189 = tpu.matmul %164, %74, %cst_116 {dimension_numbers = #tpu.dot_dimension_numbers<[1], [0], [0], [1], [0, 0, 1, 1], [], []>} : vector<10x10xbf16>, vector<10x16xbf16>, vector<10x16xf32> -> vector<10x16xf32>
    %190 = arith.truncf %189 : vector<10x16xf32> to vector<10x16xbf16>
    %cst_117 = arith.constant dense<0.000000e+00> : vector<10x16xf32>
    %191 = tpu.matmul %175, %96, %cst_117 {dimension_numbers = #tpu.dot_dimension_numbers<[1], [0], [0], [1], [0, 0, 1, 1], [], []>} : vector<10x10xbf16>, vector<10x16xbf16>, vector<10x16xf32> -> vector<10x16xf32>
    %192 = arith.truncf %191 : vector<10x16xf32> to vector<10x16xbf16>
    %cst_118 = arith.constant dense<0.000000e+00> : vector<10x16xf32>
    %193 = tpu.matmul %186, %118, %cst_118 {dimension_numbers = #tpu.dot_dimension_numbers<[1], [0], [0], [1], [0, 0, 1, 1], [], []>} : vector<10x10xbf16>, vector<10x16xbf16>, vector<10x16xf32> -> vector<10x16xf32>
    %194 = arith.truncf %193 : vector<10x16xf32> to vector<10x16xbf16>
    %c0_119 = arith.constant 0 : index
    %c0_120 = arith.constant 0 : index
    %c0_121 = arith.constant 0 : index
    %195 = vector.load %arg14[%c0_119, %c0_120, %c0_121] : memref<2x1x64xf32, #tpu.memory_space<vmem>>, vector<1x1x64xf32>
    %196 = vector.shape_cast %195 : vector<1x1x64xf32> to vector<1x64xf32>
    %c0_122 = arith.constant 0 : index
    %c0_123 = arith.constant 0 : index
    %c0_124 = arith.constant 0 : index
    %197 = vector.load %arg13[%c0_122, %c0_123, %c0_124] : memref<8x16x64xbf16, #tpu.memory_space<vmem>>, vector<1x16x64xbf16>
    %198 = vector.shape_cast %197 : vector<1x16x64xbf16> to vector<16x64xbf16>
    %cst_125 = arith.constant dense<0.000000e+00> : vector<10x64xf32>
    %199 = tpu.matmul %188, %198, %cst_125 {dimension_numbers = #tpu.dot_dimension_numbers<[1], [0], [0], [1], [0, 0, 1, 1], [], []>} : vector<10x16xbf16>, vector<16x64xbf16>, vector<10x64xf32> -> vector<10x64xf32>
    %200 = vector.broadcast %196 : vector<1x64xf32> to vector<10x64xf32>
    %201 = arith.addf %200, %199 : vector<10x64xf32>
    %c1_126 = arith.constant 1 : index
    %c0_127 = arith.constant 0 : index
    %c0_128 = arith.constant 0 : index
    %202 = vector.load %arg13[%c1_126, %c0_127, %c0_128] : memref<8x16x64xbf16, #tpu.memory_space<vmem>>, vector<1x16x64xbf16>
    %203 = vector.shape_cast %202 : vector<1x16x64xbf16> to vector<16x64xbf16>
    %cst_129 = arith.constant dense<0.000000e+00> : vector<10x64xf32>
    %204 = tpu.matmul %190, %203, %cst_129 {dimension_numbers = #tpu.dot_dimension_numbers<[1], [0], [0], [1], [0, 0, 1, 1], [], []>} : vector<10x16xbf16>, vector<16x64xbf16>, vector<10x64xf32> -> vector<10x64xf32>
    %205 = arith.addf %201, %204 : vector<10x64xf32>
    %c2_130 = arith.constant 2 : index
    %c0_131 = arith.constant 0 : index
    %c0_132 = arith.constant 0 : index
    %206 = vector.load %arg13[%c2_130, %c0_131, %c0_132] : memref<8x16x64xbf16, #tpu.memory_space<vmem>>, vector<1x16x64xbf16>
    %207 = vector.shape_cast %206 : vector<1x16x64xbf16> to vector<16x64xbf16>
    %cst_133 = arith.constant dense<0.000000e+00> : vector<10x64xf32>
    %208 = tpu.matmul %192, %207, %cst_133 {dimension_numbers = #tpu.dot_dimension_numbers<[1], [0], [0], [1], [0, 0, 1, 1], [], []>} : vector<10x16xbf16>, vector<16x64xbf16>, vector<10x64xf32> -> vector<10x64xf32>
    %209 = arith.addf %205, %208 : vector<10x64xf32>
    %c3_134 = arith.constant 3 : index
    %c0_135 = arith.constant 0 : index
    %c0_136 = arith.constant 0 : index
    %210 = vector.load %arg13[%c3_134, %c0_135, %c0_136] : memref<8x16x64xbf16, #tpu.memory_space<vmem>>, vector<1x16x64xbf16>
    %211 = vector.shape_cast %210 : vector<1x16x64xbf16> to vector<16x64xbf16>
    %cst_137 = arith.constant dense<0.000000e+00> : vector<10x64xf32>
    %212 = tpu.matmul %194, %211, %cst_137 {dimension_numbers = #tpu.dot_dimension_numbers<[1], [0], [0], [1], [0, 0, 1, 1], [], []>} : vector<10x16xbf16>, vector<16x64xbf16>, vector<10x64xf32> -> vector<10x64xf32>
    %213 = arith.addf %209, %212 : vector<10x64xf32>
    %214 = arith.addf %5, %213 : vector<10x64xf32>
    %c0_138 = arith.constant 0 : index
    %c0_139 = arith.constant 0 : index
    %c0_140 = arith.constant 0 : index
    %215 = vector.load %arg15[%c0_138, %c0_139, %c0_140] : memref<2x1x64xf32, #tpu.memory_space<vmem>>, vector<1x1x64xf32>
    %216 = vector.shape_cast %215 : vector<1x1x64xf32> to vector<1x64xf32>
    %c0_141 = arith.constant 0 : index
    %c0_142 = arith.constant 0 : index
    %c0_143 = arith.constant 0 : index
    %217 = vector.load %arg16[%c0_141, %c0_142, %c0_143] : memref<2x1x64xf32, #tpu.memory_space<vmem>>, vector<1x1x64xf32>
    %218 = vector.shape_cast %217 : vector<1x1x64xf32> to vector<1x64xf32>
    %cst_144 = arith.constant dense<0.000000e+00> : vector<10xf32>
    %219 = vector.multi_reduction <add>, %214, %cst_144 [1] : vector<10x64xf32> to vector<10xf32>
    %220 = vector.shape_cast %219 : vector<10xf32> to vector<10x1xf32>
    %cst_145 = arith.constant 6.400000e+01 : f32
    %221 = vector.broadcast %cst_145 : f32 to vector<10x1xf32>
    %222 = arith.divf %220, %221 : vector<10x1xf32>
    %223 = vector.broadcast %222 : vector<10x1xf32> to vector<10x64xf32>
    %224 = arith.subf %214, %223 : vector<10x64xf32>
    %225 = arith.mulf %224, %224 : vector<10x64xf32>
    %cst_146 = arith.constant dense<0.000000e+00> : vector<10xf32>
    %226 = vector.multi_reduction <add>, %225, %cst_146 [1] : vector<10x64xf32> to vector<10xf32>
    %227 = vector.shape_cast %226 : vector<10xf32> to vector<10x1xf32>
    %cst_147 = arith.constant 6.400000e+01 : f32
    %228 = vector.broadcast %cst_147 : f32 to vector<10x1xf32>
    %229 = arith.divf %227, %228 : vector<10x1xf32>
    %cst_148 = arith.constant 9.99999997E-7 : f32
    %230 = vector.broadcast %cst_148 : f32 to vector<10x1xf32>
    %231 = arith.addf %229, %230 : vector<10x1xf32>
    %232 = math.rsqrt %231 : vector<10x1xf32>
    %233 = vector.broadcast %232 : vector<10x1xf32> to vector<10x64xf32>
    %234 = arith.mulf %224, %233 : vector<10x64xf32>
    %235 = vector.broadcast %216 : vector<1x64xf32> to vector<10x64xf32>
    %236 = arith.mulf %234, %235 : vector<10x64xf32>
    %237 = vector.broadcast %218 : vector<1x64xf32> to vector<10x64xf32>
    %238 = arith.addf %236, %237 : vector<10x64xf32>
    %c0_149 = arith.constant 0 : index
    %c0_150 = arith.constant 0 : index
    %c0_151 = arith.constant 0 : index
    %239 = vector.load %arg17[%c0_149, %c0_150, %c0_151] : memref<2x64x256xbf16, #tpu.memory_space<vmem>>, vector<1x64x256xbf16>
    %240 = vector.shape_cast %239 : vector<1x64x256xbf16> to vector<64x256xbf16>
    %241 = arith.truncf %238 : vector<10x64xf32> to vector<10x64xbf16>
    %cst_152 = arith.constant dense<0.000000e+00> : vector<10x256xf32>
    %242 = tpu.matmul %241, %240, %cst_152 {dimension_numbers = #tpu.dot_dimension_numbers<[1], [0], [0], [1], [0, 0, 1, 1], [], []>} : vector<10x64xbf16>, vector<64x256xbf16>, vector<10x256xf32> -> vector<10x256xf32>
    %c0_153 = arith.constant 0 : index
    %c0_154 = arith.constant 0 : index
    %c0_155 = arith.constant 0 : index
    %243 = vector.load %arg18[%c0_153, %c0_154, %c0_155] : memref<2x1x256xf32, #tpu.memory_space<vmem>>, vector<1x1x256xf32>
    %244 = vector.shape_cast %243 : vector<1x1x256xf32> to vector<1x256xf32>
    %245 = vector.broadcast %244 : vector<1x256xf32> to vector<10x256xf32>
    %246 = arith.addf %242, %245 : vector<10x256xf32>
    %cst_156 = arith.constant 5.000000e-01 : f32
    %247 = vector.broadcast %cst_156 : f32 to vector<10x256xf32>
    %248 = arith.mulf %247, %246 : vector<10x256xf32>
    %cst_157 = arith.constant 4.471500e-02 : f32
    %249 = vector.broadcast %cst_157 : f32 to vector<10x256xf32>
    %250 = arith.mulf %249, %246 : vector<10x256xf32>
    %251 = arith.mulf %250, %246 : vector<10x256xf32>
    %252 = arith.mulf %251, %246 : vector<10x256xf32>
    %253 = arith.addf %246, %252 : vector<10x256xf32>
    %cst_158 = arith.constant 0.797884583 : f32
    %254 = vector.broadcast %cst_158 : f32 to vector<10x256xf32>
    %255 = arith.mulf %254, %253 : vector<10x256xf32>
    %256 = math.tanh %255 : vector<10x256xf32>
    %cst_159 = arith.constant 1.000000e+00 : f32
    %257 = vector.broadcast %cst_159 : f32 to vector<10x256xf32>
    %258 = arith.addf %257, %256 : vector<10x256xf32>
    %259 = arith.mulf %248, %258 : vector<10x256xf32>
    %c0_160 = arith.constant 0 : index
    %c0_161 = arith.constant 0 : index
    %c0_162 = arith.constant 0 : index
    %260 = vector.load %arg19[%c0_160, %c0_161, %c0_162] : memref<2x256x64xbf16, #tpu.memory_space<vmem>>, vector<1x256x64xbf16>
    %261 = vector.shape_cast %260 : vector<1x256x64xbf16> to vector<256x64xbf16>
    %262 = arith.truncf %259 : vector<10x256xf32> to vector<10x256xbf16>
    %cst_163 = arith.constant dense<0.000000e+00> : vector<10x64xf32>
    %263 = tpu.matmul %262, %261, %cst_163 {dimension_numbers = #tpu.dot_dimension_numbers<[1], [0], [0], [1], [0, 0, 1, 1], [], []>} : vector<10x256xbf16>, vector<256x64xbf16>, vector<10x64xf32> -> vector<10x64xf32>
    %264 = arith.addf %214, %263 : vector<10x64xf32>
    %c0_164 = arith.constant 0 : index
    %c0_165 = arith.constant 0 : index
    %c0_166 = arith.constant 0 : index
    %265 = vector.load %arg20[%c0_164, %c0_165, %c0_166] : memref<2x1x64xf32, #tpu.memory_space<vmem>>, vector<1x1x64xf32>
    %266 = vector.shape_cast %265 : vector<1x1x64xf32> to vector<1x64xf32>
    %267 = vector.broadcast %266 : vector<1x64xf32> to vector<10x64xf32>
    %268 = arith.addf %264, %267 : vector<10x64xf32>
    %c1_167 = arith.constant 1 : index
    %c0_168 = arith.constant 0 : index
    %c0_169 = arith.constant 0 : index
    %269 = vector.load %arg5[%c1_167, %c0_168, %c0_169] : memref<2x1x64xf32, #tpu.memory_space<vmem>>, vector<1x1x64xf32>
    %270 = vector.shape_cast %269 : vector<1x1x64xf32> to vector<1x64xf32>
    %c1_170 = arith.constant 1 : index
    %c0_171 = arith.constant 0 : index
    %c0_172 = arith.constant 0 : index
    %271 = vector.load %arg6[%c1_170, %c0_171, %c0_172] : memref<2x1x64xf32, #tpu.memory_space<vmem>>, vector<1x1x64xf32>
    %272 = vector.shape_cast %271 : vector<1x1x64xf32> to vector<1x64xf32>
    %cst_173 = arith.constant dense<0.000000e+00> : vector<10xf32>
    %273 = vector.multi_reduction <add>, %268, %cst_173 [1] : vector<10x64xf32> to vector<10xf32>
    %274 = vector.shape_cast %273 : vector<10xf32> to vector<10x1xf32>
    %cst_174 = arith.constant 6.400000e+01 : f32
    %275 = vector.broadcast %cst_174 : f32 to vector<10x1xf32>
    %276 = arith.divf %274, %275 : vector<10x1xf32>
    %277 = vector.broadcast %276 : vector<10x1xf32> to vector<10x64xf32>
    %278 = arith.subf %268, %277 : vector<10x64xf32>
    %279 = arith.mulf %278, %278 : vector<10x64xf32>
    %cst_175 = arith.constant dense<0.000000e+00> : vector<10xf32>
    %280 = vector.multi_reduction <add>, %279, %cst_175 [1] : vector<10x64xf32> to vector<10xf32>
    %281 = vector.shape_cast %280 : vector<10xf32> to vector<10x1xf32>
    %cst_176 = arith.constant 6.400000e+01 : f32
    %282 = vector.broadcast %cst_176 : f32 to vector<10x1xf32>
    %283 = arith.divf %281, %282 : vector<10x1xf32>
    %cst_177 = arith.constant 9.99999997E-7 : f32
    %284 = vector.broadcast %cst_177 : f32 to vector<10x1xf32>
    %285 = arith.addf %283, %284 : vector<10x1xf32>
    %286 = math.rsqrt %285 : vector<10x1xf32>
    %287 = vector.broadcast %286 : vector<10x1xf32> to vector<10x64xf32>
    %288 = arith.mulf %278, %287 : vector<10x64xf32>
    %289 = vector.broadcast %270 : vector<1x64xf32> to vector<10x64xf32>
    %290 = arith.mulf %288, %289 : vector<10x64xf32>
    %291 = vector.broadcast %272 : vector<1x64xf32> to vector<10x64xf32>
    %292 = arith.addf %290, %291 : vector<10x64xf32>
    %293 = arith.truncf %292 : vector<10x64xf32> to vector<10x64xbf16>
    %c4 = arith.constant 4 : index
    %c0_178 = arith.constant 0 : index
    %c0_179 = arith.constant 0 : index
    %294 = vector.load %arg7[%c4, %c0_178, %c0_179] : memref<8x64x16xbf16, #tpu.memory_space<vmem>>, vector<1x64x16xbf16>
    %295 = vector.shape_cast %294 : vector<1x64x16xbf16> to vector<64x16xbf16>
    %cst_180 = arith.constant dense<0.000000e+00> : vector<10x16xf32>
    %296 = tpu.matmul %293, %295, %cst_180 {dimension_numbers = #tpu.dot_dimension_numbers<[1], [0], [0], [1], [0, 0, 1, 1], [], []>} : vector<10x64xbf16>, vector<64x16xbf16>, vector<10x16xf32> -> vector<10x16xf32>
    %c4_181 = arith.constant 4 : index
    %c0_182 = arith.constant 0 : index
    %c0_183 = arith.constant 0 : index
    %297 = vector.load %arg10[%c4_181, %c0_182, %c0_183] : memref<8x1x16xf32, #tpu.memory_space<vmem>>, vector<1x1x16xf32>
    %298 = vector.shape_cast %297 : vector<1x1x16xf32> to vector<1x16xf32>
    %299 = vector.broadcast %298 : vector<1x16xf32> to vector<10x16xf32>
    %300 = arith.addf %296, %299 : vector<10x16xf32>
    %c4_184 = arith.constant 4 : index
    %c0_185 = arith.constant 0 : index
    %c0_186 = arith.constant 0 : index
    %301 = vector.load %arg8[%c4_184, %c0_185, %c0_186] : memref<8x64x16xbf16, #tpu.memory_space<vmem>>, vector<1x64x16xbf16>
    %302 = vector.shape_cast %301 : vector<1x64x16xbf16> to vector<64x16xbf16>
    %cst_187 = arith.constant dense<0.000000e+00> : vector<10x16xf32>
    %303 = tpu.matmul %293, %302, %cst_187 {dimension_numbers = #tpu.dot_dimension_numbers<[1], [0], [0], [1], [0, 0, 1, 1], [], []>} : vector<10x64xbf16>, vector<64x16xbf16>, vector<10x16xf32> -> vector<10x16xf32>
    %c4_188 = arith.constant 4 : index
    %c0_189 = arith.constant 0 : index
    %c0_190 = arith.constant 0 : index
    %304 = vector.load %arg11[%c4_188, %c0_189, %c0_190] : memref<8x1x16xf32, #tpu.memory_space<vmem>>, vector<1x1x16xf32>
    %305 = vector.shape_cast %304 : vector<1x1x16xf32> to vector<1x16xf32>
    %306 = vector.broadcast %305 : vector<1x16xf32> to vector<10x16xf32>
    %307 = arith.addf %303, %306 : vector<10x16xf32>
    %c4_191 = arith.constant 4 : index
    %c0_192 = arith.constant 0 : index
    %c0_193 = arith.constant 0 : index
    %308 = vector.load %arg9[%c4_191, %c0_192, %c0_193] : memref<8x64x16xbf16, #tpu.memory_space<vmem>>, vector<1x64x16xbf16>
    %309 = vector.shape_cast %308 : vector<1x64x16xbf16> to vector<64x16xbf16>
    %cst_194 = arith.constant dense<0.000000e+00> : vector<10x16xf32>
    %310 = tpu.matmul %293, %309, %cst_194 {dimension_numbers = #tpu.dot_dimension_numbers<[1], [0], [0], [1], [0, 0, 1, 1], [], []>} : vector<10x64xbf16>, vector<64x16xbf16>, vector<10x16xf32> -> vector<10x16xf32>
    %c4_195 = arith.constant 4 : index
    %c0_196 = arith.constant 0 : index
    %c0_197 = arith.constant 0 : index
    %311 = vector.load %arg12[%c4_195, %c0_196, %c0_197] : memref<8x1x16xf32, #tpu.memory_space<vmem>>, vector<1x1x16xf32>
    %312 = vector.shape_cast %311 : vector<1x1x16xf32> to vector<1x16xf32>
    %313 = vector.broadcast %312 : vector<1x16xf32> to vector<10x16xf32>
    %314 = arith.addf %310, %313 : vector<10x16xf32>
    %315 = arith.truncf %314 : vector<10x16xf32> to vector<10x16xbf16>
    %c5 = arith.constant 5 : index
    %c0_198 = arith.constant 0 : index
    %c0_199 = arith.constant 0 : index
    %316 = vector.load %arg7[%c5, %c0_198, %c0_199] : memref<8x64x16xbf16, #tpu.memory_space<vmem>>, vector<1x64x16xbf16>
    %317 = vector.shape_cast %316 : vector<1x64x16xbf16> to vector<64x16xbf16>
    %cst_200 = arith.constant dense<0.000000e+00> : vector<10x16xf32>
    %318 = tpu.matmul %293, %317, %cst_200 {dimension_numbers = #tpu.dot_dimension_numbers<[1], [0], [0], [1], [0, 0, 1, 1], [], []>} : vector<10x64xbf16>, vector<64x16xbf16>, vector<10x16xf32> -> vector<10x16xf32>
    %c5_201 = arith.constant 5 : index
    %c0_202 = arith.constant 0 : index
    %c0_203 = arith.constant 0 : index
    %319 = vector.load %arg10[%c5_201, %c0_202, %c0_203] : memref<8x1x16xf32, #tpu.memory_space<vmem>>, vector<1x1x16xf32>
    %320 = vector.shape_cast %319 : vector<1x1x16xf32> to vector<1x16xf32>
    %321 = vector.broadcast %320 : vector<1x16xf32> to vector<10x16xf32>
    %322 = arith.addf %318, %321 : vector<10x16xf32>
    %c5_204 = arith.constant 5 : index
    %c0_205 = arith.constant 0 : index
    %c0_206 = arith.constant 0 : index
    %323 = vector.load %arg8[%c5_204, %c0_205, %c0_206] : memref<8x64x16xbf16, #tpu.memory_space<vmem>>, vector<1x64x16xbf16>
    %324 = vector.shape_cast %323 : vector<1x64x16xbf16> to vector<64x16xbf16>
    %cst_207 = arith.constant dense<0.000000e+00> : vector<10x16xf32>
    %325 = tpu.matmul %293, %324, %cst_207 {dimension_numbers = #tpu.dot_dimension_numbers<[1], [0], [0], [1], [0, 0, 1, 1], [], []>} : vector<10x64xbf16>, vector<64x16xbf16>, vector<10x16xf32> -> vector<10x16xf32>
    %c5_208 = arith.constant 5 : index
    %c0_209 = arith.constant 0 : index
    %c0_210 = arith.constant 0 : index
    %326 = vector.load %arg11[%c5_208, %c0_209, %c0_210] : memref<8x1x16xf32, #tpu.memory_space<vmem>>, vector<1x1x16xf32>
    %327 = vector.shape_cast %326 : vector<1x1x16xf32> to vector<1x16xf32>
    %328 = vector.broadcast %327 : vector<1x16xf32> to vector<10x16xf32>
    %329 = arith.addf %325, %328 : vector<10x16xf32>
    %c5_211 = arith.constant 5 : index
    %c0_212 = arith.constant 0 : index
    %c0_213 = arith.constant 0 : index
    %330 = vector.load %arg9[%c5_211, %c0_212, %c0_213] : memref<8x64x16xbf16, #tpu.memory_space<vmem>>, vector<1x64x16xbf16>
    %331 = vector.shape_cast %330 : vector<1x64x16xbf16> to vector<64x16xbf16>
    %cst_214 = arith.constant dense<0.000000e+00> : vector<10x16xf32>
    %332 = tpu.matmul %293, %331, %cst_214 {dimension_numbers = #tpu.dot_dimension_numbers<[1], [0], [0], [1], [0, 0, 1, 1], [], []>} : vector<10x64xbf16>, vector<64x16xbf16>, vector<10x16xf32> -> vector<10x16xf32>
    %c5_215 = arith.constant 5 : index
    %c0_216 = arith.constant 0 : index
    %c0_217 = arith.constant 0 : index
    %333 = vector.load %arg12[%c5_215, %c0_216, %c0_217] : memref<8x1x16xf32, #tpu.memory_space<vmem>>, vector<1x1x16xf32>
    %334 = vector.shape_cast %333 : vector<1x1x16xf32> to vector<1x16xf32>
    %335 = vector.broadcast %334 : vector<1x16xf32> to vector<10x16xf32>
    %336 = arith.addf %332, %335 : vector<10x16xf32>
    %337 = arith.truncf %336 : vector<10x16xf32> to vector<10x16xbf16>
    %c6 = arith.constant 6 : index
    %c0_218 = arith.constant 0 : index
    %c0_219 = arith.constant 0 : index
    %338 = vector.load %arg7[%c6, %c0_218, %c0_219] : memref<8x64x16xbf16, #tpu.memory_space<vmem>>, vector<1x64x16xbf16>
    %339 = vector.shape_cast %338 : vector<1x64x16xbf16> to vector<64x16xbf16>
    %cst_220 = arith.constant dense<0.000000e+00> : vector<10x16xf32>
    %340 = tpu.matmul %293, %339, %cst_220 {dimension_numbers = #tpu.dot_dimension_numbers<[1], [0], [0], [1], [0, 0, 1, 1], [], []>} : vector<10x64xbf16>, vector<64x16xbf16>, vector<10x16xf32> -> vector<10x16xf32>
    %c6_221 = arith.constant 6 : index
    %c0_222 = arith.constant 0 : index
    %c0_223 = arith.constant 0 : index
    %341 = vector.load %arg10[%c6_221, %c0_222, %c0_223] : memref<8x1x16xf32, #tpu.memory_space<vmem>>, vector<1x1x16xf32>
    %342 = vector.shape_cast %341 : vector<1x1x16xf32> to vector<1x16xf32>
    %343 = vector.broadcast %342 : vector<1x16xf32> to vector<10x16xf32>
    %344 = arith.addf %340, %343 : vector<10x16xf32>
    %c6_224 = arith.constant 6 : index
    %c0_225 = arith.constant 0 : index
    %c0_226 = arith.constant 0 : index
    %345 = vector.load %arg8[%c6_224, %c0_225, %c0_226] : memref<8x64x16xbf16, #tpu.memory_space<vmem>>, vector<1x64x16xbf16>
    %346 = vector.shape_cast %345 : vector<1x64x16xbf16> to vector<64x16xbf16>
    %cst_227 = arith.constant dense<0.000000e+00> : vector<10x16xf32>
    %347 = tpu.matmul %293, %346, %cst_227 {dimension_numbers = #tpu.dot_dimension_numbers<[1], [0], [0], [1], [0, 0, 1, 1], [], []>} : vector<10x64xbf16>, vector<64x16xbf16>, vector<10x16xf32> -> vector<10x16xf32>
    %c6_228 = arith.constant 6 : index
    %c0_229 = arith.constant 0 : index
    %c0_230 = arith.constant 0 : index
    %348 = vector.load %arg11[%c6_228, %c0_229, %c0_230] : memref<8x1x16xf32, #tpu.memory_space<vmem>>, vector<1x1x16xf32>
    %349 = vector.shape_cast %348 : vector<1x1x16xf32> to vector<1x16xf32>
    %350 = vector.broadcast %349 : vector<1x16xf32> to vector<10x16xf32>
    %351 = arith.addf %347, %350 : vector<10x16xf32>
    %c6_231 = arith.constant 6 : index
    %c0_232 = arith.constant 0 : index
    %c0_233 = arith.constant 0 : index
    %352 = vector.load %arg9[%c6_231, %c0_232, %c0_233] : memref<8x64x16xbf16, #tpu.memory_space<vmem>>, vector<1x64x16xbf16>
    %353 = vector.shape_cast %352 : vector<1x64x16xbf16> to vector<64x16xbf16>
    %cst_234 = arith.constant dense<0.000000e+00> : vector<10x16xf32>
    %354 = tpu.matmul %293, %353, %cst_234 {dimension_numbers = #tpu.dot_dimension_numbers<[1], [0], [0], [1], [0, 0, 1, 1], [], []>} : vector<10x64xbf16>, vector<64x16xbf16>, vector<10x16xf32> -> vector<10x16xf32>
    %c6_235 = arith.constant 6 : index
    %c0_236 = arith.constant 0 : index
    %c0_237 = arith.constant 0 : index
    %355 = vector.load %arg12[%c6_235, %c0_236, %c0_237] : memref<8x1x16xf32, #tpu.memory_space<vmem>>, vector<1x1x16xf32>
    %356 = vector.shape_cast %355 : vector<1x1x16xf32> to vector<1x16xf32>
    %357 = vector.broadcast %356 : vector<1x16xf32> to vector<10x16xf32>
    %358 = arith.addf %354, %357 : vector<10x16xf32>
    %359 = arith.truncf %358 : vector<10x16xf32> to vector<10x16xbf16>
    %c7 = arith.constant 7 : index
    %c0_238 = arith.constant 0 : index
    %c0_239 = arith.constant 0 : index
    %360 = vector.load %arg7[%c7, %c0_238, %c0_239] : memref<8x64x16xbf16, #tpu.memory_space<vmem>>, vector<1x64x16xbf16>
    %361 = vector.shape_cast %360 : vector<1x64x16xbf16> to vector<64x16xbf16>
    %cst_240 = arith.constant dense<0.000000e+00> : vector<10x16xf32>
    %362 = tpu.matmul %293, %361, %cst_240 {dimension_numbers = #tpu.dot_dimension_numbers<[1], [0], [0], [1], [0, 0, 1, 1], [], []>} : vector<10x64xbf16>, vector<64x16xbf16>, vector<10x16xf32> -> vector<10x16xf32>
    %c7_241 = arith.constant 7 : index
    %c0_242 = arith.constant 0 : index
    %c0_243 = arith.constant 0 : index
    %363 = vector.load %arg10[%c7_241, %c0_242, %c0_243] : memref<8x1x16xf32, #tpu.memory_space<vmem>>, vector<1x1x16xf32>
    %364 = vector.shape_cast %363 : vector<1x1x16xf32> to vector<1x16xf32>
    %365 = vector.broadcast %364 : vector<1x16xf32> to vector<10x16xf32>
    %366 = arith.addf %362, %365 : vector<10x16xf32>
    %c7_244 = arith.constant 7 : index
    %c0_245 = arith.constant 0 : index
    %c0_246 = arith.constant 0 : index
    %367 = vector.load %arg8[%c7_244, %c0_245, %c0_246] : memref<8x64x16xbf16, #tpu.memory_space<vmem>>, vector<1x64x16xbf16>
    %368 = vector.shape_cast %367 : vector<1x64x16xbf16> to vector<64x16xbf16>
    %cst_247 = arith.constant dense<0.000000e+00> : vector<10x16xf32>
    %369 = tpu.matmul %293, %368, %cst_247 {dimension_numbers = #tpu.dot_dimension_numbers<[1], [0], [0], [1], [0, 0, 1, 1], [], []>} : vector<10x64xbf16>, vector<64x16xbf16>, vector<10x16xf32> -> vector<10x16xf32>
    %c7_248 = arith.constant 7 : index
    %c0_249 = arith.constant 0 : index
    %c0_250 = arith.constant 0 : index
    %370 = vector.load %arg11[%c7_248, %c0_249, %c0_250] : memref<8x1x16xf32, #tpu.memory_space<vmem>>, vector<1x1x16xf32>
    %371 = vector.shape_cast %370 : vector<1x1x16xf32> to vector<1x16xf32>
    %372 = vector.broadcast %371 : vector<1x16xf32> to vector<10x16xf32>
    %373 = arith.addf %369, %372 : vector<10x16xf32>
    %c7_251 = arith.constant 7 : index
    %c0_252 = arith.constant 0 : index
    %c0_253 = arith.constant 0 : index
    %374 = vector.load %arg9[%c7_251, %c0_252, %c0_253] : memref<8x64x16xbf16, #tpu.memory_space<vmem>>, vector<1x64x16xbf16>
    %375 = vector.shape_cast %374 : vector<1x64x16xbf16> to vector<64x16xbf16>
    %cst_254 = arith.constant dense<0.000000e+00> : vector<10x16xf32>
    %376 = tpu.matmul %293, %375, %cst_254 {dimension_numbers = #tpu.dot_dimension_numbers<[1], [0], [0], [1], [0, 0, 1, 1], [], []>} : vector<10x64xbf16>, vector<64x16xbf16>, vector<10x16xf32> -> vector<10x16xf32>
    %c7_255 = arith.constant 7 : index
    %c0_256 = arith.constant 0 : index
    %c0_257 = arith.constant 0 : index
    %377 = vector.load %arg12[%c7_255, %c0_256, %c0_257] : memref<8x1x16xf32, #tpu.memory_space<vmem>>, vector<1x1x16xf32>
    %378 = vector.shape_cast %377 : vector<1x1x16xf32> to vector<1x16xf32>
    %379 = vector.broadcast %378 : vector<1x16xf32> to vector<10x16xf32>
    %380 = arith.addf %376, %379 : vector<10x16xf32>
    %381 = arith.truncf %380 : vector<10x16xf32> to vector<10x16xbf16>
    %382 = arith.truncf %300 : vector<10x16xf32> to vector<10x16xbf16>
    %383 = arith.truncf %307 : vector<10x16xf32> to vector<10x16xbf16>
    %cst_258 = arith.constant dense<0.000000e+00> : vector<10x10xf32>
    %384 = tpu.matmul %382, %383, %cst_258 {dimension_numbers = #tpu.dot_dimension_numbers<[1], [1], [0], [0], [0, 0, 1, 0], [], []>} : vector<10x16xbf16>, vector<10x16xbf16>, vector<10x10xf32> -> vector<10x10xf32>
    %cst_259 = arith.constant 2.500000e-01 : f32
    %385 = vector.broadcast %cst_259 : f32 to vector<10x10xf32>
    %386 = arith.mulf %384, %385 : vector<10x10xf32>
    %387 = arith.addf %386, %0 : vector<10x10xf32>
    %388 = arith.truncf %322 : vector<10x16xf32> to vector<10x16xbf16>
    %389 = arith.truncf %329 : vector<10x16xf32> to vector<10x16xbf16>
    %cst_260 = arith.constant dense<0.000000e+00> : vector<10x10xf32>
    %390 = tpu.matmul %388, %389, %cst_260 {dimension_numbers = #tpu.dot_dimension_numbers<[1], [1], [0], [0], [0, 0, 1, 0], [], []>} : vector<10x16xbf16>, vector<10x16xbf16>, vector<10x10xf32> -> vector<10x10xf32>
    %cst_261 = arith.constant 2.500000e-01 : f32
    %391 = vector.broadcast %cst_261 : f32 to vector<10x10xf32>
    %392 = arith.mulf %390, %391 : vector<10x10xf32>
    %393 = arith.addf %392, %0 : vector<10x10xf32>
    %394 = arith.truncf %344 : vector<10x16xf32> to vector<10x16xbf16>
    %395 = arith.truncf %351 : vector<10x16xf32> to vector<10x16xbf16>
    %cst_262 = arith.constant dense<0.000000e+00> : vector<10x10xf32>
    %396 = tpu.matmul %394, %395, %cst_262 {dimension_numbers = #tpu.dot_dimension_numbers<[1], [1], [0], [0], [0, 0, 1, 0], [], []>} : vector<10x16xbf16>, vector<10x16xbf16>, vector<10x10xf32> -> vector<10x10xf32>
    %cst_263 = arith.constant 2.500000e-01 : f32
    %397 = vector.broadcast %cst_263 : f32 to vector<10x10xf32>
    %398 = arith.mulf %396, %397 : vector<10x10xf32>
    %399 = arith.addf %398, %0 : vector<10x10xf32>
    %400 = arith.truncf %366 : vector<10x16xf32> to vector<10x16xbf16>
    %401 = arith.truncf %373 : vector<10x16xf32> to vector<10x16xbf16>
    %cst_264 = arith.constant dense<0.000000e+00> : vector<10x10xf32>
    %402 = tpu.matmul %400, %401, %cst_264 {dimension_numbers = #tpu.dot_dimension_numbers<[1], [1], [0], [0], [0, 0, 1, 0], [], []>} : vector<10x16xbf16>, vector<10x16xbf16>, vector<10x10xf32> -> vector<10x10xf32>
    %cst_265 = arith.constant 2.500000e-01 : f32
    %403 = vector.broadcast %cst_265 : f32 to vector<10x10xf32>
    %404 = arith.mulf %402, %403 : vector<10x10xf32>
    %405 = arith.addf %404, %0 : vector<10x10xf32>
    %cst_266 = arith.constant dense<0xFF800000> : vector<10xf32>
    %406 = vector.multi_reduction <maximumf>, %387, %cst_266 [1] : vector<10x10xf32> to vector<10xf32>
    %407 = vector.shape_cast %406 : vector<10xf32> to vector<10x1xf32>
    %408 = vector.broadcast %407 : vector<10x1xf32> to vector<10x10xf32>
    %409 = arith.subf %387, %408 : vector<10x10xf32>
    %410 = math.exp %409 : vector<10x10xf32>
    %cst_267 = arith.constant dense<0.000000e+00> : vector<10xf32>
    %411 = vector.multi_reduction <add>, %410, %cst_267 [1] : vector<10x10xf32> to vector<10xf32>
    %412 = vector.shape_cast %411 : vector<10xf32> to vector<10x1xf32>
    %413 = tpu.reciprocal %412 : vector<10x1xf32> -> vector<10x1xf32>
    %414 = vector.broadcast %413 : vector<10x1xf32> to vector<10x10xf32>
    %415 = arith.mulf %410, %414 : vector<10x10xf32>
    %416 = arith.truncf %415 : vector<10x10xf32> to vector<10x10xbf16>
    %cst_268 = arith.constant dense<0xFF800000> : vector<10xf32>
    %417 = vector.multi_reduction <maximumf>, %393, %cst_268 [1] : vector<10x10xf32> to vector<10xf32>
    %418 = vector.shape_cast %417 : vector<10xf32> to vector<10x1xf32>
    %419 = vector.broadcast %418 : vector<10x1xf32> to vector<10x10xf32>
    %420 = arith.subf %393, %419 : vector<10x10xf32>
    %421 = math.exp %420 : vector<10x10xf32>
    %cst_269 = arith.constant dense<0.000000e+00> : vector<10xf32>
    %422 = vector.multi_reduction <add>, %421, %cst_269 [1] : vector<10x10xf32> to vector<10xf32>
    %423 = vector.shape_cast %422 : vector<10xf32> to vector<10x1xf32>
    %424 = tpu.reciprocal %423 : vector<10x1xf32> -> vector<10x1xf32>
    %425 = vector.broadcast %424 : vector<10x1xf32> to vector<10x10xf32>
    %426 = arith.mulf %421, %425 : vector<10x10xf32>
    %427 = arith.truncf %426 : vector<10x10xf32> to vector<10x10xbf16>
    %cst_270 = arith.constant dense<0xFF800000> : vector<10xf32>
    %428 = vector.multi_reduction <maximumf>, %399, %cst_270 [1] : vector<10x10xf32> to vector<10xf32>
    %429 = vector.shape_cast %428 : vector<10xf32> to vector<10x1xf32>
    %430 = vector.broadcast %429 : vector<10x1xf32> to vector<10x10xf32>
    %431 = arith.subf %399, %430 : vector<10x10xf32>
    %432 = math.exp %431 : vector<10x10xf32>
    %cst_271 = arith.constant dense<0.000000e+00> : vector<10xf32>
    %433 = vector.multi_reduction <add>, %432, %cst_271 [1] : vector<10x10xf32> to vector<10xf32>
    %434 = vector.shape_cast %433 : vector<10xf32> to vector<10x1xf32>
    %435 = tpu.reciprocal %434 : vector<10x1xf32> -> vector<10x1xf32>
    %436 = vector.broadcast %435 : vector<10x1xf32> to vector<10x10xf32>
    %437 = arith.mulf %432, %436 : vector<10x10xf32>
    %438 = arith.truncf %437 : vector<10x10xf32> to vector<10x10xbf16>
    %cst_272 = arith.constant dense<0xFF800000> : vector<10xf32>
    %439 = vector.multi_reduction <maximumf>, %405, %cst_272 [1] : vector<10x10xf32> to vector<10xf32>
    %440 = vector.shape_cast %439 : vector<10xf32> to vector<10x1xf32>
    %441 = vector.broadcast %440 : vector<10x1xf32> to vector<10x10xf32>
    %442 = arith.subf %405, %441 : vector<10x10xf32>
    %443 = math.exp %442 : vector<10x10xf32>
    %cst_273 = arith.constant dense<0.000000e+00> : vector<10xf32>
    %444 = vector.multi_reduction <add>, %443, %cst_273 [1] : vector<10x10xf32> to vector<10xf32>
    %445 = vector.shape_cast %444 : vector<10xf32> to vector<10x1xf32>
    %446 = tpu.reciprocal %445 : vector<10x1xf32> -> vector<10x1xf32>
    %447 = vector.broadcast %446 : vector<10x1xf32> to vector<10x10xf32>
    %448 = arith.mulf %443, %447 : vector<10x10xf32>
    %449 = arith.truncf %448 : vector<10x10xf32> to vector<10x10xbf16>
    %cst_274 = arith.constant dense<0.000000e+00> : vector<10x16xf32>
    %450 = tpu.matmul %416, %315, %cst_274 {dimension_numbers = #tpu.dot_dimension_numbers<[1], [0], [0], [1], [0, 0, 1, 1], [], []>} : vector<10x10xbf16>, vector<10x16xbf16>, vector<10x16xf32> -> vector<10x16xf32>
    %451 = arith.truncf %450 : vector<10x16xf32> to vector<10x16xbf16>
    %cst_275 = arith.constant dense<0.000000e+00> : vector<10x16xf32>
    %452 = tpu.matmul %427, %337, %cst_275 {dimension_numbers = #tpu.dot_dimension_numbers<[1], [0], [0], [1], [0, 0, 1, 1], [], []>} : vector<10x10xbf16>, vector<10x16xbf16>, vector<10x16xf32> -> vector<10x16xf32>
    %453 = arith.truncf %452 : vector<10x16xf32> to vector<10x16xbf16>
    %cst_276 = arith.constant dense<0.000000e+00> : vector<10x16xf32>
    %454 = tpu.matmul %438, %359, %cst_276 {dimension_numbers = #tpu.dot_dimension_numbers<[1], [0], [0], [1], [0, 0, 1, 1], [], []>} : vector<10x10xbf16>, vector<10x16xbf16>, vector<10x16xf32> -> vector<10x16xf32>
    %455 = arith.truncf %454 : vector<10x16xf32> to vector<10x16xbf16>
    %cst_277 = arith.constant dense<0.000000e+00> : vector<10x16xf32>
    %456 = tpu.matmul %449, %381, %cst_277 {dimension_numbers = #tpu.dot_dimension_numbers<[1], [0], [0], [1], [0, 0, 1, 1], [], []>} : vector<10x10xbf16>, vector<10x16xbf16>, vector<10x16xf32> -> vector<10x16xf32>
    %457 = arith.truncf %456 : vector<10x16xf32> to vector<10x16xbf16>
    %c1_278 = arith.constant 1 : index
    %c0_279 = arith.constant 0 : index
    %c0_280 = arith.constant 0 : index
    %458 = vector.load %arg14[%c1_278, %c0_279, %c0_280] : memref<2x1x64xf32, #tpu.memory_space<vmem>>, vector<1x1x64xf32>
    %459 = vector.shape_cast %458 : vector<1x1x64xf32> to vector<1x64xf32>
    %c4_281 = arith.constant 4 : index
    %c0_282 = arith.constant 0 : index
    %c0_283 = arith.constant 0 : index
    %460 = vector.load %arg13[%c4_281, %c0_282, %c0_283] : memref<8x16x64xbf16, #tpu.memory_space<vmem>>, vector<1x16x64xbf16>
    %461 = vector.shape_cast %460 : vector<1x16x64xbf16> to vector<16x64xbf16>
    %cst_284 = arith.constant dense<0.000000e+00> : vector<10x64xf32>
    %462 = tpu.matmul %451, %461, %cst_284 {dimension_numbers = #tpu.dot_dimension_numbers<[1], [0], [0], [1], [0, 0, 1, 1], [], []>} : vector<10x16xbf16>, vector<16x64xbf16>, vector<10x64xf32> -> vector<10x64xf32>
    %463 = vector.broadcast %459 : vector<1x64xf32> to vector<10x64xf32>
    %464 = arith.addf %463, %462 : vector<10x64xf32>
    %c5_285 = arith.constant 5 : index
    %c0_286 = arith.constant 0 : index
    %c0_287 = arith.constant 0 : index
    %465 = vector.load %arg13[%c5_285, %c0_286, %c0_287] : memref<8x16x64xbf16, #tpu.memory_space<vmem>>, vector<1x16x64xbf16>
    %466 = vector.shape_cast %465 : vector<1x16x64xbf16> to vector<16x64xbf16>
    %cst_288 = arith.constant dense<0.000000e+00> : vector<10x64xf32>
    %467 = tpu.matmul %453, %466, %cst_288 {dimension_numbers = #tpu.dot_dimension_numbers<[1], [0], [0], [1], [0, 0, 1, 1], [], []>} : vector<10x16xbf16>, vector<16x64xbf16>, vector<10x64xf32> -> vector<10x64xf32>
    %468 = arith.addf %464, %467 : vector<10x64xf32>
    %c6_289 = arith.constant 6 : index
    %c0_290 = arith.constant 0 : index
    %c0_291 = arith.constant 0 : index
    %469 = vector.load %arg13[%c6_289, %c0_290, %c0_291] : memref<8x16x64xbf16, #tpu.memory_space<vmem>>, vector<1x16x64xbf16>
    %470 = vector.shape_cast %469 : vector<1x16x64xbf16> to vector<16x64xbf16>
    %cst_292 = arith.constant dense<0.000000e+00> : vector<10x64xf32>
    %471 = tpu.matmul %455, %470, %cst_292 {dimension_numbers = #tpu.dot_dimension_numbers<[1], [0], [0], [1], [0, 0, 1, 1], [], []>} : vector<10x16xbf16>, vector<16x64xbf16>, vector<10x64xf32> -> vector<10x64xf32>
    %472 = arith.addf %468, %471 : vector<10x64xf32>
    %c7_293 = arith.constant 7 : index
    %c0_294 = arith.constant 0 : index
    %c0_295 = arith.constant 0 : index
    %473 = vector.load %arg13[%c7_293, %c0_294, %c0_295] : memref<8x16x64xbf16, #tpu.memory_space<vmem>>, vector<1x16x64xbf16>
    %474 = vector.shape_cast %473 : vector<1x16x64xbf16> to vector<16x64xbf16>
    %cst_296 = arith.constant dense<0.000000e+00> : vector<10x64xf32>
    %475 = tpu.matmul %457, %474, %cst_296 {dimension_numbers = #tpu.dot_dimension_numbers<[1], [0], [0], [1], [0, 0, 1, 1], [], []>} : vector<10x16xbf16>, vector<16x64xbf16>, vector<10x64xf32> -> vector<10x64xf32>
    %476 = arith.addf %472, %475 : vector<10x64xf32>
    %477 = arith.addf %268, %476 : vector<10x64xf32>
    %c1_297 = arith.constant 1 : index
    %c0_298 = arith.constant 0 : index
    %c0_299 = arith.constant 0 : index
    %478 = vector.load %arg15[%c1_297, %c0_298, %c0_299] : memref<2x1x64xf32, #tpu.memory_space<vmem>>, vector<1x1x64xf32>
    %479 = vector.shape_cast %478 : vector<1x1x64xf32> to vector<1x64xf32>
    %c1_300 = arith.constant 1 : index
    %c0_301 = arith.constant 0 : index
    %c0_302 = arith.constant 0 : index
    %480 = vector.load %arg16[%c1_300, %c0_301, %c0_302] : memref<2x1x64xf32, #tpu.memory_space<vmem>>, vector<1x1x64xf32>
    %481 = vector.shape_cast %480 : vector<1x1x64xf32> to vector<1x64xf32>
    %cst_303 = arith.constant dense<0.000000e+00> : vector<10xf32>
    %482 = vector.multi_reduction <add>, %477, %cst_303 [1] : vector<10x64xf32> to vector<10xf32>
    %483 = vector.shape_cast %482 : vector<10xf32> to vector<10x1xf32>
    %cst_304 = arith.constant 6.400000e+01 : f32
    %484 = vector.broadcast %cst_304 : f32 to vector<10x1xf32>
    %485 = arith.divf %483, %484 : vector<10x1xf32>
    %486 = vector.broadcast %485 : vector<10x1xf32> to vector<10x64xf32>
    %487 = arith.subf %477, %486 : vector<10x64xf32>
    %488 = arith.mulf %487, %487 : vector<10x64xf32>
    %cst_305 = arith.constant dense<0.000000e+00> : vector<10xf32>
    %489 = vector.multi_reduction <add>, %488, %cst_305 [1] : vector<10x64xf32> to vector<10xf32>
    %490 = vector.shape_cast %489 : vector<10xf32> to vector<10x1xf32>
    %cst_306 = arith.constant 6.400000e+01 : f32
    %491 = vector.broadcast %cst_306 : f32 to vector<10x1xf32>
    %492 = arith.divf %490, %491 : vector<10x1xf32>
    %cst_307 = arith.constant 9.99999997E-7 : f32
    %493 = vector.broadcast %cst_307 : f32 to vector<10x1xf32>
    %494 = arith.addf %492, %493 : vector<10x1xf32>
    %495 = math.rsqrt %494 : vector<10x1xf32>
    %496 = vector.broadcast %495 : vector<10x1xf32> to vector<10x64xf32>
    %497 = arith.mulf %487, %496 : vector<10x64xf32>
    %498 = vector.broadcast %479 : vector<1x64xf32> to vector<10x64xf32>
    %499 = arith.mulf %497, %498 : vector<10x64xf32>
    %500 = vector.broadcast %481 : vector<1x64xf32> to vector<10x64xf32>
    %501 = arith.addf %499, %500 : vector<10x64xf32>
    %c1_308 = arith.constant 1 : index
    %c0_309 = arith.constant 0 : index
    %c0_310 = arith.constant 0 : index
    %502 = vector.load %arg17[%c1_308, %c0_309, %c0_310] : memref<2x64x256xbf16, #tpu.memory_space<vmem>>, vector<1x64x256xbf16>
    %503 = vector.shape_cast %502 : vector<1x64x256xbf16> to vector<64x256xbf16>
    %504 = arith.truncf %501 : vector<10x64xf32> to vector<10x64xbf16>
    %cst_311 = arith.constant dense<0.000000e+00> : vector<10x256xf32>
    %505 = tpu.matmul %504, %503, %cst_311 {dimension_numbers = #tpu.dot_dimension_numbers<[1], [0], [0], [1], [0, 0, 1, 1], [], []>} : vector<10x64xbf16>, vector<64x256xbf16>, vector<10x256xf32> -> vector<10x256xf32>
    %c1_312 = arith.constant 1 : index
    %c0_313 = arith.constant 0 : index
    %c0_314 = arith.constant 0 : index
    %506 = vector.load %arg18[%c1_312, %c0_313, %c0_314] : memref<2x1x256xf32, #tpu.memory_space<vmem>>, vector<1x1x256xf32>
    %507 = vector.shape_cast %506 : vector<1x1x256xf32> to vector<1x256xf32>
    %508 = vector.broadcast %507 : vector<1x256xf32> to vector<10x256xf32>
    %509 = arith.addf %505, %508 : vector<10x256xf32>
    %cst_315 = arith.constant 5.000000e-01 : f32
    %510 = vector.broadcast %cst_315 : f32 to vector<10x256xf32>
    %511 = arith.mulf %510, %509 : vector<10x256xf32>
    %cst_316 = arith.constant 4.471500e-02 : f32
    %512 = vector.broadcast %cst_316 : f32 to vector<10x256xf32>
    %513 = arith.mulf %512, %509 : vector<10x256xf32>
    %514 = arith.mulf %513, %509 : vector<10x256xf32>
    %515 = arith.mulf %514, %509 : vector<10x256xf32>
    %516 = arith.addf %509, %515 : vector<10x256xf32>
    %cst_317 = arith.constant 0.797884583 : f32
    %517 = vector.broadcast %cst_317 : f32 to vector<10x256xf32>
    %518 = arith.mulf %517, %516 : vector<10x256xf32>
    %519 = math.tanh %518 : vector<10x256xf32>
    %cst_318 = arith.constant 1.000000e+00 : f32
    %520 = vector.broadcast %cst_318 : f32 to vector<10x256xf32>
    %521 = arith.addf %520, %519 : vector<10x256xf32>
    %522 = arith.mulf %511, %521 : vector<10x256xf32>
    %c1_319 = arith.constant 1 : index
    %c0_320 = arith.constant 0 : index
    %c0_321 = arith.constant 0 : index
    %523 = vector.load %arg19[%c1_319, %c0_320, %c0_321] : memref<2x256x64xbf16, #tpu.memory_space<vmem>>, vector<1x256x64xbf16>
    %524 = vector.shape_cast %523 : vector<1x256x64xbf16> to vector<256x64xbf16>
    %525 = arith.truncf %522 : vector<10x256xf32> to vector<10x256xbf16>
    %cst_322 = arith.constant dense<0.000000e+00> : vector<10x64xf32>
    %526 = tpu.matmul %525, %524, %cst_322 {dimension_numbers = #tpu.dot_dimension_numbers<[1], [0], [0], [1], [0, 0, 1, 1], [], []>} : vector<10x256xbf16>, vector<256x64xbf16>, vector<10x64xf32> -> vector<10x64xf32>
    %527 = arith.addf %477, %526 : vector<10x64xf32>
    %c1_323 = arith.constant 1 : index
    %c0_324 = arith.constant 0 : index
    %c0_325 = arith.constant 0 : index
    %528 = vector.load %arg20[%c1_323, %c0_324, %c0_325] : memref<2x1x64xf32, #tpu.memory_space<vmem>>, vector<1x1x64xf32>
    %529 = vector.shape_cast %528 : vector<1x1x64xf32> to vector<1x64xf32>
    %530 = vector.broadcast %529 : vector<1x64xf32> to vector<10x64xf32>
    %531 = arith.addf %527, %530 : vector<10x64xf32>
    %c0_326 = arith.constant 0 : index
    %c0_327 = arith.constant 0 : index
    %532 = vector.load %arg21[%c0_326, %c0_327] : memref<1x64xf32, #tpu.memory_space<vmem>>, vector<1x64xf32>
    %c0_328 = arith.constant 0 : index
    %c0_329 = arith.constant 0 : index
    %533 = vector.load %arg22[%c0_328, %c0_329] : memref<1x64xf32, #tpu.memory_space<vmem>>, vector<1x64xf32>
    %cst_330 = arith.constant dense<0.000000e+00> : vector<10xf32>
    %534 = vector.multi_reduction <add>, %531, %cst_330 [1] : vector<10x64xf32> to vector<10xf32>
    %535 = vector.shape_cast %534 : vector<10xf32> to vector<10x1xf32>
    %cst_331 = arith.constant 6.400000e+01 : f32
    %536 = vector.broadcast %cst_331 : f32 to vector<10x1xf32>
    %537 = arith.divf %535, %536 : vector<10x1xf32>
    %538 = vector.broadcast %537 : vector<10x1xf32> to vector<10x64xf32>
    %539 = arith.subf %531, %538 : vector<10x64xf32>
    %540 = arith.mulf %539, %539 : vector<10x64xf32>
    %cst_332 = arith.constant dense<0.000000e+00> : vector<10xf32>
    %541 = vector.multi_reduction <add>, %540, %cst_332 [1] : vector<10x64xf32> to vector<10xf32>
    %542 = vector.shape_cast %541 : vector<10xf32> to vector<10x1xf32>
    %cst_333 = arith.constant 6.400000e+01 : f32
    %543 = vector.broadcast %cst_333 : f32 to vector<10x1xf32>
    %544 = arith.divf %542, %543 : vector<10x1xf32>
    %cst_334 = arith.constant 9.99999997E-7 : f32
    %545 = vector.broadcast %cst_334 : f32 to vector<10x1xf32>
    %546 = arith.addf %544, %545 : vector<10x1xf32>
    %547 = math.rsqrt %546 : vector<10x1xf32>
    %548 = vector.broadcast %547 : vector<10x1xf32> to vector<10x64xf32>
    %549 = arith.mulf %539, %548 : vector<10x64xf32>
    %550 = vector.broadcast %532 : vector<1x64xf32> to vector<10x64xf32>
    %551 = arith.mulf %549, %550 : vector<10x64xf32>
    %552 = vector.broadcast %533 : vector<1x64xf32> to vector<10x64xf32>
    %553 = arith.addf %551, %552 : vector<10x64xf32>
    %c0_335 = arith.constant 0 : index
    %c0_336 = arith.constant 0 : index
    %554 = vector.load %arg23[%c0_335, %c0_336] : memref<64x128xbf16, #tpu.memory_space<vmem>>, vector<64x128xbf16>
    %555 = arith.truncf %553 : vector<10x64xf32> to vector<10x64xbf16>
    %cst_337 = arith.constant dense<0.000000e+00> : vector<10x128xf32>
    %556 = tpu.matmul %555, %554, %cst_337 {dimension_numbers = #tpu.dot_dimension_numbers<[1], [0], [0], [1], [0, 0, 1, 1], [], []>} : vector<10x64xbf16>, vector<64x128xbf16>, vector<10x128xf32> -> vector<10x128xf32>
    %c0_338 = arith.constant 0 : index
    %c0_339 = arith.constant 0 : index
    %557 = vector.load %arg24[%c0_338, %c0_339] : memref<1x128xf32, #tpu.memory_space<vmem>>, vector<1x128xf32>
    %558 = vector.broadcast %557 : vector<1x128xf32> to vector<10x128xf32>
    %559 = arith.addf %556, %558 : vector<10x128xf32>
    %c0_340 = arith.constant 0 : index
    %c0_341 = arith.constant 0 : index
    %560 = vector.load %arg25[%c0_340, %c0_341] : memref<10x128xf32, #tpu.memory_space<vmem>>, vector<10x128xf32>
    tpu.vector_store %arg25[%c0_340, %c0_341], %559 {strides = array<i32>} : memref<10x128xf32, #tpu.memory_space<vmem>>, vector<10x128xf32>,
    return
  }
  func.func @transform_0(%arg0: i32) -> (i32, i32) {
    %c0_i32 = arith.constant 0 : i32
    %c0_i32_0 = arith.constant 0 : i32
    %c0_i32_1 = arith.constant 0 : i32
    return %c0_i32, %c0_i32_0 : i32, i32
  }
  func.func @transform_1(%arg0: i32) -> (i32, i32) {
    %c0_i32 = arith.constant 0 : i32
    %c0_i32_0 = arith.constant 0 : i32
    %c0_i32_1 = arith.constant 0 : i32
    return %c0_i32, %c0_i32_0 : i32, i32
  }
  func.func @transform_2(%arg0: i32) -> (i32, i32) {
    %c0_i32 = arith.constant 0 : i32
    %c0_i32_0 = arith.constant 0 : i32
    %c0_i32_1 = arith.constant 0 : i32
    return %c0_i32, %c0_i32_0 : i32, i32
  }
  func.func @transform_3(%arg0: i32) -> (i32, i32) {
    %c0_i32 = arith.constant 0 : i32
    %c0_i32_0 = arith.constant 0 : i32
    %c0_i32_1 = arith.constant 0 : i32
    return %c0_i32, %c0_i32_0 : i32, i32
  }
  func.func @transform_4(%arg0: i32) -> (i32, i32, i32) {
    %c0_i32 = arith.constant 0 : i32
    %c0_i32_0 = arith.constant 0 : i32
    %c0_i32_1 = arith.constant 0 : i32
    %c0_i32_2 = arith.constant 0 : i32
    return %c0_i32, %c0_i32_0, %c0_i32_1 : i32, i32, i32
  }
  func.func @transform_5(%arg0: i32) -> (i32, i32, i32) {
    %c0_i32 = arith.constant 0 : i32
    %c0_i32_0 = arith.constant 0 : i32
    %c0_i32_1 = arith.constant 0 : i32
    %c0_i32_2 = arith.constant 0 : i32
    return %c0_i32, %c0_i32_0, %c0_i32_1 : i32, i32, i32
  }
  func.func @transform_6(%arg0: i32) -> (i32, i32, i32) {
    %c0_i32 = arith.constant 0 : i32
    %c0_i32_0 = arith.constant 0 : i32
    %c0_i32_1 = arith.constant 0 : i32
    %c0_i32_2 = arith.constant 0 : i32
    return %c0_i32, %c0_i32_0, %c0_i32_1 : i32, i32, i32
  }
  func.func @transform_7(%arg0: i32) -> (i32, i32, i32) {
    %c0_i32 = arith.constant 0 : i32
    %c0_i32_0 = arith.constant 0 : i32
    %c0_i32_1 = arith.constant 0 : i32
    %c0_i32_2 = arith.constant 0 : i32
    return %c0_i32, %c0_i32_0, %c0_i32_1 : i32, i32, i32
  }
  func.func @transform_8(%arg0: i32) -> (i32, i32, i32) {
    %c0_i32 = arith.constant 0 : i32
    %c0_i32_0 = arith.constant 0 : i32
    %c0_i32_1 = arith.constant 0 : i32
    %c0_i32_2 = arith.constant 0 : i32
    return %c0_i32, %c0_i32_0, %c0_i32_1 : i32, i32, i32
  }
  func.func @transform_9(%arg0: i32) -> (i32, i32, i32) {
    %c0_i32 = arith.constant 0 : i32
    %c0_i32_0 = arith.constant 0 : i32
    %c0_i32_1 = arith.constant 0 : i32
    %c0_i32_2 = arith.constant 0 : i32
    return %c0_i32, %c0_i32_0, %c0_i32_1 : i32, i32, i32
  }
  func.func @transform_10(%arg0: i32) -> (i32, i32, i32) {
    %c0_i32 = arith.constant 0 : i32
    %c0_i32_0 = arith.constant 0 : i32
    %c0_i32_1 = arith.constant 0 : i32
    %c0_i32_2 = arith.constant 0 : i32
    return %c0_i32, %c0_i32_0, %c0_i32_1 : i32, i32, i32
  }
  func.func @transform_11(%arg0: i32) -> (i32, i32, i32) {
    %c0_i32 = arith.constant 0 : i32
    %c0_i32_0 = arith.constant 0 : i32
    %c0_i32_1 = arith.constant 0 : i32
    %c0_i32_2 = arith.constant 0 : i32
    return %c0_i32, %c0_i32_0, %c0_i32_1 : i32, i32, i32
  }
  func.func @transform_12(%arg0: i32) -> (i32, i32, i32) {
    %c0_i32 = arith.constant 0 : i32
    %c0_i32_0 = arith.constant 0 : i32
    %c0_i32_1 = arith.constant 0 : i32
    %c0_i32_2 = arith.constant 0 : i32
    return %c0_i32, %c0_i32_0, %c0_i32_1 : i32, i32, i32
  }
  func.func @transform_13(%arg0: i32) -> (i32, i32, i32) {
    %c0_i32 = arith.constant 0 : i32
    %c0_i32_0 = arith.constant 0 : i32
    %c0_i32_1 = arith.constant 0 : i32
    %c0_i32_2 = arith.constant 0 : i32
    return %c0_i32, %c0_i32_0, %c0_i32_1 : i32, i32, i32
  }
  func.func @transform_14(%arg0: i32) -> (i32, i32, i32) {
    %c0_i32 = arith.constant 0 : i32
    %c0_i32_0 = arith.constant 0 : i32
    %c0_i32_1 = arith.constant 0 : i32
    %c0_i32_2 = arith.constant 0 : i32
    return %c0_i32, %c0_i32_0, %c0_i32_1 : i32, i32, i32
  }
  func.func @transform_15(%arg0: i32) -> (i32, i32, i32) {
    %c0_i32 = arith.constant 0 : i32
    %c0_i32_0 = arith.constant 0 : i32
    %c0_i32_1 = arith.constant 0 : i32
    %c0_i32_2 = arith.constant 0 : i32
    return %c0_i32, %c0_i32_0, %c0_i32_1 : i32, i32, i32
  }
  func.func @transform_16(%arg0: i32) -> (i32, i32, i32) {
    %c0_i32 = arith.constant 0 : i32
    %c0_i32_0 = arith.constant 0 : i32
    %c0_i32_1 = arith.constant 0 : i32
    %c0_i32_2 = arith.constant 0 : i32
    return %c0_i32, %c0_i32_0, %c0_i32_1 : i32, i32, i32
  }
  func.func @transform_17(%arg0: i32) -> (i32, i32, i32) {
    %c0_i32 = arith.constant 0 : i32
    %c0_i32_0 = arith.constant 0 : i32
    %c0_i32_1 = arith.constant 0 : i32
    %c0_i32_2 = arith.constant 0 : i32
    return %c0_i32, %c0_i32_0, %c0_i32_1 : i32, i32, i32
  }
  func.func @transform_18(%arg0: i32) -> (i32, i32, i32) {
    %c0_i32 = arith.constant 0 : i32
    %c0_i32_0 = arith.constant 0 : i32
    %c0_i32_1 = arith.constant 0 : i32
    %c0_i32_2 = arith.constant 0 : i32
    return %c0_i32, %c0_i32_0, %c0_i32_1 : i32, i32, i32
  }
  func.func @transform_19(%arg0: i32) -> (i32, i32, i32) {
    %c0_i32 = arith.constant 0 : i32
    %c0_i32_0 = arith.constant 0 : i32
    %c0_i32_1 = arith.constant 0 : i32
    %c0_i32_2 = arith.constant 0 : i32
    return %c0_i32, %c0_i32_0, %c0_i32_1 : i32, i32, i32
  }
  func.func @transform_20(%arg0: i32) -> (i32, i32) {
    %c0_i32 = arith.constant 0 : i32
    %c0_i32_0 = arith.constant 0 : i32
    %c0_i32_1 = arith.constant 0 : i32
    return %c0_i32, %c0_i32_0 : i32, i32
  }
  func.func @transform_21(%arg0: i32) -> (i32, i32) {
    %c0_i32 = arith.constant 0 : i32
    %c0_i32_0 = arith.constant 0 : i32
    %c0_i32_1 = arith.constant 0 : i32
    return %c0_i32, %c0_i32_0 : i32, i32
  }
  func.func @transform_22(%arg0: i32) -> (i32, i32) {
    %c0_i32 = arith.constant 0 : i32
    %c0_i32_0 = arith.constant 0 : i32
    %c0_i32_1 = arith.constant 0 : i32
    return %c0_i32, %c0_i32_0 : i32, i32
  }
  func.func @transform_23(%arg0: i32) -> (i32, i32) {
    %c0_i32 = arith.constant 0 : i32
    %c0_i32_0 = arith.constant 0 : i32
    %c0_i32_1 = arith.constant 0 : i32
    return %c0_i32, %c0_i32_0 : i32, i32
  }
  func.func @transform_24(%arg0: i32) -> (i32, i32) {
    %c0_i32 = arith.constant 0 : i32
    %c0_i32_0 = arith.constant 0 : i32
    %c0_i32_1 = arith.constant 0 : i32
    return %c0_i32, %c0_i32_0 : i32, i32
  }
}

</mosaic_0001>

<llo_original>
// kernel: eq.8
$region0: #{eq.8}
  %s0 = inlined_call_operand.vmem [shape: s32[2,5], index: 0, kind: input, shape index: {}]
  %s1 = inlined_call_operand.vmem [shape: s32[10], index: 1, kind: output, shape index: {}]
  $region1: #{eq.8} parent=0
    #allocation0 [shape = 'u8[4096]{0}', space=vmem, size = 0x1000, scoped, tag = 'scoped mem for output reshape']
    #allocation1 [shape = 'u8[4096]{0}', space=vmem, size = 0x1000, scoped, tag = 'scoped mem for input reshape']
    %s3 = ssub.s32 4, 1
    %v4 = vld [vmem:[%s0] sm:%s3]
    %5 = vst [vmem:[#allocation1] sm:%s3] %v4
    %v6 = vld [vmem:[#allocation1] sm:$0x1]
    %vm7 = vcmask 39936
    %8 = vst.msk [vmem:[#allocation0] sm:$0x1] %vm7, %v6
    %s9 = scalar_lea.vmem [#allocation1], 1
    %v10 = vld [vmem:[%s9] sm:$0x1]
    %11 = vrot.lane.b32.xlu0 %v10, 5
    %v12 = vpop.permute.xlu0 %11
    %vm13 = vcmask 80936
    %14 = vst.msk [vmem:[#allocation0] sm:$0x1] %vm13, %v12
    %s16 = ssub.s32 2, 1
    %v17 = vld [vmem:[#allocation0] sm:%s16]
    %s19 = ssub.s32 2, 1
    %20 = vst [vmem:[%s1] sm:%s19] %v17

// kernel: tile.9
$region0: #{tile.9}
  %s0 = inlined_call_operand.vmem [shape: f32[2,5,64], index: 0, kind: input, shape index: {}]
  %s1 = inlined_call_operand.vmem [shape: f32[10,64], index: 1, kind: output, shape index: {}]
  %v2 = vld [vmem:[%s0] sm:$0x1f]
  %vm3 = vcmask 523264
  %4 = vst.msk [vmem:[%s1] sm:$0x1f] %vm3, %v2
  %s5 = scalar_lea.vmem %s0, 8
  %v6 = vld [vmem:[%s5] sm:$0x1f]
  %vm7 = vcmask 523264
  %s8 = scalar_lea.vmem %s1, 5
  %9 = vst.msk [vmem:[%s8] sm:$0x1f] %vm7, %v6

// kernel: vit_forward.1
$region0: #{vit_forward.1}
  #allocation0 [shape = 'u32[]', space=smem, size = 0x4, offset = 0x4, fixed_abs, tag = 'smem constant byte address 0x4 - core index']
  #allocation1 [shape = 'u32[72,128]{1,0:T(1,128)}', space=vmem, size = 0x9000, scoped, tag = 'internal scratch']
  %s0 = inlined_call_operand.vmem [shape: bf16[10,768], index: 0, kind: input, shape index: {}]
  %s1 = inlined_call_operand.vmem [shape: f32[10,10], index: 1, kind: input, shape index: {}]
  %s2 = inlined_call_operand.vmem [shape: f32[10,64], index: 2, kind: input, shape index: {}]
  %s3 = inlined_call_operand.vmem [shape: bf16[768,64], index: 3, kind: input, shape index: {}]
  %s4 = inlined_call_operand.vmem [shape: f32[2,1,64], index: 4, kind: input, shape index: {}]
  %s5 = inlined_call_operand.vmem [shape: f32[2,1,64], index: 5, kind: input, shape index: {}]
  %s6 = inlined_call_operand.vmem [shape: bf16[8,64,16], index: 6, kind: input, shape index: {}]
  %s7 = inlined_call_operand.vmem [shape: bf16[8,64,16], index: 7, kind: input, shape index: {}]
  %s8 = inlined_call_operand.vmem [shape: bf16[8,64,16], index: 8, kind: input, shape index: {}]
  %s9 = inlined_call_operand.vmem [shape: f32[8,1,16], index: 9, kind: input, shape index: {}]
  %s10 = inlined_call_operand.vmem [shape: f32[8,1,16], index: 10, kind: input, shape index: {}]
  %s11 = inlined_call_operand.vmem [shape: f32[8,1,16], index: 11, kind: input, shape index: {}]
  %s12 = inlined_call_operand.vmem [shape: bf16[8,16,64], index: 12, kind: input, shape index: {}]
  %s13 = inlined_call_operand.vmem [shape: f32[2,1,64], index: 13, kind: input, shape index: {}]
  %s14 = inlined_call_operand.vmem [shape: f32[2,1,64], index: 14, kind: input, shape index: {}]
  %s15 = inlined_call_operand.vmem [shape: f32[2,1,64], index: 15, kind: input, shape index: {}]
  %s16 = inlined_call_operand.vmem [shape: bf16[2,64,256], index: 16, kind: input, shape index: {}]
  %s17 = inlined_call_operand.vmem [shape: f32[2,1,256], index: 17, kind: input, shape index: {}]
  %s18 = inlined_call_operand.vmem [shape: bf16[2,256,64], index: 18, kind: input, shape index: {}]
  %s19 = inlined_call_operand.vmem [shape: f32[2,1,64], index: 19, kind: input, shape index: {}]
  %s20 = inlined_call_operand.vmem [shape: f32[1,64], index: 20, kind: input, shape index: {}]
  %s21 = inlined_call_operand.vmem [shape: f32[1,64], index: 21, kind: input, shape index: {}]
  %s22 = inlined_call_operand.vmem [shape: bf16[64,128], index: 22, kind: input, shape index: {}]
  %s23 = inlined_call_operand.vmem [shape: f32[1,128], index: 23, kind: input, shape index: {}]
  %s24 = inlined_call_operand.vmem [shape: f32[10,128], index: 24, kind: output, shape index: {}]
  %s25 = sld [smem:[#allocation0]]
  $region106: #{vit_forward.1} parent=0
    _
  %s27 = ssub.s32 1, %s25
  %s28 = scalar_select 0, %s27, %s25
  // Predicated region
  $region2: #{vit_forward.1} parent=0 // pred_check
    _
  $region3: #{vit_forward.1} parent=0 // pred_check_branch
    %30 = sbr.rel (0) target = $region5
  $region4: #{vit_forward.1} parent=0 // pred_region
    _
  $region5: #{vit_forward.1} parent=0 // pred_fallthru
    _
  // Predicated region
  $region6: #{vit_forward.1} parent=0 // pred_check
    _
  $region7: #{vit_forward.1} parent=0 // pred_check_branch
    %32 = sbr.rel (0) target = $region9
  $region8: #{vit_forward.1} parent=0 // pred_region
    _
  $region9: #{vit_forward.1} parent=0 // pred_fallthru
    _
  // Predicated region
  $region10: #{vit_forward.1} parent=0 // pred_check
    _
  $region11: #{vit_forward.1} parent=0 // pred_check_branch
    %34 = sbr.rel (0) target = $region13
  $region12: #{vit_forward.1} parent=0 // pred_region
    _
  $region13: #{vit_forward.1} parent=0 // pred_fallthru
    _
  // Predicated region
  $region14: #{vit_forward.1} parent=0 // pred_check
    _
  $region15: #{vit_forward.1} parent=0 // pred_check_branch
    %36 = sbr.rel (0) target = $region17
  $region16: #{vit_forward.1} parent=0 // pred_region
    _
  $region17: #{vit_forward.1} parent=0 // pred_fallthru
    _
  // Predicated region
  $region18: #{vit_forward.1} parent=0 // pred_check
    _
  $region19: #{vit_forward.1} parent=0 // pred_check_branch
    %38 = sbr.rel (0) target = $region21
  $region20: #{vit_forward.1} parent=0 // pred_region
    _
  $region21: #{vit_forward.1} parent=0 // pred_fallthru
    _
  // Predicated region
  $region22: #{vit_forward.1} parent=0 // pred_check
    _
  $region23: #{vit_forward.1} parent=0 // pred_check_branch
    %40 = sbr.rel (0) target = $region25
  $region24: #{vit_forward.1} parent=0 // pred_region
    _
  $region25: #{vit_forward.1} parent=0 // pred_fallthru
    _
  // Predicated region
  $region26: #{vit_forward.1} parent=0 // pred_check
    _
  $region27: #{vit_forward.1} parent=0 // pred_check_branch
    %42 = sbr.rel (0) target = $region29
  $region28: #{vit_forward.1} parent=0 // pred_region
    _
  $region29: #{vit_forward.1} parent=0 // pred_fallthru
    _
  // Predicated region
  $region30: #{vit_forward.1} parent=0 // pred_check
    _
  $region31: #{vit_forward.1} parent=0 // pred_check_branch
    %44 = sbr.rel (0) target = $region33
  $region32: #{vit_forward.1} parent=0 // pred_region
    _
  $region33: #{vit_forward.1} parent=0 // pred_fallthru
    _
  // Predicated region
  $region34: #{vit_forward.1} parent=0 // pred_check
    _
  $region35: #{vit_forward.1} parent=0 // pred_check_branch
    %46 = sbr.rel (0) target = $region37
  $region36: #{vit_forward.1} parent=0 // pred_region
    _
  $region37: #{vit_forward.1} parent=0 // pred_fallthru
    _
  // Predicated region
  $region38: #{vit_forward.1} parent=0 // pred_check
    _
  $region39: #{vit_forward.1} parent=0 // pred_check_branch
    %48 = sbr.rel (0) target = $region41
  $region40: #{vit_forward.1} parent=0 // pred_region
    _
  $region41: #{vit_forward.1} parent=0 // pred_fallthru
    _
  // Predicated region
  $region42: #{vit_forward.1} parent=0 // pred_check
    _
  $region43: #{vit_forward.1} parent=0 // pred_check_branch
    %50 = sbr.rel (0) target = $region45
  $region44: #{vit_forward.1} parent=0 // pred_region
    _
  $region45: #{vit_forward.1} parent=0 // pred_fallthru
    _
  // Predicated region
  $region46: #{vit_forward.1} parent=0 // pred_check
    _
  $region47: #{vit_forward.1} parent=0 // pred_check_branch
    %52 = sbr.rel (0) target = $region49
  $region48: #{vit_forward.1} parent=0 // pred_region
    _
  $region49: #{vit_forward.1} parent=0 // pred_fallthru
    _
  // Predicated region
  $region50: #{vit_forward.1} parent=0 // pred_check
    _
  $region51: #{vit_forward.1} parent=0 // pred_check_branch
    %54 = sbr.rel (0) target = $region53
  $region52: #{vit_forward.1} parent=0 // pred_region
    _
  $region53: #{vit_forward.1} parent=0 // pred_fallthru
    _
  // Predicated region
  $region54: #{vit_forward.1} parent=0 // pred_check
    _
  $region55: #{vit_forward.1} parent=0 // pred_check_branch
    %56 = sbr.rel (0) target = $region57
  $region56: #{vit_forward.1} parent=0 // pred_region
    _
  $region57: #{vit_forward.1} parent=0 // pred_fallthru
    _
  // Predicated region
  $region58: #{vit_forward.1} parent=0 // pred_check
    _
  $region59: #{vit_forward.1} parent=0 // pred_check_branch
    %58 = sbr.rel (0) target = $region61
  $region60: #{vit_forward.1} parent=0 // pred_region
    _
  $region61: #{vit_forward.1} parent=0 // pred_fallthru
    _
  // Predicated region
  $region62: #{vit_forward.1} parent=0 // pred_check
    _
  $region63: #{vit_forward.1} parent=0 // pred_check_branch
    %60 = sbr.rel (0) target = $region65
  $region64: #{vit_forward.1} parent=0 // pred_region
    _
  $region65: #{vit_forward.1} parent=0 // pred_fallthru
    _
  // Predicated region
  $region66: #{vit_forward.1} parent=0 // pred_check
    _
  $region67: #{vit_forward.1} parent=0 // pred_check_branch
    %62 = sbr.rel (0) target = $region69
  $region68: #{vit_forward.1} parent=0 // pred_region
    _
  $region69: #{vit_forward.1} parent=0 // pred_fallthru
    _
  // Predicated region
  $region70: #{vit_forward.1} parent=0 // pred_check
    _
  $region71: #{vit_forward.1} parent=0 // pred_check_branch
    %64 = sbr.rel (0) target = $region73
  $region72: #{vit_forward.1} parent=0 // pred_region
    _
  $region73: #{vit_forward.1} parent=0 // pred_fallthru
    _
  // Predicated region
  $region74: #{vit_forward.1} parent=0 // pred_check
    _
  $region75: #{vit_forward.1} parent=0 // pred_check_branch
    %66 = sbr.rel (0) target = $region77
  $region76: #{vit_forward.1} parent=0 // pred_region
    _
  $region77: #{vit_forward.1} parent=0 // pred_fallthru
    _
  // Predicated region
  $region78: #{vit_forward.1} parent=0 // pred_check
    _
  $region79: #{vit_forward.1} parent=0 // pred_check_branch
    %68 = sbr.rel (0) target = $region81
  $region80: #{vit_forward.1} parent=0 // pred_region
    _
  $region81: #{vit_forward.1} parent=0 // pred_fallthru
    _
  // Predicated region
  $region82: #{vit_forward.1} parent=0 // pred_check
    _
  $region83: #{vit_forward.1} parent=0 // pred_check_branch
    %70 = sbr.rel (0) target = $region85
  $region84: #{vit_forward.1} parent=0 // pred_region
    _
  $region85: #{vit_forward.1} parent=0 // pred_fallthru
    _
  // Predicated region
  $region86: #{vit_forward.1} parent=0 // pred_check
    _
  $region87: #{vit_forward.1} parent=0 // pred_check_branch
    %72 = sbr.rel (0) target = $region89
  $region88: #{vit_forward.1} parent=0 // pred_region
    _
  $region89: #{vit_forward.1} parent=0 // pred_fallthru
    _
  // Predicated region
  $region90: #{vit_forward.1} parent=0 // pred_check
    _
  $region91: #{vit_forward.1} parent=0 // pred_check_branch
    %74 = sbr.rel (0) target = $region93
  $region92: #{vit_forward.1} parent=0 // pred_region
    _
  $region93: #{vit_forward.1} parent=0 // pred_fallthru
    _
  // Predicated region
  $region94: #{vit_forward.1} parent=0 // pred_check
    _
  $region95: #{vit_forward.1} parent=0 // pred_check_branch
    %76 = sbr.rel (0) target = $region97
  $region96: #{vit_forward.1} parent=0 // pred_region
    _
  $region97: #{vit_forward.1} parent=0 // pred_fallthru
    _
  %v78 = vld [vmem:[%s1] sm:$0xff]
  %v79 = vld [vmem:[%s1 + $0x8] sm:$0x3]
  %v80 = vld [vmem:[%s0] sm:$0xff]
  %v81 = vld [vmem:[%s0 + $0x8] sm:$0xff]
  %v82 = vld [vmem:[%s0 + $0x10] sm:$0xff]
  %v83 = vld [vmem:[%s0 + $0x18] sm:$0x11]
  %v84 = vld [vmem:[%s0 + $0x20] sm:$0x11]
  %v85 = vld [vmem:[%s0 + $0x28] sm:$0x11]
  %v86 = vld [vmem:[%s3] sm:$0xf]
  %v87 = vld [vmem:[%s3 + $0x4] sm:$0xf]
  %v88 = vld [vmem:[%s3 + $0x8] sm:$0xf]
  %v89 = vld [vmem:[%s3 + $0xc] sm:$0xf]
  %v90 = vld [vmem:[%s3 + $0x10] sm:$0xf]
  %v91 = vld [vmem:[%s3 + $0x14] sm:$0xf]
  %v92 = vld [vmem:[%s3 + $0x18] sm:$0xf]
  %v93 = vld [vmem:[%s3 + $0x1c] sm:$0xf]
  %v94 = vld [vmem:[%s3 + $0x20] sm:$0xf]
  %v95 = vld [vmem:[%s3 + $0x24] sm:$0xf]
  %v96 = vld [vmem:[%s3 + $0x28] sm:$0xf]
  %v97 = vld [vmem:[%s3 + $0x2c] sm:$0xf]
  %v98 = vld [vmem:[%s3 + $0x30] sm:$0xf]
  %v99 = vld [vmem:[%s3 + $0x34] sm:$0xf]
  %v100 = vld [vmem:[%s3 + $0x38] sm:$0xf]
  %v101 = vld [vmem:[%s3 + $0x3c] sm:$0xf]
  %v102 = vld [vmem:[%s3 + $0x40] sm:$0xf]
  %v103 = vld [vmem:[%s3 + $0x44] sm:$0xf]
  %v104 = vld [vmem:[%s3 + $0x48] sm:$0xf]
  %v105 = vld [vmem:[%s3 + $0x4c] sm:$0xf]
  %v106 = vld [vmem:[%s3 + $0x50] sm:$0xf]
  %v107 = vld [vmem:[%s3 + $0x54] sm:$0xf]
  %v108 = vld [vmem:[%s3 + $0x58] sm:$0xf]
  %v109 = vld [vmem:[%s3 + $0x5c] sm:$0xf]
  %v110 = vld [vmem:[%s3 + $0x60] sm:$0xf]
  %v111 = vld [vmem:[%s3 + $0x64] sm:$0xf]
  %v112 = vld [vmem:[%s3 + $0x68] sm:$0xf]
  %v113 = vld [vmem:[%s3 + $0x6c] sm:$0xf]
  %v114 = vld [vmem:[%s3 + $0x70] sm:$0xf]
  %v115 = vld [vmem:[%s3 + $0x74] sm:$0xf]
  %v116 = vld [vmem:[%s3 + $0x78] sm:$0xf]
  %v117 = vld [vmem:[%s3 + $0x7c] sm:$0xf]
  %v118 = vld [vmem:[%s3 + $0x80] sm:$0xf]
  %v119 = vld [vmem:[%s3 + $0x84] sm:$0xf]
  %v120 = vld [vmem:[%s3 + $0x88] sm:$0xf]
  %v121 = vld [vmem:[%s3 + $0x8c] sm:$0xf]
  %v122 = vld [vmem:[%s3 + $0x90] sm:$0xf]
  %v123 = vld [vmem:[%s3 + $0x94] sm:$0xf]
  %v124 = vld [vmem:[%s3 + $0x98] sm:$0xf]
  %v125 = vld [vmem:[%s3 + $0x9c] sm:$0xf]
  %v126 = vld [vmem:[%s3 + $0xa0] sm:$0xf]
  %v127 = vld [vmem:[%s3 + $0xa4] sm:$0xf]
  %v128 = vld [vmem:[%s3 + $0xa8] sm:$0xf]
  %v129 = vld [vmem:[%s3 + $0xac] sm:$0xf]
  %v130 = vld [vmem:[%s3 + $0xb0] sm:$0xf]
  %v131 = vld [vmem:[%s3 + $0xb4] sm:$0xf]
  %v132 = vld [vmem:[%s3 + $0xb8] sm:$0xf]
  %v133 = vld [vmem:[%s3 + $0xbc] sm:$0xf]
  %v134 = vld [vmem:[%s3 + $0xc0] sm:$0xf]
  %v135 = vld [vmem:[%s3 + $0xc4] sm:$0xf]
  %v136 = vld [vmem:[%s3 + $0xc8] sm:$0xf]
  %v137 = vld [vmem:[%s3 + $0xcc] sm:$0xf]
  %v138 = vld [vmem:[%s3 + $0xd0] sm:$0xf]
  %v139 = vld [vmem:[%s3 + $0xd4] sm:$0xf]
  %v140 = vld [vmem:[%s3 + $0xd8] sm:$0xf]
  %v141 = vld [vmem:[%s3 + $0xdc] sm:$0xf]
  %v142 = vld [vmem:[%s3 + $0xe0] sm:$0xf]
  %v143 = vld [vmem:[%s3 + $0xe4] sm:$0xf]
  %v144 = vld [vmem:[%s3 + $0xe8] sm:$0xf]
  %v145 = vld [vmem:[%s3 + $0xec] sm:$0xf]
  %v146 = vld [vmem:[%s3 + $0xf0] sm:$0xf]
  %v147 = vld [vmem:[%s3 + $0xf4] sm:$0xf]
  %v148 = vld [vmem:[%s3 + $0xf8] sm:$0xf]
  %v149 = vld [vmem:[%s3 + $0xfc] sm:$0xf]
  %v150 = vld [vmem:[%s3 + $0x100] sm:$0xf]
  %v151 = vld [vmem:[%s3 + $0x104] sm:$0xf]
  %v152 = vld [vmem:[%s3 + $0x108] sm:$0xf]
  %v153 = vld [vmem:[%s3 + $0x10c] sm:$0xf]
  %v154 = vld [vmem:[%s3 + $0x110] sm:$0xf]
  %v155 = vld [vmem:[%s3 + $0x114] sm:$0xf]
  %v156 = vld [vmem:[%s3 + $0x118] sm:$0xf]
  %v157 = vld [vmem:[%s3 + $0x11c] sm:$0xf]
  %v158 = vld [vmem:[%s3 + $0x120] sm:$0xf]
  %v159 = vld [vmem:[%s3 + $0x124] sm:$0xf]
  %v160 = vld [vmem:[%s3 + $0x128] sm:$0xf]
  %v161 = vld [vmem:[%s3 + $0x12c] sm:$0xf]
  %v162 = vld [vmem:[%s3 + $0x130] sm:$0xf]
  %v163 = vld [vmem:[%s3 + $0x134] sm:$0xf]
  %v164 = vld [vmem:[%s3 + $0x138] sm:$0xf]
  %v165 = vld [vmem:[%s3 + $0x13c] sm:$0xf]
  %v166 = vld [vmem:[%s3 + $0x140] sm:$0xf]
  %v167 = vld [vmem:[%s3 + $0x144] sm:$0xf]
  %v168 = vld [vmem:[%s3 + $0x148] sm:$0xf]
  %v169 = vld [vmem:[%s3 + $0x14c] sm:$0xf]
  %v170 = vld [vmem:[%s3 + $0x150] sm:$0xf]
  %v171 = vld [vmem:[%s3 + $0x154] sm:$0xf]
  %v172 = vld [vmem:[%s3 + $0x158] sm:$0xf]
  %v173 = vld [vmem:[%s3 + $0x15c] sm:$0xf]
  %v174 = vld [vmem:[%s3 + $0x160] sm:$0xf]
  %v175 = vld [vmem:[%s3 + $0x164] sm:$0xf]
  %v176 = vld [vmem:[%s3 + $0x168] sm:$0xf]
  %v177 = vld [vmem:[%s3 + $0x16c] sm:$0xf]
  %v178 = vld [vmem:[%s3 + $0x170] sm:$0xf]
  %v179 = vld [vmem:[%s3 + $0x174] sm:$0xf]
  %v180 = vld [vmem:[%s3 + $0x178] sm:$0xf]
  %v181 = vld [vmem:[%s3 + $0x17c] sm:$0xf]
  %v182 = vld [vmem:[%s2] sm:$0xff]
  %v183 = vld [vmem:[%s2 + $0x8] sm:$0x3]
  %v190 = vunpack.c.l.b16 %v80
  %v191 = vunpack.c.h.b16 %v80
  %v192 = vunpack.c.l.b16 %v81
  %v193 = vunpack.c.h.b16 %v81
  %v194 = vunpack.c.l.b16 %v82
  %v195 = vunpack.c.h.b16 %v82
  %v196 = vunpack.c.l.b16 %v83
  %v197 = vunpack.c.h.b16 %v83
  %v198 = vunpack.c.l.b16 %v84
  %v199 = vunpack.c.h.b16 %v84
  %v200 = vunpack.c.l.b16 %v85
  %v201 = vunpack.c.h.b16 %v85
  %v202 = vpack.c.b16 %v196, %v190
  %v203 = vpack.c.b16 %v197, %v191
  %v204 = vpack.c.b16 %v198, %v192
  %v205 = vpack.c.b16 %v199, %v193
  %v206 = vpack.c.b16 %v200, %v194
  %v207 = vpack.c.b16 %v201, %v195
  %v310 = vunpack.c.l.b16 %v86
  %v311 = vunpack.c.l.b16 %v87
  %v312 = vunpack.c.l.b16 %v88
  %v313 = vunpack.c.l.b16 %v89
  %v314 = vunpack.c.l.b16 %v90
  %v315 = vunpack.c.l.b16 %v91
  %v316 = vunpack.c.l.b16 %v92
  %v317 = vunpack.c.l.b16 %v93
  %v318 = vunpack.c.l.b16 %v94
  %v319 = vunpack.c.l.b16 %v95
  %v320 = vunpack.c.l.b16 %v96
  %v321 = vunpack.c.l.b16 %v97
  %v322 = vunpack.c.l.b16 %v98
  %v323 = vunpack.c.l.b16 %v99
  %v324 = vunpack.c.l.b16 %v100
  %v325 = vunpack.c.l.b16 %v101
  %v326 = vunpack.c.l.b16 %v102
  %v327 = vunpack.c.l.b16 %v103
  %v328 = vunpack.c.l.b16 %v104
  %v329 = vunpack.c.l.b16 %v105
  %v330 = vunpack.c.l.b16 %v106
  %v331 = vunpack.c.l.b16 %v107
  %v332 = vunpack.c.l.b16 %v108
  %v333 = vunpack.c.l.b16 %v109
  %v334 = vunpack.c.l.b16 %v110
  %v335 = vunpack.c.l.b16 %v111
  %v336 = vunpack.c.l.b16 %v112
  %v337 = vunpack.c.l.b16 %v113
  %v338 = vunpack.c.l.b16 %v114
  %v339 = vunpack.c.l.b16 %v115
  %v340 = vunpack.c.l.b16 %v116
  %v341 = vunpack.c.l.b16 %v117
  %v342 = vunpack.c.l.b16 %v118
  %v343 = vunpack.c.l.b16 %v119
  %v344 = vunpack.c.l.b16 %v120
  %v345 = vunpack.c.l.b16 %v121
  %v346 = vunpack.c.l.b16 %v122
  %v347 = vunpack.c.l.b16 %v123
  %v348 = vunpack.c.l.b16 %v124
  %v349 = vunpack.c.l.b16 %v125
  %v350 = vunpack.c.l.b16 %v126
  %v351 = vunpack.c.l.b16 %v127
  %v352 = vunpack.c.l.b16 %v128
  %v353 = vunpack.c.l.b16 %v129
  %v354 = vunpack.c.l.b16 %v130
  %v355 = vunpack.c.l.b16 %v131
  %v356 = vunpack.c.l.b16 %v132
  %v357 = vunpack.c.l.b16 %v133
  %v358 = vunpack.c.l.b16 %v134
  %v359 = vunpack.c.l.b16 %v135
  %v360 = vunpack.c.l.b16 %v136
  %v361 = vunpack.c.l.b16 %v137
  %v362 = vunpack.c.l.b16 %v138
  %v363 = vunpack.c.l.b16 %v139
  %v364 = vunpack.c.l.b16 %v140
  %v365 = vunpack.c.l.b16 %v141
  %v366 = vunpack.c.l.b16 %v142
  %v367 = vunpack.c.l.b16 %v143
  %v368 = vunpack.c.l.b16 %v144
  %v369 = vunpack.c.l.b16 %v145
  %v370 = vunpack.c.l.b16 %v146
  %v371 = vunpack.c.l.b16 %v147
  %v372 = vunpack.c.l.b16 %v148
  %v373 = vunpack.c.l.b16 %v149
  %v374 = vunpack.c.l.b16 %v150
  %v375 = vunpack.c.l.b16 %v151
  %v376 = vunpack.c.l.b16 %v152
  %v377 = vunpack.c.l.b16 %v153
  %v378 = vunpack.c.l.b16 %v154
  %v379 = vunpack.c.l.b16 %v155
  %v380 = vunpack.c.l.b16 %v156
  %v381 = vunpack.c.l.b16 %v157
  %v382 = vunpack.c.l.b16 %v158
  %v383 = vunpack.c.l.b16 %v159
  %v384 = vunpack.c.l.b16 %v160
  %v385 = vunpack.c.l.b16 %v161
  %v386 = vunpack.c.l.b16 %v162
  %v387 = vunpack.c.l.b16 %v163
  %v388 = vunpack.c.l.b16 %v164
  %v389 = vunpack.c.l.b16 %v165
  %v390 = vunpack.c.l.b16 %v166
  %v391 = vunpack.c.l.b16 %v167
  %v392 = vunpack.c.l.b16 %v168
  %v393 = vunpack.c.l.b16 %v169
  %v394 = vunpack.c.l.b16 %v170
  %v395 = vunpack.c.l.b16 %v171
  %v396 = vunpack.c.l.b16 %v172
  %v397 = vunpack.c.l.b16 %v173
  %v398 = vunpack.c.l.b16 %v174
  %v399 = vunpack.c.l.b16 %v175
  %v400 = vunpack.c.l.b16 %v176
  %v401 = vunpack.c.l.b16 %v177
  %v402 = vunpack.c.l.b16 %v178
  %v403 = vunpack.c.l.b16 %v179
  %v404 = vunpack.c.l.b16 %v180
  %v405 = vunpack.c.l.b16 %v181
  %v406 = vpack.c.b16 %v311, %v310
  %v407 = vpack.c.b16 %v313, %v312
  %v408 = vpack.c.b16 %v315, %v314
  %v409 = vpack.c.b16 %v317, %v316
  %v410 = vpack.c.b16 %v319, %v318
  %v411 = vpack.c.b16 %v321, %v320
  %v412 = vpack.c.b16 %v323, %v322
  %v413 = vpack.c.b16 %v325, %v324
  %v414 = vpack.c.b16 %v327, %v326
  %v415 = vpack.c.b16 %v329, %v328
  %v416 = vpack.c.b16 %v331, %v330
  %v417 = vpack.c.b16 %v333, %v332
  %v418 = vpack.c.b16 %v335, %v334
  %v419 = vpack.c.b16 %v337, %v336
  %v420 = vpack.c.b16 %v339, %v338
  %v421 = vpack.c.b16 %v341, %v340
  %v422 = vpack.c.b16 %v343, %v342
  %v423 = vpack.c.b16 %v345, %v344
  %v424 = vpack.c.b16 %v347, %v346
  %v425 = vpack.c.b16 %v349, %v348
  %v426 = vpack.c.b16 %v351, %v350
  %v427 = vpack.c.b16 %v353, %v352
  %v428 = vpack.c.b16 %v355, %v354
  %v429 = vpack.c.b16 %v357, %v356
  %v430 = vpack.c.b16 %v359, %v358
  %v431 = vpack.c.b16 %v361, %v360
  %v432 = vpack.c.b16 %v363, %v362
  %v433 = vpack.c.b16 %v365, %v364
  %v434 = vpack.c.b16 %v367, %v366
  %v435 = vpack.c.b16 %v369, %v368
  %v436 = vpack.c.b16 %v371, %v370
  %v437 = vpack.c.b16 %v373, %v372
  %v438 = vpack.c.b16 %v375, %v374
  %v439 = vpack.c.b16 %v377, %v376
  %v440 = vpack.c.b16 %v379, %v378
  %v441 = vpack.c.b16 %v381, %v380
  %v442 = vpack.c.b16 %v383, %v382
  %v443 = vpack.c.b16 %v385, %v384
  %v444 = vpack.c.b16 %v387, %v386
  %v445 = vpack.c.b16 %v389, %v388
  %v446 = vpack.c.b16 %v391, %v390
  %v447 = vpack.c.b16 %v393, %v392
  %v448 = vpack.c.b16 %v395, %v394
  %v449 = vpack.c.b16 %v397, %v396
  %v450 = vpack.c.b16 %v399, %v398
  %v451 = vpack.c.b16 %v401, %v400
  %v452 = vpack.c.b16 %v403, %v402
  %v453 = vpack.c.b16 %v405, %v404
  %502 = vmatpush.bf16.msra.mxu0 %v413
  %503 = vmatpush.bf16.msra.mxu0 %v412
  %504 = vmatpush.bf16.msra.mxu0 %v411
  %505 = vmatpush.bf16.msra.mxu0 %v410
  %506 = vmatpush.bf16.msra.mxu0 %v409
  %507 = vmatpush.bf16.msra.mxu0 %v408
  %508 = vmatpush.bf16.msra.mxu0 %v407
  %509 = vmatpush.bf16.msra.mxu0 %v406
  %510 = vmatmul.bf16.gmra.mxu0 %v202
  %v511 = vpop.f32.mrf.mxu0
  %v512 = vadd.f32 %v182, %v511
  %v513 = vpop.f32.mrf.mxu0
  %v514 = vadd.f32 %v183, %v513
  %515 = vdwg.mxu0
  %516 = vmatpush.bf16.msra.mxu0 %v421
  %517 = vmatpush.bf16.msra.mxu0 %v420
  %518 = vmatpush.bf16.msra.mxu0 %v419
  %519 = vmatpush.bf16.msra.mxu0 %v418
  %520 = vmatpush.bf16.msra.mxu0 %v417
  %521 = vmatpush.bf16.msra.mxu0 %v416
  %522 = vmatpush.bf16.msra.mxu0 %v415
  %523 = vmatpush.bf16.msra.mxu0 %v414
  %524 = vmatmul.bf16.gmra.mxu0 %v203
  %v525 = vpop.f32.mrf.mxu0
  %v526 = vadd.f32 %v512, %v525
  %v527 = vpop.f32.mrf.mxu0
  %v528 = vadd.f32 %v514, %v527
  %529 = vdwg.mxu0
  %530 = vmatpush.bf16.msra.mxu0 %v429
  %531 = vmatpush.bf16.msra.mxu0 %v428
  %532 = vmatpush.bf16.msra.mxu0 %v427
  %533 = vmatpush.bf16.msra.mxu0 %v426
  %534 = vmatpush.bf16.msra.mxu0 %v425
  %535 = vmatpush.bf16.msra.mxu0 %v424
  %536 = vmatpush.bf16.msra.mxu0 %v423
  %537 = vmatpush.bf16.msra.mxu0 %v422
  %538 = vmatmul.bf16.gmra.mxu0 %v204
  %v539 = vpop.f32.mrf.mxu0
  %v540 = vadd.f32 %v526, %v539
  %v541 = vpop.f32.mrf.mxu0
  %v542 = vadd.f32 %v528, %v541
  %543 = vdwg.mxu0
  %544 = vmatpush.bf16.msra.mxu0 %v437
  %545 = vmatpush.bf16.msra.mxu0 %v436
  %546 = vmatpush.bf16.msra.mxu0 %v435
  %547 = vmatpush.bf16.msra.mxu0 %v434
  %548 = vmatpush.bf16.msra.mxu0 %v433
  %549 = vmatpush.bf16.msra.mxu0 %v432
  %550 = vmatpush.bf16.msra.mxu0 %v431
  %551 = vmatpush.bf16.msra.mxu0 %v430
  %552 = vmatmul.bf16.gmra.mxu0 %v205
  %v553 = vpop.f32.mrf.mxu0
  %v554 = vadd.f32 %v540, %v553
  %v555 = vpop.f32.mrf.mxu0
  %v556 = vadd.f32 %v542, %v555
  %557 = vdwg.mxu0
  %558 = vmatpush.bf16.msra.mxu0 %v445
  %559 = vmatpush.bf16.msra.mxu0 %v444
  %560 = vmatpush.bf16.msra.mxu0 %v443
  %561 = vmatpush.bf16.msra.mxu0 %v442
  %562 = vmatpush.bf16.msra.mxu0 %v441
  %563 = vmatpush.bf16.msra.mxu0 %v440
  %564 = vmatpush.bf16.msra.mxu0 %v439
  %565 = vmatpush.bf16.msra.mxu0 %v438
  %566 = vmatmul.bf16.gmra.mxu0 %v206
  %v567 = vpop.f32.mrf.mxu0
  %v568 = vadd.f32 %v554, %v567
  %v569 = vpop.f32.mrf.mxu0
  %v570 = vadd.f32 %v556, %v569
  %571 = vdwg.mxu0
  %572 = vmatpush.bf16.msra.mxu0 %v453
  %573 = vmatpush.bf16.msra.mxu0 %v452
  %574 = vmatpush.bf16.msra.mxu0 %v451
  %575 = vmatpush.bf16.msra.mxu0 %v450
  %576 = vmatpush.bf16.msra.mxu0 %v449
  %577 = vmatpush.bf16.msra.mxu0 %v448
  %578 = vmatpush.bf16.msra.mxu0 %v447
  %579 = vmatpush.bf16.msra.mxu0 %v446
  %580 = vmatmul.bf16.gmra.mxu0 %v207
  %v581 = vpop.f32.mrf.mxu0
  %v582 = vadd.f32 %v568, %v581
  %v583 = vpop.f32.mrf.mxu0
  %v584 = vadd.f32 %v570, %v583
  %585 = vdwg.mxu0
  %v586 = vld [vmem:[%s4] sm:$0x1]
  %v587 = vld [vmem:[%s5] sm:$0x1]
  %vm588 = vcmask 523264
  %v589 = vsel %vm588, %v582, 0.0
  %590 = vadd.xlane.f32.xlu0 %v589
  %v591 = vpop.xlane.xlu0 %590
  %vm592 = vcmask 517120
  %v593 = vsel %vm592, %v584, 0.0
  %594 = vadd.xlane.f32.xlu0 %v593
  %v595 = vpop.xlane.xlu0 %594
  %v596 = vrcp.pop 64.0
  %v597 = vmul.f32 64.0, %v596
  %v598 = vsub.f32 1.0, %v597
  %v599 = vmul.f32 %v596, %v598
  %v600 = vadd.f32 %v596, %v599
  %vm601 = vweird.f32 %v596
  %v602 = vsel %vm601, %v596, %v600
  %v603 = vmul.f32 %v591, %v602
  %v604 = vmul.f32 %v595, %v602
  %v605 = vsub.f32 %v582, %v603
  %v606 = vsub.f32 %v584, %v604
  %v607 = vmul.f32 %v605, %v605
  %v608 = vmul.f32 %v606, %v606
  %v609 = vsel %vm588, %v607, 0.0
  %610 = vadd.xlane.f32.xlu0 %v609
  %v611 = vpop.xlane.xlu0 %610
  %v612 = vsel %vm592, %v608, 0.0
  %613 = vadd.xlane.f32.xlu0 %v612
  %v614 = vpop.xlane.xlu0 %613
  %v615 = vmul.f32 %v611, %v602
  %v616 = vmul.f32 %v614, %v602
  %v617 = vadd.f32 %v615, 1e-06
  %v618 = vadd.f32 %v616, 1e-06
  %v619 = vrsqrt.pop %v617
  %v620 = vmul.f32 %v619, %v617
  %v621 = vmul.f32 %v620, %v619
  %v622 = vmul.f32 0.5, %v621
  %v623 = vsub.f32 1.5, %v622
  %v624 = vmul.f32 %v619, %v623
  %vm625 = vweird.f32 %v617
  %vm626 = vweird.f32 %v619
  %vm627 = vmor %vm625, %vm626
  %v628 = vsel %vm627, %v619, %v624
  %v629 = vrsqrt.pop %v618
  %v630 = vmul.f32 %v629, %v618
  %v631 = vmul.f32 %v630, %v629
  %v632 = vmul.f32 0.5, %v631
  %v633 = vsub.f32 1.5, %v632
  %v634 = vmul.f32 %v629, %v633
  %vm635 = vweird.f32 %v618
  %vm636 = vweird.f32 %v629
  %vm637 = vmor %vm635, %vm636
  %v638 = vsel %vm637, %v629, %v634
  %v639 = vmul.f32 %v605, %v628
  %v640 = vmul.f32 %v606, %v638
  %v642 = vperm.slane %v586, 0
  %v644 = vmul.f32 %v639, %v642
  %v645 = vmul.f32 %v640, %v642
  %v647 = vperm.slane %v587, 0
  %v649 = vadd.f32 %v644, %v647
  %v650 = vadd.f32 %v645, %v647
  %v651 = vpack.c.bf16 %v650, %v649
  %v652 = vld [vmem:[%s6] sm:$0xf]
  %v653 = vld [vmem:[%s6 + $0x4] sm:$0xf]
  %v654 = vld [vmem:[%s6 + $0x8] sm:$0xf]
  %v655 = vld [vmem:[%s6 + $0xc] sm:$0xf]
  %v656 = vld [vmem:[%s6 + $0x10] sm:$0xf]
  %v657 = vld [vmem:[%s6 + $0x14] sm:$0xf]
  %v658 = vld [vmem:[%s6 + $0x18] sm:$0xf]
  %v659 = vld [vmem:[%s6 + $0x1c] sm:$0xf]
  %v660 = vld [vmem:[%s9] sm:$0x1]
  %v662 = vperm.slane %v660, 0
  %v672 = vunpack.c.l.b16 %v652
  %v673 = vunpack.c.l.b16 %v653
  %v674 = vunpack.c.l.b16 %v654
  %v675 = vunpack.c.l.b16 %v655
  %v676 = vunpack.c.l.b16 %v656
  %v677 = vunpack.c.l.b16 %v657
  %v678 = vunpack.c.l.b16 %v658
  %v679 = vunpack.c.l.b16 %v659
  %v680 = vpack.c.b16 %v673, %v672
  %v681 = vpack.c.b16 %v675, %v674
  %v682 = vpack.c.b16 %v677, %v676
  %v683 = vpack.c.b16 %v679, %v678
  %v689 = vsel %vm588, %v651, 0
  %691 = vmatpush.bf16.msra.mxu0 0
  %692 = vmatpush.bf16.msra.mxu0 0
  %693 = vmatpush.bf16.msra.mxu0 0
  %694 = vmatpush.bf16.msra.mxu0 0
  %695 = vmatpush.bf16.msra.mxu0 %v683
  %696 = vmatpush.bf16.msra.mxu0 %v682
  %697 = vmatpush.bf16.msra.mxu0 %v681
  %698 = vmatpush.bf16.msra.mxu0 %v680
  %699 = vmatmul.bf16.gmra.mxu0 %v689
  %v700 = vpop.f32.mrf.mxu0
  %v701 = vadd.f32 %v662, %v700
  %v702 = vpop.f32.mrf.mxu0
  %v703 = vadd.f32 %v662, %v702
  %704 = vdwg.mxu0
  %v705 = vld [vmem:[%s7] sm:$0xf]
  %v706 = vld [vmem:[%s7 + $0x4] sm:$0xf]
  %v707 = vld [vmem:[%s7 + $0x8] sm:$0xf]
  %v708 = vld [vmem:[%s7 + $0xc] sm:$0xf]
  %v709 = vld [vmem:[%s7 + $0x10] sm:$0xf]
  %v710 = vld [vmem:[%s7 + $0x14] sm:$0xf]
  %v711 = vld [vmem:[%s7 + $0x18] sm:$0xf]
  %v712 = vld [vmem:[%s7 + $0x1c] sm:$0xf]
  %v713 = vld [vmem:[%s10] sm:$0x1]
  %v715 = vperm.slane %v713, 0
  %v725 = vunpack.c.l.b16 %v705
  %v726 = vunpack.c.l.b16 %v706
  %v727 = vunpack.c.l.b16 %v707
  %v728 = vunpack.c.l.b16 %v708
  %v729 = vunpack.c.l.b16 %v709
  %v730 = vunpack.c.l.b16 %v710
  %v731 = vunpack.c.l.b16 %v711
  %v732 = vunpack.c.l.b16 %v712
  %v733 = vpack.c.b16 %v726, %v725
  %v734 = vpack.c.b16 %v728, %v727
  %v735 = vpack.c.b16 %v730, %v729
  %v736 = vpack.c.b16 %v732, %v731
  %741 = vmatpush.bf16.msra.mxu0 0
  %742 = vmatpush.bf16.msra.mxu0 0
  %743 = vmatpush.bf16.msra.mxu0 0
  %744 = vmatpush.bf16.msra.mxu0 0
  %745 = vmatpush.bf16.msra.mxu0 %v736
  %746 = vmatpush.bf16.msra.mxu0 %v735
  %747 = vmatpush.bf16.msra.mxu0 %v734
  %748 = vmatpush.bf16.msra.mxu0 %v733
  %749 = vmatmul.bf16.gmra.mxu0 %v689
  %v750 = vpop.f32.mrf.mxu0
  %v751 = vadd.f32 %v715, %v750
  %v752 = vpop.f32.mrf.mxu0
  %v753 = vadd.f32 %v715, %v752
  %754 = vdwg.mxu0
  %v755 = vld [vmem:[%s8] sm:$0xf]
  %v756 = vld [vmem:[%s8 + $0x4] sm:$0xf]
  %v757 = vld [vmem:[%s8 + $0x8] sm:$0xf]
  %v758 = vld [vmem:[%s8 + $0xc] sm:$0xf]
  %v759 = vld [vmem:[%s8 + $0x10] sm:$0xf]
  %v760 = vld [vmem:[%s8 + $0x14] sm:$0xf]
  %v761 = vld [vmem:[%s8 + $0x18] sm:$0xf]
  %v762 = vld [vmem:[%s8 + $0x1c] sm:$0xf]
  %v763 = vld [vmem:[%s11] sm:$0x1]
  %v765 = vperm.slane %v763, 0
  %v775 = vunpack.c.l.b16 %v755
  %v776 = vunpack.c.l.b16 %v756
  %v777 = vunpack.c.l.b16 %v757
  %v778 = vunpack.c.l.b16 %v758
  %v779 = vunpack.c.l.b16 %v759
  %v780 = vunpack.c.l.b16 %v760
  %v781 = vunpack.c.l.b16 %v761
  %v782 = vunpack.c.l.b16 %v762
  %v783 = vpack.c.b16 %v776, %v775
  %v784 = vpack.c.b16 %v778, %v777
  %v785 = vpack.c.b16 %v780, %v779
  %v786 = vpack.c.b16 %v782, %v781
  %791 = vmatpush.bf16.msra.mxu0 0
  %792 = vmatpush.bf16.msra.mxu0 0
  %793 = vmatpush.bf16.msra.mxu0 0
  %794 = vmatpush.bf16.msra.mxu0 0
  %795 = vmatpush.bf16.msra.mxu0 %v786
  %796 = vmatpush.bf16.msra.mxu0 %v785
  %797 = vmatpush.bf16.msra.mxu0 %v784
  %798 = vmatpush.bf16.msra.mxu0 %v783
  %799 = vmatmul.bf16.gmra.mxu0 %v689
  %v800 = vpop.f32.mrf.mxu0
  %v801 = vadd.f32 %v765, %v800
  %v802 = vpop.f32.mrf.mxu0
  %v803 = vadd.f32 %v765, %v802
  %804 = vdwg.mxu0
  %v805 = vpack.c.bf16 %v803, %v801
  %s806 = scalar_lea.vmem %s6, 32
  %v807 = vld [vmem:[%s806] sm:$0xf]
  %v808 = vld [vmem:[%s806 + $0x4] sm:$0xf]
  %v809 = vld [vmem:[%s806 + $0x8] sm:$0xf]
  %v810 = vld [vmem:[%s806 + $0xc] sm:$0xf]
  %v811 = vld [vmem:[%s806 + $0x10] sm:$0xf]
  %v812 = vld [vmem:[%s806 + $0x14] sm:$0xf]
  %v813 = vld [vmem:[%s806 + $0x18] sm:$0xf]
  %v814 = vld [vmem:[%s806 + $0x1c] sm:$0xf]
  %s815 = scalar_lea.vmem %s9, 1
  %v816 = vld [vmem:[%s815] sm:$0x1]
  %v818 = vperm.slane %v816, 0
  %v828 = vunpack.c.l.b16 %v807
  %v829 = vunpack.c.l.b16 %v808
  %v830 = vunpack.c.l.b16 %v809
  %v831 = vunpack.c.l.b16 %v810
  %v832 = vunpack.c.l.b16 %v811
  %v833 = vunpack.c.l.b16 %v812
  %v834 = vunpack.c.l.b16 %v813
  %v835 = vunpack.c.l.b16 %v814
  %v836 = vpack.c.b16 %v829, %v828
  %v837 = vpack.c.b16 %v831, %v830
  %v838 = vpack.c.b16 %v833, %v832
  %v839 = vpack.c.b16 %v835, %v834
  %844 = vmatpush.bf16.msra.mxu0 0
  %845 = vmatpush.bf16.msra.mxu0 0
  %846 = vmatpush.bf16.msra.mxu0 0
  %847 = vmatpush.bf16.msra.mxu0 0
  %848 = vmatpush.bf16.msra.mxu0 %v839
  %849 = vmatpush.bf16.msra.mxu0 %v838
  %850 = vmatpush.bf16.msra.mxu0 %v837
  %851 = vmatpush.bf16.msra.mxu0 %v836
  %852 = vmatmul.bf16.gmra.mxu0 %v689
  %v853 = vpop.f32.mrf.mxu0
  %v854 = vadd.f32 %v818, %v853
  %v855 = vpop.f32.mrf.mxu0
  %v856 = vadd.f32 %v818, %v855
  %857 = vdwg.mxu0
  %s858 = scalar_lea.vmem %s7, 32
  %v859 = vld [vmem:[%s858] sm:$0xf]
  %v860 = vld [vmem:[%s858 + $0x4] sm:$0xf]
  %v861 = vld [vmem:[%s858 + $0x8] sm:$0xf]
  %v862 = vld [vmem:[%s858 + $0xc] sm:$0xf]
  %v863 = vld [vmem:[%s858 + $0x10] sm:$0xf]
  %v864 = vld [vmem:[%s858 + $0x14] sm:$0xf]
  %v865 = vld [vmem:[%s858 + $0x18] sm:$0xf]
  %v866 = vld [vmem:[%s858 + $0x1c] sm:$0xf]
  %s867 = scalar_lea.vmem %s10, 1
  %v868 = vld [vmem:[%s867] sm:$0x1]
  %v870 = vperm.slane %v868, 0
  %v880 = vunpack.c.l.b16 %v859
  %v881 = vunpack.c.l.b16 %v860
  %v882 = vunpack.c.l.b16 %v861
  %v883 = vunpack.c.l.b16 %v862
  %v884 = vunpack.c.l.b16 %v863
  %v885 = vunpack.c.l.b16 %v864
  %v886 = vunpack.c.l.b16 %v865
  %v887 = vunpack.c.l.b16 %v866
  %v888 = vpack.c.b16 %v881, %v880
  %v889 = vpack.c.b16 %v883, %v882
  %v890 = vpack.c.b16 %v885, %v884
  %v891 = vpack.c.b16 %v887, %v886
  %896 = vmatpush.bf16.msra.mxu0 0
  %897 = vmatpush.bf16.msra.mxu0 0
  %898 = vmatpush.bf16.msra.mxu0 0
  %899 = vmatpush.bf16.msra.mxu0 0
  %900 = vmatpush.bf16.msra.mxu0 %v891
  %901 = vmatpush.bf16.msra.mxu0 %v890
  %902 = vmatpush.bf16.msra.mxu0 %v889
  %903 = vmatpush.bf16.msra.mxu0 %v888
  %904 = vmatmul.bf16.gmra.mxu0 %v689
  %v905 = vpop.f32.mrf.mxu0
  %v906 = vadd.f32 %v870, %v905
  %v907 = vpop.f32.mrf.mxu0
  %v908 = vadd.f32 %v870, %v907
  %909 = vdwg.mxu0
  %s910 = scalar_lea.vmem %s8, 32
  %v911 = vld [vmem:[%s910] sm:$0xf]
  %v912 = vld [vmem:[%s910 + $0x4] sm:$0xf]
  %v913 = vld [vmem:[%s910 + $0x8] sm:$0xf]
  %v914 = vld [vmem:[%s910 + $0xc] sm:$0xf]
  %v915 = vld [vmem:[%s910 + $0x10] sm:$0xf]
  %v916 = vld [vmem:[%s910 + $0x14] sm:$0xf]
  %v917 = vld [vmem:[%s910 + $0x18] sm:$0xf]
  %v918 = vld [vmem:[%s910 + $0x1c] sm:$0xf]
  %s919 = scalar_lea.vmem %s11, 1
  %v920 = vld [vmem:[%s919] sm:$0x1]
  %v922 = vperm.slane %v920, 0
  %v932 = vunpack.c.l.b16 %v911
  %v933 = vunpack.c.l.b16 %v912
  %v934 = vunpack.c.l.b16 %v913
  %v935 = vunpack.c.l.b16 %v914
  %v936 = vunpack.c.l.b16 %v915
  %v937 = vunpack.c.l.b16 %v916
  %v938 = vunpack.c.l.b16 %v917
  %v939 = vunpack.c.l.b16 %v918
  %v940 = vpack.c.b16 %v933, %v932
  %v941 = vpack.c.b16 %v935, %v934
  %v942 = vpack.c.b16 %v937, %v936
  %v943 = vpack.c.b16 %v939, %v938
  %948 = vmatpush.bf16.msra.mxu0 0
  %949 = vmatpush.bf16.msra.mxu0 0
  %950 = vmatpush.bf16.msra.mxu0 0
  %951 = vmatpush.bf16.msra.mxu0 0
  %952 = vmatpush.bf16.msra.mxu0 %v943
  %953 = vmatpush.bf16.msra.mxu0 %v942
  %954 = vmatpush.bf16.msra.mxu0 %v941
  %955 = vmatpush.bf16.msra.mxu0 %v940
  %956 = vmatmul.bf16.gmra.mxu0 %v689
  %v957 = vpop.f32.mrf.mxu0
  %v958 = vadd.f32 %v922, %v957
  %v959 = vpop.f32.mrf.mxu0
  %v960 = vadd.f32 %v922, %v959
  %961 = vdwg.mxu0
  %v962 = vpack.c.bf16 %v960, %v958
  %s963 = scalar_lea.vmem %s6, 64
  %v964 = vld [vmem:[%s963] sm:$0xf]
  %v965 = vld [vmem:[%s963 + $0x4] sm:$0xf]
  %v966 = vld [vmem:[%s963 + $0x8] sm:$0xf]
  %v967 = vld [vmem:[%s963 + $0xc] sm:$0xf]
  %v968 = vld [vmem:[%s963 + $0x10] sm:$0xf]
  %v969 = vld [vmem:[%s963 + $0x14] sm:$0xf]
  %v970 = vld [vmem:[%s963 + $0x18] sm:$0xf]
  %v971 = vld [vmem:[%s963 + $0x1c] sm:$0xf]
  %s972 = scalar_lea.vmem %s9, 2
  %v973 = vld [vmem:[%s972] sm:$0x1]
  %v975 = vperm.slane %v973, 0
  %v985 = vunpack.c.l.b16 %v964
  %v986 = vunpack.c.l.b16 %v965
  %v987 = vunpack.c.l.b16 %v966
  %v988 = vunpack.c.l.b16 %v967
  %v989 = vunpack.c.l.b16 %v968
  %v990 = vunpack.c.l.b16 %v969
  %v991 = vunpack.c.l.b16 %v970
  %v992 = vunpack.c.l.b16 %v971
  %v993 = vpack.c.b16 %v986, %v985
  %v994 = vpack.c.b16 %v988, %v987
  %v995 = vpack.c.b16 %v990, %v989
  %v996 = vpack.c.b16 %v992, %v991
  %1001 = vmatpush.bf16.msra.mxu0 0
  %1002 = vmatpush.bf16.msra.mxu0 0
  %1003 = vmatpush.bf16.msra.mxu0 0
  %1004 = vmatpush.bf16.msra.mxu0 0
  %1005 = vmatpush.bf16.msra.mxu0 %v996
  %1006 = vmatpush.bf16.msra.mxu0 %v995
  %1007 = vmatpush.bf16.msra.mxu0 %v994
  %1008 = vmatpush.bf16.msra.mxu0 %v993
  %1009 = vmatmul.bf16.gmra.mxu0 %v689
  %v1010 = vpop.f32.mrf.mxu0
  %v1011 = vadd.f32 %v975, %v1010
  %v1012 = vpop.f32.mrf.mxu0
  %v1013 = vadd.f32 %v975, %v1012
  %1014 = vdwg.mxu0
  %s1015 = scalar_lea.vmem %s7, 64
  %v1016 = vld [vmem:[%s1015] sm:$0xf]
  %v1017 = vld [vmem:[%s1015 + $0x4] sm:$0xf]
  %v1018 = vld [vmem:[%s1015 + $0x8] sm:$0xf]
  %v1019 = vld [vmem:[%s1015 + $0xc] sm:$0xf]
  %v1020 = vld [vmem:[%s1015 + $0x10] sm:$0xf]
  %v1021 = vld [vmem:[%s1015 + $0x14] sm:$0xf]
  %v1022 = vld [vmem:[%s1015 + $0x18] sm:$0xf]
  %v1023 = vld [vmem:[%s1015 + $0x1c] sm:$0xf]
  %s1024 = scalar_lea.vmem %s10, 2
  %v1025 = vld [vmem:[%s1024] sm:$0x1]
  %v1027 = vperm.slane %v1025, 0
  %v1037 = vunpack.c.l.b16 %v1016
  %v1038 = vunpack.c.l.b16 %v1017
  %v1039 = vunpack.c.l.b16 %v1018
  %v1040 = vunpack.c.l.b16 %v1019
  %v1041 = vunpack.c.l.b16 %v1020
  %v1042 = vunpack.c.l.b16 %v1021
  %v1043 = vunpack.c.l.b16 %v1022
  %v1044 = vunpack.c.l.b16 %v1023
  %v1045 = vpack.c.b16 %v1038, %v1037
  %v1046 = vpack.c.b16 %v1040, %v1039
  %v1047 = vpack.c.b16 %v1042, %v1041
  %v1048 = vpack.c.b16 %v1044, %v1043
  %1053 = vmatpush.bf16.msra.mxu0 0
  %1054 = vmatpush.bf16.msra.mxu0 0
  %1055 = vmatpush.bf16.msra.mxu0 0
  %1056 = vmatpush.bf16.msra.mxu0 0
  %1057 = vmatpush.bf16.msra.mxu0 %v1048
  %1058 = vmatpush.bf16.msra.mxu0 %v1047
  %1059 = vmatpush.bf16.msra.mxu0 %v1046
  %1060 = vmatpush.bf16.msra.mxu0 %v1045
  %1061 = vmatmul.bf16.gmra.mxu0 %v689
  %v1062 = vpop.f32.mrf.mxu0
  %v1063 = vadd.f32 %v1027, %v1062
  %v1064 = vpop.f32.mrf.mxu0
  %v1065 = vadd.f32 %v1027, %v1064
  %1066 = vdwg.mxu0
  %s1067 = scalar_lea.vmem %s8, 64
  %v1068 = vld [vmem:[%s1067] sm:$0xf]
  %v1069 = vld [vmem:[%s1067 + $0x4] sm:$0xf]
  %v1070 = vld [vmem:[%s1067 + $0x8] sm:$0xf]
  %v1071 = vld [vmem:[%s1067 + $0xc] sm:$0xf]
  %v1072 = vld [vmem:[%s1067 + $0x10] sm:$0xf]
  %v1073 = vld [vmem:[%s1067 + $0x14] sm:$0xf]
  %v1074 = vld [vmem:[%s1067 + $0x18] sm:$0xf]
  %v1075 = vld [vmem:[%s1067 + $0x1c] sm:$0xf]
  %s1076 = scalar_lea.vmem %s11, 2
  %v1077 = vld [vmem:[%s1076] sm:$0x1]
  %v1079 = vperm.slane %v1077, 0
  %v1089 = vunpack.c.l.b16 %v1068
  %v1090 = vunpack.c.l.b16 %v1069
  %v1091 = vunpack.c.l.b16 %v1070
  %v1092 = vunpack.c.l.b16 %v1071
  %v1093 = vunpack.c.l.b16 %v1072
  %v1094 = vunpack.c.l.b16 %v1073
  %v1095 = vunpack.c.l.b16 %v1074
  %v1096 = vunpack.c.l.b16 %v1075
  %v1097 = vpack.c.b16 %v1090, %v1089
  %v1098 = vpack.c.b16 %v1092, %v1091
  %v1099 = vpack.c.b16 %v1094, %v1093
  %v1100 = vpack.c.b16 %v1096, %v1095
  %1105 = vmatpush.bf16.msra.mxu0 0
  %1106 = vmatpush.bf16.msra.mxu0 0
  %1107 = vmatpush.bf16.msra.mxu0 0
  %1108 = vmatpush.bf16.msra.mxu0 0
  %1109 = vmatpush.bf16.msra.mxu0 %v1100
  %1110 = vmatpush.bf16.msra.mxu0 %v1099
  %1111 = vmatpush.bf16.msra.mxu0 %v1098
  %1112 = vmatpush.bf16.msra.mxu0 %v1097
  %1113 = vmatmul.bf16.gmra.mxu0 %v689
  %v1114 = vpop.f32.mrf.mxu0
  %v1115 = vadd.f32 %v1079, %v1114
  %v1116 = vpop.f32.mrf.mxu0
  %v1117 = vadd.f32 %v1079, %v1116
  %1118 = vdwg.mxu0
  %v1119 = vpack.c.bf16 %v1117, %v1115
  %s1120 = scalar_lea.vmem %s6, 96
  %v1121 = vld [vmem:[%s1120] sm:$0xf]
  %v1122 = vld [vmem:[%s1120 + $0x4] sm:$0xf]
  %v1123 = vld [vmem:[%s1120 + $0x8] sm:$0xf]
  %v1124 = vld [vmem:[%s1120 + $0xc] sm:$0xf]
  %v1125 = vld [vmem:[%s1120 + $0x10] sm:$0xf]
  %v1126 = vld [vmem:[%s1120 + $0x14] sm:$0xf]
  %v1127 = vld [vmem:[%s1120 + $0x18] sm:$0xf]
  %v1128 = vld [vmem:[%s1120 + $0x1c] sm:$0xf]
  %s1129 = scalar_lea.vmem %s9, 3
  %v1130 = vld [vmem:[%s1129] sm:$0x1]
  %v1132 = vperm.slane %v1130, 0
  %v1142 = vunpack.c.l.b16 %v1121
  %v1143 = vunpack.c.l.b16 %v1122
  %v1144 = vunpack.c.l.b16 %v1123
  %v1145 = vunpack.c.l.b16 %v1124
  %v1146 = vunpack.c.l.b16 %v1125
  %v1147 = vunpack.c.l.b16 %v1126
  %v1148 = vunpack.c.l.b16 %v1127
  %v1149 = vunpack.c.l.b16 %v1128
  %v1150 = vpack.c.b16 %v1143, %v1142
  %v1151 = vpack.c.b16 %v1145, %v1144
  %v1152 = vpack.c.b16 %v1147, %v1146
  %v1153 = vpack.c.b16 %v1149, %v1148
  %1158 = vmatpush.bf16.msra.mxu0 0
  %1159 = vmatpush.bf16.msra.mxu0 0
  %1160 = vmatpush.bf16.msra.mxu0 0
  %1161 = vmatpush.bf16.msra.mxu0 0
  %1162 = vmatpush.bf16.msra.mxu0 %v1153
  %1163 = vmatpush.bf16.msra.mxu0 %v1152
  %1164 = vmatpush.bf16.msra.mxu0 %v1151
  %1165 = vmatpush.bf16.msra.mxu0 %v1150
  %1166 = vmatmul.bf16.gmra.mxu0 %v689
  %v1167 = vpop.f32.mrf.mxu0
  %v1168 = vadd.f32 %v1132, %v1167
  %v1169 = vpop.f32.mrf.mxu0
  %v1170 = vadd.f32 %v1132, %v1169
  %1171 = vdwg.mxu0
  %s1172 = scalar_lea.vmem %s7, 96
  %v1173 = vld [vmem:[%s1172] sm:$0xf]
  %v1174 = vld [vmem:[%s1172 + $0x4] sm:$0xf]
  %v1175 = vld [vmem:[%s1172 + $0x8] sm:$0xf]
  %v1176 = vld [vmem:[%s1172 + $0xc] sm:$0xf]
  %v1177 = vld [vmem:[%s1172 + $0x10] sm:$0xf]
  %v1178 = vld [vmem:[%s1172 + $0x14] sm:$0xf]
  %v1179 = vld [vmem:[%s1172 + $0x18] sm:$0xf]
  %v1180 = vld [vmem:[%s1172 + $0x1c] sm:$0xf]
  %s1181 = scalar_lea.vmem %s10, 3
  %v1182 = vld [vmem:[%s1181] sm:$0x1]
  %v1184 = vperm.slane %v1182, 0
  %v1194 = vunpack.c.l.b16 %v1173
  %v1195 = vunpack.c.l.b16 %v1174
  %v1196 = vunpack.c.l.b16 %v1175
  %v1197 = vunpack.c.l.b16 %v1176
  %v1198 = vunpack.c.l.b16 %v1177
  %v1199 = vunpack.c.l.b16 %v1178
  %v1200 = vunpack.c.l.b16 %v1179
  %v1201 = vunpack.c.l.b16 %v1180
  %v1202 = vpack.c.b16 %v1195, %v1194
  %v1203 = vpack.c.b16 %v1197, %v1196
  %v1204 = vpack.c.b16 %v1199, %v1198
  %v1205 = vpack.c.b16 %v1201, %v1200
  %1210 = vmatpush.bf16.msra.mxu0 0
  %1211 = vmatpush.bf16.msra.mxu0 0
  %1212 = vmatpush.bf16.msra.mxu0 0
  %1213 = vmatpush.bf16.msra.mxu0 0
  %1214 = vmatpush.bf16.msra.mxu0 %v1205
  %1215 = vmatpush.bf16.msra.mxu0 %v1204
  %1216 = vmatpush.bf16.msra.mxu0 %v1203
  %1217 = vmatpush.bf16.msra.mxu0 %v1202
  %1218 = vmatmul.bf16.gmra.mxu0 %v689
  %v1219 = vpop.f32.mrf.mxu0
  %v1220 = vadd.f32 %v1184, %v1219
  %v1221 = vpop.f32.mrf.mxu0
  %v1222 = vadd.f32 %v1184, %v1221
  %1223 = vdwg.mxu0
  %s1224 = scalar_lea.vmem %s8, 96
  %v1225 = vld [vmem:[%s1224] sm:$0xf]
  %v1226 = vld [vmem:[%s1224 + $0x4] sm:$0xf]
  %v1227 = vld [vmem:[%s1224 + $0x8] sm:$0xf]
  %v1228 = vld [vmem:[%s1224 + $0xc] sm:$0xf]
  %v1229 = vld [vmem:[%s1224 + $0x10] sm:$0xf]
  %v1230 = vld [vmem:[%s1224 + $0x14] sm:$0xf]
  %v1231 = vld [vmem:[%s1224 + $0x18] sm:$0xf]
  %v1232 = vld [vmem:[%s1224 + $0x1c] sm:$0xf]
  %s1233 = scalar_lea.vmem %s11, 3
  %v1234 = vld [vmem:[%s1233] sm:$0x1]
  %v1236 = vperm.slane %v1234, 0
  %v1246 = vunpack.c.l.b16 %v1225
  %v1247 = vunpack.c.l.b16 %v1226
  %v1248 = vunpack.c.l.b16 %v1227
  %v1249 = vunpack.c.l.b16 %v1228
  %v1250 = vunpack.c.l.b16 %v1229
  %v1251 = vunpack.c.l.b16 %v1230
  %v1252 = vunpack.c.l.b16 %v1231
  %v1253 = vunpack.c.l.b16 %v1232
  %v1254 = vpack.c.b16 %v1247, %v1246
  %v1255 = vpack.c.b16 %v1249, %v1248
  %v1256 = vpack.c.b16 %v1251, %v1250
  %v1257 = vpack.c.b16 %v1253, %v1252
  %1262 = vmatpush.bf16.msra.mxu0 0
  %1263 = vmatpush.bf16.msra.mxu0 0
  %1264 = vmatpush.bf16.msra.mxu0 0
  %1265 = vmatpush.bf16.msra.mxu0 0
  %1266 = vmatpush.bf16.msra.mxu0 %v1257
  %1267 = vmatpush.bf16.msra.mxu0 %v1256
  %1268 = vmatpush.bf16.msra.mxu0 %v1255
  %1269 = vmatpush.bf16.msra.mxu0 %v1254
  %1270 = vmatmul.bf16.gmra.mxu0 %v689
  %v1271 = vpop.f32.mrf.mxu0
  %v1272 = vadd.f32 %v1236, %v1271
  %v1273 = vpop.f32.mrf.mxu0
  %v1274 = vadd.f32 %v1236, %v1273
  %1275 = vdwg.mxu0
  %v1276 = vpack.c.bf16 %v1274, %v1272
  %v1277 = vpack.c.bf16 %v703, %v701
  %v1278 = vpack.c.bf16 %v753, %v751
  %vm1279 = vcmask 130048
  %v1281 = vsel %vm1279, %v1277, 0
  %v1284 = vsel %vm1279, %v1278, 0
  %1286 = vmatpush.bf16.xpose.msra.mxu0 0
  %1287 = vmatpush.bf16.xpose.msra.mxu0 0
  %1288 = vmatpush.bf16.xpose.msra.mxu0 0
  %1289 = vmatpush.bf16.xpose.msra.mxu0 0
  %1290 = vmatpush.bf16.xpose.msra.mxu0 0
  %1291 = vmatpush.bf16.xpose.msra.mxu0 0
  %1292 = vmatpush.bf16.xpose.msra.mxu0 0
  %1293 = vmatpush.bf16.xpose.msra.mxu0 %v1284
  %1294 = vmatmul.bf16.gmra.mxu0 %v1281
  %v1295 = vpop.f32.mrf.mxu0
  %v1296 = vadd.f32 0.0, %v1295
  %v1297 = vpop.f32.mrf.mxu0
  %v1298 = vadd.f32 0.0, %v1297
  %1299 = vdwg.mxu0
  %v1300 = vmul.f32 %v1296, 0.25
  %v1301 = vmul.f32 %v1298, 0.25
  %v1302 = vadd.f32 %v1300, %v78
  %v1303 = vadd.f32 %v1301, %v79
  %v1304 = vpack.c.bf16 %v856, %v854
  %v1305 = vpack.c.bf16 %v908, %v906
  %v1307 = vsel %vm1279, %v1304, 0
  %v1310 = vsel %vm1279, %v1305, 0
  %1312 = vmatpush.bf16.xpose.msra.mxu0 0
  %1313 = vmatpush.bf16.xpose.msra.mxu0 0
  %1314 = vmatpush.bf16.xpose.msra.mxu0 0
  %1315 = vmatpush.bf16.xpose.msra.mxu0 0
  %1316 = vmatpush.bf16.xpose.msra.mxu0 0
  %1317 = vmatpush.bf16.xpose.msra.mxu0 0
  %1318 = vmatpush.bf16.xpose.msra.mxu0 0
  %1319 = vmatpush.bf16.xpose.msra.mxu0 %v1310
  %1320 = vmatmul.bf16.gmra.mxu0 %v1307
  %v1321 = vpop.f32.mrf.mxu0
  %v1322 = vadd.f32 0.0, %v1321
  %v1323 = vpop.f32.mrf.mxu0
  %v1324 = vadd.f32 0.0, %v1323
  %1325 = vdwg.mxu0
  %v1326 = vmul.f32 %v1322, 0.25
  %v1327 = vmul.f32 %v1324, 0.25
  %v1328 = vadd.f32 %v1326, %v78
  %v1329 = vadd.f32 %v1327, %v79
  %v1330 = vpack.c.bf16 %v1013, %v1011
  %v1331 = vpack.c.bf16 %v1065, %v1063
  %v1333 = vsel %vm1279, %v1330, 0
  %v1336 = vsel %vm1279, %v1331, 0
  %1338 = vmatpush.bf16.xpose.msra.mxu0 0
  %1339 = vmatpush.bf16.xpose.msra.mxu0 0
  %1340 = vmatpush.bf16.xpose.msra.mxu0 0
  %1341 = vmatpush.bf16.xpose.msra.mxu0 0
  %1342 = vmatpush.bf16.xpose.msra.mxu0 0
  %1343 = vmatpush.bf16.xpose.msra.mxu0 0
  %1344 = vmatpush.bf16.xpose.msra.mxu0 0
  %1345 = vmatpush.bf16.xpose.msra.mxu0 %v1336
  %1346 = vmatmul.bf16.gmra.mxu0 %v1333
  %v1347 = vpop.f32.mrf.mxu0
  %v1348 = vadd.f32 0.0, %v1347
  %v1349 = vpop.f32.mrf.mxu0
  %v1350 = vadd.f32 0.0, %v1349
  %1351 = vdwg.mxu0
  %v1352 = vmul.f32 %v1348, 0.25
  %v1353 = vmul.f32 %v1350, 0.25
  %v1354 = vadd.f32 %v1352, %v78
  %v1355 = vadd.f32 %v1353, %v79
  %v1356 = vpack.c.bf16 %v1170, %v1168
  %v1357 = vpack.c.bf16 %v1222, %v1220
  %v1359 = vsel %vm1279, %v1356, 0
  %v1362 = vsel %vm1279, %v1357, 0
  %1364 = vmatpush.bf16.xpose.msra.mxu0 0
  %1365 = vmatpush.bf16.xpose.msra.mxu0 0
  %1366 = vmatpush.bf16.xpose.msra.mxu0 0
  %1367 = vmatpush.bf16.xpose.msra.mxu0 0
  %1368 = vmatpush.bf16.xpose.msra.mxu0 0
  %1369 = vmatpush.bf16.xpose.msra.mxu0 0
  %1370 = vmatpush.bf16.xpose.msra.mxu0 0
  %1371 = vmatpush.bf16.xpose.msra.mxu0 %v1362
  %1372 = vmatmul.bf16.gmra.mxu0 %v1359
  %v1373 = vpop.f32.mrf.mxu0
  %v1374 = vadd.f32 0.0, %v1373
  %v1375 = vpop.f32.mrf.mxu0
  %v1376 = vadd.f32 0.0, %v1375
  %1377 = vdwg.mxu0
  %v1378 = vmul.f32 %v1374, 0.25
  %v1379 = vmul.f32 %v1376, 0.25
  %v1380 = vadd.f32 %v1378, %v78
  %v1381 = vadd.f32 %v1379, %v79
  %vm1382 = vcmask 80896
  %v1383 = vsel %vm1382, %v1302, -inf
  %1384 = vmax.xlane.f32.xlu0 %v1383
  %v1385 = vpop.xlane.xlu0 %1384
  %vm1386 = vcmask 74752
  %v1387 = vsel %vm1386, %v1303, -inf
  %1388 = vmax.xlane.f32.xlu0 %v1387
  %v1389 = vpop.xlane.xlu0 %1388
  %v1390 = vsub.f32 %v1302, %v1385
  %v1391 = vsub.f32 %v1303, %v1389
  %v1392 = vmul.f32 %v1390, 1.442695
  %v1393 = vpow.pop %v1392
  %v1394 = vmul.f32 %v1391, 1.442695
  %v1395 = vpow.pop %v1394
  %v1396 = vsel %vm1382, %v1393, 0.0
  %1397 = vadd.xlane.f32.xlu0 %v1396
  %v1398 = vpop.xlane.xlu0 %1397
  %v1399 = vsel %vm1386, %v1395, 0.0
  %1400 = vadd.xlane.f32.xlu0 %v1399
  %v1401 = vpop.xlane.xlu0 %1400
  %v1402 = vrcp.pop %v1398
  %v1403 = vmul.f32 %v1398, %v1402
  %v1404 = vsub.f32 1.0, %v1403
  %v1405 = vmul.f32 %v1402, %v1404
  %v1406 = vadd.f32 %v1402, %v1405
  %vm1407 = vweird.f32 %v1398
  %vm1408 = vweird.f32 %v1402
  %vm1409 = vmor %vm1407, %vm1408
  %v1410 = vsel %vm1409, %v1402, %v1406
  %v1411 = vand.u32 2147483647, %v1398
  %vm1412 = vcmp.eq.f32.partialorder %v1411, 8.507059e+37
  %v1413 = vand.u32 %v1398, 2147483648
  %v1414 = vor.u32 1.1754944e-38, %v1413
  %v1415 = vsel %vm1412, %v1414, %v1410
  %v1416 = vrcp.pop %v1401
  %v1417 = vmul.f32 %v1401, %v1416
  %v1418 = vsub.f32 1.0, %v1417
  %v1419 = vmul.f32 %v1416, %v1418
  %v1420 = vadd.f32 %v1416, %v1419
  %vm1421 = vweird.f32 %v1401
  %vm1422 = vweird.f32 %v1416
  %vm1423 = vmor %vm1421, %vm1422
  %v1424 = vsel %vm1423, %v1416, %v1420
  %v1425 = vand.u32 2147483647, %v1401
  %vm1426 = vcmp.eq.f32.partialorder %v1425, 8.507059e+37
  %v1427 = vand.u32 %v1401, 2147483648
  %v1428 = vor.u32 1.1754944e-38, %v1427
  %v1429 = vsel %vm1426, %v1428, %v1424
  %v1430 = vmul.f32 %v1393, %v1415
  %v1431 = vmul.f32 %v1395, %v1429
  %v1432 = vpack.c.bf16 %v1431, %v1430
  %v1433 = vsel %vm1382, %v1328, -inf
  %1434 = vmax.xlane.f32.xlu0 %v1433
  %v1435 = vpop.xlane.xlu0 %1434
  %v1436 = vsel %vm1386, %v1329, -inf
  %1437 = vmax.xlane.f32.xlu0 %v1436
  %v1438 = vpop.xlane.xlu0 %1437
  %v1439 = vsub.f32 %v1328, %v1435
  %v1440 = vsub.f32 %v1329, %v1438
  %v1441 = vmul.f32 %v1439, 1.442695
  %v1442 = vpow.pop %v1441
  %v1443 = vmul.f32 %v1440, 1.442695
  %v1444 = vpow.pop %v1443
  %v1445 = vsel %vm1382, %v1442, 0.0
  %1446 = vadd.xlane.f32.xlu0 %v1445
  %v1447 = vpop.xlane.xlu0 %1446
  %v1448 = vsel %vm1386, %v1444, 0.0
  %1449 = vadd.xlane.f32.xlu0 %v1448
  %v1450 = vpop.xlane.xlu0 %1449
  %v1451 = vrcp.pop %v1447
  %v1452 = vmul.f32 %v1447, %v1451
  %v1453 = vsub.f32 1.0, %v1452
  %v1454 = vmul.f32 %v1451, %v1453
  %v1455 = vadd.f32 %v1451, %v1454
  %vm1456 = vweird.f32 %v1447
  %vm1457 = vweird.f32 %v1451
  %vm1458 = vmor %vm1456, %vm1457
  %v1459 = vsel %vm1458, %v1451, %v1455
  %v1460 = vand.u32 2147483647, %v1447
  %vm1461 = vcmp.eq.f32.partialorder %v1460, 8.507059e+37
  %v1462 = vand.u32 %v1447, 2147483648
  %v1463 = vor.u32 1.1754944e-38, %v1462
  %v1464 = vsel %vm1461, %v1463, %v1459
  %v1465 = vrcp.pop %v1450
  %v1466 = vmul.f32 %v1450, %v1465
  %v1467 = vsub.f32 1.0, %v1466
  %v1468 = vmul.f32 %v1465, %v1467
  %v1469 = vadd.f32 %v1465, %v1468
  %vm1470 = vweird.f32 %v1450
  %vm1471 = vweird.f32 %v1465
  %vm1472 = vmor %vm1470, %vm1471
  %v1473 = vsel %vm1472, %v1465, %v1469
  %v1474 = vand.u32 2147483647, %v1450
  %vm1475 = vcmp.eq.f32.partialorder %v1474, 8.507059e+37
  %v1476 = vand.u32 %v1450, 2147483648
  %v1477 = vor.u32 1.1754944e-38, %v1476
  %v1478 = vsel %vm1475, %v1477, %v1473
  %v1479 = vmul.f32 %v1442, %v1464
  %v1480 = vmul.f32 %v1444, %v1478
  %v1481 = vpack.c.bf16 %v1480, %v1479
  %v1482 = vsel %vm1382, %v1354, -inf
  %1483 = vmax.xlane.f32.xlu0 %v1482
  %v1484 = vpop.xlane.xlu0 %1483
  %v1485 = vsel %vm1386, %v1355, -inf
  %1486 = vmax.xlane.f32.xlu0 %v1485
  %v1487 = vpop.xlane.xlu0 %1486
  %v1488 = vsub.f32 %v1354, %v1484
  %v1489 = vsub.f32 %v1355, %v1487
  %v1490 = vmul.f32 %v1488, 1.442695
  %v1491 = vpow.pop %v1490
  %v1492 = vmul.f32 %v1489, 1.442695
  %v1493 = vpow.pop %v1492
  %v1494 = vsel %vm1382, %v1491, 0.0
  %1495 = vadd.xlane.f32.xlu0 %v1494
  %v1496 = vpop.xlane.xlu0 %1495
  %v1497 = vsel %vm1386, %v1493, 0.0
  %1498 = vadd.xlane.f32.xlu0 %v1497
  %v1499 = vpop.xlane.xlu0 %1498
  %v1500 = vrcp.pop %v1496
  %v1501 = vmul.f32 %v1496, %v1500
  %v1502 = vsub.f32 1.0, %v1501
  %v1503 = vmul.f32 %v1500, %v1502
  %v1504 = vadd.f32 %v1500, %v1503
  %vm1505 = vweird.f32 %v1496
  %vm1506 = vweird.f32 %v1500
  %vm1507 = vmor %vm1505, %vm1506
  %v1508 = vsel %vm1507, %v1500, %v1504
  %v1509 = vand.u32 2147483647, %v1496
  %vm1510 = vcmp.eq.f32.partialorder %v1509, 8.507059e+37
  %v1511 = vand.u32 %v1496, 2147483648
  %v1512 = vor.u32 1.1754944e-38, %v1511
  %v1513 = vsel %vm1510, %v1512, %v1508
  %v1514 = vrcp.pop %v1499
  %v1515 = vmul.f32 %v1499, %v1514
  %v1516 = vsub.f32 1.0, %v1515
  %v1517 = vmul.f32 %v1514, %v1516
  %v1518 = vadd.f32 %v1514, %v1517
  %vm1519 = vweird.f32 %v1499
  %vm1520 = vweird.f32 %v1514
  %vm1521 = vmor %vm1519, %vm1520
  %v1522 = vsel %vm1521, %v1514, %v1518
  %v1523 = vand.u32 2147483647, %v1499
  %vm1524 = vcmp.eq.f32.partialorder %v1523, 8.507059e+37
  %v1525 = vand.u32 %v1499, 2147483648
  %v1526 = vor.u32 1.1754944e-38, %v1525
  %v1527 = vsel %vm1524, %v1526, %v1522
  %v1528 = vmul.f32 %v1491, %v1513
  %v1529 = vmul.f32 %v1493, %v1527
  %v1530 = vpack.c.bf16 %v1529, %v1528
  %v1531 = vsel %vm1382, %v1380, -inf
  %1532 = vmax.xlane.f32.xlu0 %v1531
  %v1533 = vpop.xlane.xlu0 %1532
  %v1534 = vsel %vm1386, %v1381, -inf
  %1535 = vmax.xlane.f32.xlu0 %v1534
  %v1536 = vpop.xlane.xlu0 %1535
  %v1537 = vsub.f32 %v1380, %v1533
  %v1538 = vsub.f32 %v1381, %v1536
  %v1539 = vmul.f32 %v1537, 1.442695
  %v1540 = vpow.pop %v1539
  %v1541 = vmul.f32 %v1538, 1.442695
  %v1542 = vpow.pop %v1541
  %v1543 = vsel %vm1382, %v1540, 0.0
  %1544 = vadd.xlane.f32.xlu0 %v1543
  %v1545 = vpop.xlane.xlu0 %1544
  %v1546 = vsel %vm1386, %v1542, 0.0
  %1547 = vadd.xlane.f32.xlu0 %v1546
  %v1548 = vpop.xlane.xlu0 %1547
  %v1549 = vrcp.pop %v1545
  %v1550 = vmul.f32 %v1545, %v1549
  %v1551 = vsub.f32 1.0, %v1550
  %v1552 = vmul.f32 %v1549, %v1551
  %v1553 = vadd.f32 %v1549, %v1552
  %vm1554 = vweird.f32 %v1545
  %vm1555 = vweird.f32 %v1549
  %vm1556 = vmor %vm1554, %vm1555
  %v1557 = vsel %vm1556, %v1549, %v1553
  %v1558 = vand.u32 2147483647, %v1545
  %vm1559 = vcmp.eq.f32.partialorder %v1558, 8.507059e+37
  %v1560 = vand.u32 %v1545, 2147483648
  %v1561 = vor.u32 1.1754944e-38, %v1560
  %v1562 = vsel %vm1559, %v1561, %v1557
  %v1563 = vrcp.pop %v1548
  %v1564 = vmul.f32 %v1548, %v1563
  %v1565 = vsub.f32 1.0, %v1564
  %v1566 = vmul.f32 %v1563, %v1565
  %v1567 = vadd.f32 %v1563, %v1566
  %vm1568 = vweird.f32 %v1548
  %vm1569 = vweird.f32 %v1563
  %vm1570 = vmor %vm1568, %vm1569
  %v1571 = vsel %vm1570, %v1563, %v1567
  %v1572 = vand.u32 2147483647, %v1548
  %vm1573 = vcmp.eq.f32.partialorder %v1572, 8.507059e+37
  %v1574 = vand.u32 %v1548, 2147483648
  %v1575 = vor.u32 1.1754944e-38, %v1574
  %v1576 = vsel %vm1573, %v1575, %v1571
  %v1577 = vmul.f32 %v1540, %v1562
  %v1578 = vmul.f32 %v1542, %v1576
  %v1579 = vpack.c.bf16 %v1578, %v1577
  %v1581 = vsel %vm1382, %v1432, 0
  %vm1583 = vcmask 1044480
  %v1585 = vsel %vm1583, %v805, 0
  %1587 = vmatpush.bf16.msra.mxu0 0
  %1588 = vmatpush.bf16.msra.mxu0 0
  %1589 = vmatpush.bf16.msra.mxu0 0
  %1590 = vmatpush.bf16.msra.mxu0 0
  %1591 = vmatpush.bf16.msra.mxu0 0
  %1592 = vmatpush.bf16.msra.mxu0 0
  %1593 = vmatpush.bf16.msra.mxu0 0
  %1594 = vmatpush.bf16.msra.mxu0 %v1585
  %1595 = vmatmul.bf16.gmra.mxu0 %v1581
  %v1596 = vpop.f32.mrf.mxu0
  %v1597 = vadd.f32 0.0, %v1596
  %v1598 = vpop.f32.mrf.mxu0
  %v1599 = vadd.f32 0.0, %v1598
  %1600 = vdwg.mxu0
  %v1601 = vpack.c.bf16 %v1599, %v1597
  %v1603 = vsel %vm1382, %v1481, 0
  %v1606 = vsel %vm1583, %v962, 0
  %1608 = vmatpush.bf16.msra.mxu0 0
  %1609 = vmatpush.bf16.msra.mxu0 0
  %1610 = vmatpush.bf16.msra.mxu0 0
  %1611 = vmatpush.bf16.msra.mxu0 0
  %1612 = vmatpush.bf16.msra.mxu0 0
  %1613 = vmatpush.bf16.msra.mxu0 0
  %1614 = vmatpush.bf16.msra.mxu0 0
  %1615 = vmatpush.bf16.msra.mxu0 %v1606
  %1616 = vmatmul.bf16.gmra.mxu0 %v1603
  %v1617 = vpop.f32.mrf.mxu0
  %v1618 = vadd.f32 0.0, %v1617
  %v1619 = vpop.f32.mrf.mxu0
  %v1620 = vadd.f32 0.0, %v1619
  %1621 = vdwg.mxu0
  %v1622 = vpack.c.bf16 %v1620, %v1618
  %v1624 = vsel %vm1382, %v1530, 0
  %v1627 = vsel %vm1583, %v1119, 0
  %1629 = vmatpush.bf16.msra.mxu0 0
  %1630 = vmatpush.bf16.msra.mxu0 0
  %1631 = vmatpush.bf16.msra.mxu0 0
  %1632 = vmatpush.bf16.msra.mxu0 0
  %1633 = vmatpush.bf16.msra.mxu0 0
  %1634 = vmatpush.bf16.msra.mxu0 0
  %1635 = vmatpush.bf16.msra.mxu0 0
  %1636 = vmatpush.bf16.msra.mxu0 %v1627
  %1637 = vmatmul.bf16.gmra.mxu0 %v1624
  %v1638 = vpop.f32.mrf.mxu0
  %v1639 = vadd.f32 0.0, %v1638
  %v1640 = vpop.f32.mrf.mxu0
  %v1641 = vadd.f32 0.0, %v1640
  %1642 = vdwg.mxu0
  %v1643 = vpack.c.bf16 %v1641, %v1639
  %v1645 = vsel %vm1382, %v1579, 0
  %v1648 = vsel %vm1583, %v1276, 0
  %1650 = vmatpush.bf16.msra.mxu0 0
  %1651 = vmatpush.bf16.msra.mxu0 0
  %1652 = vmatpush.bf16.msra.mxu0 0
  %1653 = vmatpush.bf16.msra.mxu0 0
  %1654 = vmatpush.bf16.msra.mxu0 0
  %1655 = vmatpush.bf16.msra.mxu0 0
  %1656 = vmatpush.bf16.msra.mxu0 0
  %1657 = vmatpush.bf16.msra.mxu0 %v1648
  %1658 = vmatmul.bf16.gmra.mxu0 %v1645
  %v1659 = vpop.f32.mrf.mxu0
  %v1660 = vadd.f32 0.0, %v1659
  %v1661 = vpop.f32.mrf.mxu0
  %v1662 = vadd.f32 0.0, %v1661
  %1663 = vdwg.mxu0
  %v1664 = vpack.c.bf16 %v1662, %v1660
  %v1665 = vld [vmem:[%s13] sm:$0x1]
  %v1666 = vld [vmem:[%s12] sm:$0xf]
  %v1667 = vld [vmem:[%s12 + $0x4] sm:$0xf]
  %v1670 = vunpack.c.l.b16 %v1666
  %v1671 = vunpack.c.l.b16 %v1667
  %v1672 = vpack.c.b16 %v1671, %v1670
  %v1675 = vsel %vm1279, %v1601, 0
  %1677 = vmatpush.bf16.msra.mxu0 0
  %1678 = vmatpush.bf16.msra.mxu0 0
  %1679 = vmatpush.bf16.msra.mxu0 0
  %1680 = vmatpush.bf16.msra.mxu0 0
  %1681 = vmatpush.bf16.msra.mxu0 0
  %1682 = vmatpush.bf16.msra.mxu0 0
  %1683 = vmatpush.bf16.msra.mxu0 0
  %1684 = vmatpush.bf16.msra.mxu0 %v1672
  %1685 = vmatmul.bf16.gmra.mxu0 %v1675
  %v1686 = vpop.f32.mrf.mxu0
  %v1687 = vadd.f32 0.0, %v1686
  %v1688 = vpop.f32.mrf.mxu0
  %v1689 = vadd.f32 0.0, %v1688
  %1690 = vdwg.mxu0
  %v1692 = vperm.slane %v1665, 0
  %v1694 = vadd.f32 %v1692, %v1687
  %v1695 = vadd.f32 %v1692, %v1689
  %s1696 = scalar_lea.vmem %s12, 8
  %v1697 = vld [vmem:[%s1696] sm:$0xf]
  %v1698 = vld [vmem:[%s1696 + $0x4] sm:$0xf]
  %v1701 = vunpack.c.l.b16 %v1697
  %v1702 = vunpack.c.l.b16 %v1698
  %v1703 = vpack.c.b16 %v1702, %v1701
  %v1706 = vsel %vm1279, %v1622, 0
  %1708 = vmatpush.bf16.msra.mxu0 0
  %1709 = vmatpush.bf16.msra.mxu0 0
  %1710 = vmatpush.bf16.msra.mxu0 0
  %1711 = vmatpush.bf16.msra.mxu0 0
  %1712 = vmatpush.bf16.msra.mxu0 0
  %1713 = vmatpush.bf16.msra.mxu0 0
  %1714 = vmatpush.bf16.msra.mxu0 0
  %1715 = vmatpush.bf16.msra.mxu0 %v1703
  %1716 = vmatmul.bf16.gmra.mxu0 %v1706
  %v1717 = vpop.f32.mrf.mxu0
  %v1718 = vadd.f32 0.0, %v1717
  %v1719 = vpop.f32.mrf.mxu0
  %v1720 = vadd.f32 0.0, %v1719
  %1721 = vdwg.mxu0
  %v1722 = vadd.f32 %v1694, %v1718
  %v1723 = vadd.f32 %v1695, %v1720
  %s1724 = scalar_lea.vmem %s12, 16
  %v1725 = vld [vmem:[%s1724] sm:$0xf]
  %v1726 = vld [vmem:[%s1724 + $0x4] sm:$0xf]
  %v1729 = vunpack.c.l.b16 %v1725
  %v1730 = vunpack.c.l.b16 %v1726
  %v1731 = vpack.c.b16 %v1730, %v1729
  %v1734 = vsel %vm1279, %v1643, 0
  %1736 = vmatpush.bf16.msra.mxu0 0
  %1737 = vmatpush.bf16.msra.mxu0 0
  %1738 = vmatpush.bf16.msra.mxu0 0
  %1739 = vmatpush.bf16.msra.mxu0 0
  %1740 = vmatpush.bf16.msra.mxu0 0
  %1741 = vmatpush.bf16.msra.mxu0 0
  %1742 = vmatpush.bf16.msra.mxu0 0
  %1743 = vmatpush.bf16.msra.mxu0 %v1731
  %1744 = vmatmul.bf16.gmra.mxu0 %v1734
  %v1745 = vpop.f32.mrf.mxu0
  %v1746 = vadd.f32 0.0, %v1745
  %v1747 = vpop.f32.mrf.mxu0
  %v1748 = vadd.f32 0.0, %v1747
  %1749 = vdwg.mxu0
  %v1750 = vadd.f32 %v1722, %v1746
  %v1751 = vadd.f32 %v1723, %v1748
  %s1752 = scalar_lea.vmem %s12, 24
  %v1753 = vld [vmem:[%s1752] sm:$0xf]
  %v1754 = vld [vmem:[%s1752 + $0x4] sm:$0xf]
  %v1757 = vunpack.c.l.b16 %v1753
  %v1758 = vunpack.c.l.b16 %v1754
  %v1759 = vpack.c.b16 %v1758, %v1757
  %v1762 = vsel %vm1279, %v1664, 0
  %1764 = vmatpush.bf16.msra.mxu0 0
  %1765 = vmatpush.bf16.msra.mxu0 0
  %1766 = vmatpush.bf16.msra.mxu0 0
  %1767 = vmatpush.bf16.msra.mxu0 0
  %1768 = vmatpush.bf16.msra.mxu0 0
  %1769 = vmatpush.bf16.msra.mxu0 0
  %1770 = vmatpush.bf16.msra.mxu0 0
  %1771 = vmatpush.bf16.msra.mxu0 %v1759
  %1772 = vmatmul.bf16.gmra.mxu0 %v1762
  %v1773 = vpop.f32.mrf.mxu0
  %v1774 = vadd.f32 0.0, %v1773
  %v1775 = vpop.f32.mrf.mxu0
  %v1776 = vadd.f32 0.0, %v1775
  %1777 = vdwg.mxu0
  %v1778 = vadd.f32 %v1750, %v1774
  %v1779 = vadd.f32 %v1751, %v1776
  %v1780 = vadd.f32 %v582, %v1778
  %v1781 = vadd.f32 %v584, %v1779
  %v1782 = vld [vmem:[%s14] sm:$0x1]
  %v1783 = vld [vmem:[%s15] sm:$0x1]
  %v1784 = vsel %vm588, %v1780, 0.0
  %1785 = vadd.xlane.f32.xlu0 %v1784
  %v1786 = vpop.xlane.xlu0 %1785
  %v1787 = vsel %vm592, %v1781, 0.0
  %1788 = vadd.xlane.f32.xlu0 %v1787
  %v1789 = vpop.xlane.xlu0 %1788
  %v1790 = vmul.f32 %v1786, %v602
  %v1791 = vmul.f32 %v1789, %v602
  %v1792 = vsub.f32 %v1780, %v1790
  %v1793 = vsub.f32 %v1781, %v1791
  %v1794 = vmul.f32 %v1792, %v1792
  %v1795 = vmul.f32 %v1793, %v1793
  %v1796 = vsel %vm588, %v1794, 0.0
  %1797 = vadd.xlane.f32.xlu0 %v1796
  %v1798 = vpop.xlane.xlu0 %1797
  %v1799 = vsel %vm592, %v1795, 0.0
  %1800 = vadd.xlane.f32.xlu0 %v1799
  %v1801 = vpop.xlane.xlu0 %1800
  %v1802 = vmul.f32 %v1798, %v602
  %v1803 = vmul.f32 %v1801, %v602
  %v1804 = vadd.f32 %v1802, 1e-06
  %v1805 = vadd.f32 %v1803, 1e-06
  %v1806 = vrsqrt.pop %v1804
  %v1807 = vmul.f32 %v1806, %v1804
  %v1808 = vmul.f32 %v1807, %v1806
  %v1809 = vmul.f32 0.5, %v1808
  %v1810 = vsub.f32 1.5, %v1809
  %v1811 = vmul.f32 %v1806, %v1810
  %vm1812 = vweird.f32 %v1804
  %vm1813 = vweird.f32 %v1806
  %vm1814 = vmor %vm1812, %vm1813
  %v1815 = vsel %vm1814, %v1806, %v1811
  %v1816 = vrsqrt.pop %v1805
  %v1817 = vmul.f32 %v1816, %v1805
  %v1818 = vmul.f32 %v1817, %v1816
  %v1819 = vmul.f32 0.5, %v1818
  %v1820 = vsub.f32 1.5, %v1819
  %v1821 = vmul.f32 %v1816, %v1820
  %vm1822 = vweird.f32 %v1805
  %vm1823 = vweird.f32 %v1816
  %vm1824 = vmor %vm1822, %vm1823
  %v1825 = vsel %vm1824, %v1816, %v1821
  %v1826 = vmul.f32 %v1792, %v1815
  %v1827 = vmul.f32 %v1793, %v1825
  %v1829 = vperm.slane %v1782, 0
  %v1831 = vmul.f32 %v1826, %v1829
  %v1832 = vmul.f32 %v1827, %v1829
  %v1834 = vperm.slane %v1783, 0
  %v1836 = vadd.f32 %v1831, %v1834
  %v1837 = vadd.f32 %v1832, %v1834
  %v1838 = vld [vmem:[%s16] sm:$0xff]
  %v1839 = vld [vmem:[%s16 + $0x8] sm:$0xff]
  %v1840 = vld [vmem:[%s16 + $0x10] sm:$0xff]
  %v1841 = vld [vmem:[%s16 + $0x18] sm:$0xff]
  %v1842 = vld [vmem:[%s16 + $0x20] sm:$0xff]
  %v1843 = vld [vmem:[%s16 + $0x28] sm:$0xff]
  %v1844 = vld [vmem:[%s16 + $0x30] sm:$0xff]
  %v1845 = vld [vmem:[%s16 + $0x38] sm:$0xff]
  %v1846 = vpack.c.bf16 %v1837, %v1836
  %v1847 = vld [vmem:[%s17] sm:$0x3]
  %v1849 = vperm.slane %v1847, 0
  %v1850 = vperm.slane %v1847, 1
  %v1861 = vunpack.c.l.b16 %v1838
  %v1862 = vunpack.c.h.b16 %v1838
  %v1863 = vunpack.c.l.b16 %v1839
  %v1864 = vunpack.c.h.b16 %v1839
  %v1865 = vunpack.c.l.b16 %v1840
  %v1866 = vunpack.c.h.b16 %v1840
  %v1867 = vunpack.c.l.b16 %v1841
  %v1868 = vunpack.c.h.b16 %v1841
  %v1869 = vunpack.c.l.b16 %v1842
  %v1870 = vunpack.c.h.b16 %v1842
  %v1871 = vunpack.c.l.b16 %v1843
  %v1872 = vunpack.c.h.b16 %v1843
  %v1873 = vunpack.c.l.b16 %v1844
  %v1874 = vunpack.c.h.b16 %v1844
  %v1875 = vunpack.c.l.b16 %v1845
  %v1876 = vunpack.c.h.b16 %v1845
  %v1877 = vpack.c.b16 %v1863, %v1861
  %v1878 = vpack.c.b16 %v1864, %v1862
  %v1879 = vpack.c.b16 %v1867, %v1865
  %v1880 = vpack.c.b16 %v1868, %v1866
  %v1881 = vpack.c.b16 %v1871, %v1869
  %v1882 = vpack.c.b16 %v1872, %v1870
  %v1883 = vpack.c.b16 %v1875, %v1873
  %v1884 = vpack.c.b16 %v1876, %v1874
  %v1894 = vsel %vm588, %v1846, 0
  %1896 = vmatpush.bf16.msra.mxu0 0
  %1897 = vmatpush.bf16.msra.mxu0 0
  %1898 = vmatpush.bf16.msra.mxu0 0
  %1899 = vmatpush.bf16.msra.mxu0 0
  %1900 = vmatpush.bf16.msra.mxu0 %v1883
  %1901 = vmatpush.bf16.msra.mxu0 %v1881
  %1902 = vmatpush.bf16.msra.mxu0 %v1879
  %1903 = vmatpush.bf16.msra.mxu0 %v1877
  %1904 = vmatmul.bf16.gmra.mxu0 %v1894
  %v1905 = vpop.f32.mrf.mxu0
  %v1906 = vadd.f32 %v1849, %v1905
  %v1907 = vpop.f32.mrf.mxu0
  %v1908 = vadd.f32 %v1849, %v1907
  %1909 = vdwg.mxu0
  %1910 = vmatpush.bf16.msra.mxu0 0
  %1911 = vmatpush.bf16.msra.mxu0 0
  %1912 = vmatpush.bf16.msra.mxu0 0
  %1913 = vmatpush.bf16.msra.mxu0 0
  %1914 = vmatpush.bf16.msra.mxu0 %v1884
  %1915 = vmatpush.bf16.msra.mxu0 %v1882
  %1916 = vmatpush.bf16.msra.mxu0 %v1880
  %1917 = vmatpush.bf16.msra.mxu0 %v1878
  %1918 = vmatmul.bf16.gmra.mxu0 %v1894
  %v1919 = vpop.f32.mrf.mxu0
  %v1920 = vadd.f32 %v1850, %v1919
  %v1921 = vpop.f32.mrf.mxu0
  %v1922 = vadd.f32 %v1850, %v1921
  %1923 = vdwg.mxu0
  %v1924 = vmul.f32 %v1906, 0.5
  %v1925 = vmul.f32 %v1920, 0.5
  %v1926 = vmul.f32 %v1908, 0.5
  %v1927 = vmul.f32 %v1922, 0.5
  %v1928 = vmul.f32 %v1906, 0.044715
  %v1929 = vmul.f32 %v1920, 0.044715
  %v1930 = vmul.f32 %v1908, 0.044715
  %v1931 = vmul.f32 %v1922, 0.044715
  %v1932 = vmul.f32 %v1928, %v1906
  %v1933 = vmul.f32 %v1929, %v1920
  %v1934 = vmul.f32 %v1930, %v1908
  %v1935 = vmul.f32 %v1931, %v1922
  %v1936 = vmul.f32 %v1932, %v1906
  %v1937 = vmul.f32 %v1933, %v1920
  %v1938 = vmul.f32 %v1934, %v1908
  %v1939 = vmul.f32 %v1935, %v1922
  %v1940 = vadd.f32 %v1906, %v1936
  %v1941 = vadd.f32 %v1920, %v1937
  %v1942 = vadd.f32 %v1908, %v1938
  %v1943 = vadd.f32 %v1922, %v1939
  %v1944 = vmul.f32 %v1940, 0.7978846
  %v1945 = vmul.f32 %v1941, 0.7978846
  %v1946 = vmul.f32 %v1942, 0.7978846
  %v1947 = vmul.f32 %v1943, 0.7978846
  %v1948 = vtanh.pop %v1944
  %v1949 = vtanh.pop %v1945
  %v1950 = vtanh.pop %v1946
  %v1951 = vtanh.pop %v1947
  %v1952 = vadd.f32 %v1948, 1.0
  %v1953 = vadd.f32 %v1949, 1.0
  %v1954 = vadd.f32 %v1950, 1.0
  %v1955 = vadd.f32 %v1951, 1.0
  %v1956 = vmul.f32 %v1924, %v1952
  %v1957 = vmul.f32 %v1925, %v1953
  %v1958 = vmul.f32 %v1926, %v1954
  %v1959 = vmul.f32 %v1927, %v1955
  %v1960 = vld [vmem:[%s18] sm:$0xf]
  %v1961 = vld [vmem:[%s18 + $0x4] sm:$0xf]
  %v1962 = vld [vmem:[%s18 + $0x8] sm:$0xf]
  %v1963 = vld [vmem:[%s18 + $0xc] sm:$0xf]
  %v1964 = vld [vmem:[%s18 + $0x10] sm:$0xf]
  %v1965 = vld [vmem:[%s18 + $0x14] sm:$0xf]
  %v1966 = vld [vmem:[%s18 + $0x18] sm:$0xf]
  %v1967 = vld [vmem:[%s18 + $0x1c] sm:$0xf]
  %v1968 = vld [vmem:[%s18 + $0x20] sm:$0xf]
  %v1969 = vld [vmem:[%s18 + $0x24] sm:$0xf]
  %v1970 = vld [vmem:[%s18 + $0x28] sm:$0xf]
  %v1971 = vld [vmem:[%s18 + $0x2c] sm:$0xf]
  %v1972 = vld [vmem:[%s18 + $0x30] sm:$0xf]
  %v1973 = vld [vmem:[%s18 + $0x34] sm:$0xf]
  %v1974 = vld [vmem:[%s18 + $0x38] sm:$0xf]
  %v1975 = vld [vmem:[%s18 + $0x3c] sm:$0xf]
  %v1976 = vld [vmem:[%s18 + $0x40] sm:$0xf]
  %v1977 = vld [vmem:[%s18 + $0x44] sm:$0xf]
  %v1978 = vld [vmem:[%s18 + $0x48] sm:$0xf]
  %v1979 = vld [vmem:[%s18 + $0x4c] sm:$0xf]
  %v1980 = vld [vmem:[%s18 + $0x50] sm:$0xf]
  %v1981 = vld [vmem:[%s18 + $0x54] sm:$0xf]
  %v1982 = vld [vmem:[%s18 + $0x58] sm:$0xf]
  %v1983 = vld [vmem:[%s18 + $0x5c] sm:$0xf]
  %v1984 = vld [vmem:[%s18 + $0x60] sm:$0xf]
  %v1985 = vld [vmem:[%s18 + $0x64] sm:$0xf]
  %v1986 = vld [vmem:[%s18 + $0x68] sm:$0xf]
  %v1987 = vld [vmem:[%s18 + $0x6c] sm:$0xf]
  %v1988 = vld [vmem:[%s18 + $0x70] sm:$0xf]
  %v1989 = vld [vmem:[%s18 + $0x74] sm:$0xf]
  %v1990 = vld [vmem:[%s18 + $0x78] sm:$0xf]
  %v1991 = vld [vmem:[%s18 + $0x7c] sm:$0xf]
  %v1992 = vpack.c.bf16 %v1958, %v1956
  %v1993 = vpack.c.bf16 %v1959, %v1957
  %v2026 = vunpack.c.l.b16 %v1960
  %v2027 = vunpack.c.l.b16 %v1961
  %v2028 = vunpack.c.l.b16 %v1962
  %v2029 = vunpack.c.l.b16 %v1963
  %v2030 = vunpack.c.l.b16 %v1964
  %v2031 = vunpack.c.l.b16 %v1965
  %v2032 = vunpack.c.l.b16 %v1966
  %v2033 = vunpack.c.l.b16 %v1967
  %v2034 = vunpack.c.l.b16 %v1968
  %v2035 = vunpack.c.l.b16 %v1969
  %v2036 = vunpack.c.l.b16 %v1970
  %v2037 = vunpack.c.l.b16 %v1971
  %v2038 = vunpack.c.l.b16 %v1972
  %v2039 = vunpack.c.l.b16 %v1973
  %v2040 = vunpack.c.l.b16 %v1974
  %v2041 = vunpack.c.l.b16 %v1975
  %v2042 = vunpack.c.l.b16 %v1976
  %v2043 = vunpack.c.l.b16 %v1977
  %v2044 = vunpack.c.l.b16 %v1978
  %v2045 = vunpack.c.l.b16 %v1979
  %v2046 = vunpack.c.l.b16 %v1980
  %v2047 = vunpack.c.l.b16 %v1981
  %v2048 = vunpack.c.l.b16 %v1982
  %v2049 = vunpack.c.l.b16 %v1983
  %v2050 = vunpack.c.l.b16 %v1984
  %v2051 = vunpack.c.l.b16 %v1985
  %v2052 = vunpack.c.l.b16 %v1986
  %v2053 = vunpack.c.l.b16 %v1987
  %v2054 = vunpack.c.l.b16 %v1988
  %v2055 = vunpack.c.l.b16 %v1989
  %v2056 = vunpack.c.l.b16 %v1990
  %v2057 = vunpack.c.l.b16 %v1991
  %v2058 = vpack.c.b16 %v2027, %v2026
  %v2059 = vpack.c.b16 %v2029, %v2028
  %v2060 = vpack.c.b16 %v2031, %v2030
  %v2061 = vpack.c.b16 %v2033, %v2032
  %v2062 = vpack.c.b16 %v2035, %v2034
  %v2063 = vpack.c.b16 %v2037, %v2036
  %v2064 = vpack.c.b16 %v2039, %v2038
  %v2065 = vpack.c.b16 %v2041, %v2040
  %v2066 = vpack.c.b16 %v2043, %v2042
  %v2067 = vpack.c.b16 %v2045, %v2044
  %v2068 = vpack.c.b16 %v2047, %v2046
  %v2069 = vpack.c.b16 %v2049, %v2048
  %v2070 = vpack.c.b16 %v2051, %v2050
  %v2071 = vpack.c.b16 %v2053, %v2052
  %v2072 = vpack.c.b16 %v2055, %v2054
  %v2073 = vpack.c.b16 %v2057, %v2056
  %2090 = vmatpush.bf16.msra.mxu0 %v2065
  %2091 = vmatpush.bf16.msra.mxu0 %v2064
  %2092 = vmatpush.bf16.msra.mxu0 %v2063
  %2093 = vmatpush.bf16.msra.mxu0 %v2062
  %2094 = vmatpush.bf16.msra.mxu0 %v2061
  %2095 = vmatpush.bf16.msra.mxu0 %v2060
  %2096 = vmatpush.bf16.msra.mxu0 %v2059
  %2097 = vmatpush.bf16.msra.mxu0 %v2058
  %2098 = vmatmul.bf16.gmra.mxu0 %v1992
  %v2099 = vpop.f32.mrf.mxu0
  %v2100 = vadd.f32 0.0, %v2099
  %v2101 = vpop.f32.mrf.mxu0
  %v2102 = vadd.f32 0.0, %v2101
  %2103 = vdwg.mxu0
  %2104 = vmatpush.bf16.msra.mxu0 %v2073
  %2105 = vmatpush.bf16.msra.mxu0 %v2072
  %2106 = vmatpush.bf16.msra.mxu0 %v2071
  %2107 = vmatpush.bf16.msra.mxu0 %v2070
  %2108 = vmatpush.bf16.msra.mxu0 %v2069
  %2109 = vmatpush.bf16.msra.mxu0 %v2068
  %2110 = vmatpush.bf16.msra.mxu0 %v2067
  %2111 = vmatpush.bf16.msra.mxu0 %v2066
  %2112 = vmatmul.bf16.gmra.mxu0 %v1993
  %v2113 = vpop.f32.mrf.mxu0
  %v2114 = vadd.f32 %v2100, %v2113
  %v2115 = vpop.f32.mrf.mxu0
  %v2116 = vadd.f32 %v2102, %v2115
  %2117 = vdwg.mxu0
  %v2118 = vadd.f32 %v1780, %v2114
  %v2119 = vadd.f32 %v1781, %v2116
  %v2120 = vld [vmem:[%s19] sm:$0x1]
  %v2122 = vperm.slane %v2120, 0
  %v2124 = vadd.f32 %v2118, %v2122
  %v2125 = vadd.f32 %v2119, %v2122
  %s2126 = scalar_lea.vmem %s4, 1
  %v2127 = vld [vmem:[%s2126] sm:$0x1]
  %s2128 = scalar_lea.vmem %s5, 1
  %v2129 = vld [vmem:[%s2128] sm:$0x1]
  %v2130 = vsel %vm588, %v2124, 0.0
  %2131 = vadd.xlane.f32.xlu0 %v2130
  %v2132 = vpop.xlane.xlu0 %2131
  %v2133 = vsel %vm592, %v2125, 0.0
  %2134 = vadd.xlane.f32.xlu0 %v2133
  %v2135 = vpop.xlane.xlu0 %2134
  %v2136 = vmul.f32 %v2132, %v602
  %v2137 = vmul.f32 %v2135, %v602
  %v2138 = vsub.f32 %v2124, %v2136
  %v2139 = vsub.f32 %v2125, %v2137
  %v2140 = vmul.f32 %v2138, %v2138
  %v2141 = vmul.f32 %v2139, %v2139
  %v2142 = vsel %vm588, %v2140, 0.0
  %2143 = vadd.xlane.f32.xlu0 %v2142
  %v2144 = vpop.xlane.xlu0 %2143
  %v2145 = vsel %vm592, %v2141, 0.0
  %2146 = vadd.xlane.f32.xlu0 %v2145
  %v2147 = vpop.xlane.xlu0 %2146
  %v2148 = vmul.f32 %v2144, %v602
  %v2149 = vmul.f32 %v2147, %v602
  %v2150 = vadd.f32 %v2148, 1e-06
  %v2151 = vadd.f32 %v2149, 1e-06
  %v2152 = vrsqrt.pop %v2150
  %v2153 = vmul.f32 %v2152, %v2150
  %v2154 = vmul.f32 %v2153, %v2152
  %v2155 = vmul.f32 0.5, %v2154
  %v2156 = vsub.f32 1.5, %v2155
  %v2157 = vmul.f32 %v2152, %v2156
  %vm2158 = vweird.f32 %v2150
  %vm2159 = vweird.f32 %v2152
  %vm2160 = vmor %vm2158, %vm2159
  %v2161 = vsel %vm2160, %v2152, %v2157
  %v2162 = vrsqrt.pop %v2151
  %v2163 = vmul.f32 %v2162, %v2151
  %v2164 = vmul.f32 %v2163, %v2162
  %v2165 = vmul.f32 0.5, %v2164
  %v2166 = vsub.f32 1.5, %v2165
  %v2167 = vmul.f32 %v2162, %v2166
  %vm2168 = vweird.f32 %v2151
  %vm2169 = vweird.f32 %v2162
  %vm2170 = vmor %vm2168, %vm2169
  %v2171 = vsel %vm2170, %v2162, %v2167
  %v2172 = vmul.f32 %v2138, %v2161
  %v2173 = vmul.f32 %v2139, %v2171
  %v2175 = vperm.slane %v2127, 0
  %v2177 = vmul.f32 %v2172, %v2175
  %v2178 = vmul.f32 %v2173, %v2175
  %v2180 = vperm.slane %v2129, 0
  %v2182 = vadd.f32 %v2177, %v2180
  %v2183 = vadd.f32 %v2178, %v2180
  %v2184 = vpack.c.bf16 %v2183, %v2182
  %s2185 = scalar_lea.vmem %s6, 128
  %v2186 = vld [vmem:[%s2185] sm:$0xf]
  %v2187 = vld [vmem:[%s2185 + $0x4] sm:$0xf]
  %v2188 = vld [vmem:[%s2185 + $0x8] sm:$0xf]
  %v2189 = vld [vmem:[%s2185 + $0xc] sm:$0xf]
  %v2190 = vld [vmem:[%s2185 + $0x10] sm:$0xf]
  %v2191 = vld [vmem:[%s2185 + $0x14] sm:$0xf]
  %v2192 = vld [vmem:[%s2185 + $0x18] sm:$0xf]
  %v2193 = vld [vmem:[%s2185 + $0x1c] sm:$0xf]
  %s2194 = scalar_lea.vmem %s9, 4
  %v2195 = vld [vmem:[%s2194] sm:$0x1]
  %v2197 = vperm.slane %v2195, 0
  %v2207 = vunpack.c.l.b16 %v2186
  %v2208 = vunpack.c.l.b16 %v2187
  %v2209 = vunpack.c.l.b16 %v2188
  %v2210 = vunpack.c.l.b16 %v2189
  %v2211 = vunpack.c.l.b16 %v2190
  %v2212 = vunpack.c.l.b16 %v2191
  %v2213 = vunpack.c.l.b16 %v2192
  %v2214 = vunpack.c.l.b16 %v2193
  %v2215 = vpack.c.b16 %v2208, %v2207
  %v2216 = vpack.c.b16 %v2210, %v2209
  %v2217 = vpack.c.b16 %v2212, %v2211
  %v2218 = vpack.c.b16 %v2214, %v2213
  %v2224 = vsel %vm588, %v2184, 0
  %2226 = vmatpush.bf16.msra.mxu0 0
  %2227 = vmatpush.bf16.msra.mxu0 0
  %2228 = vmatpush.bf16.msra.mxu0 0
  %2229 = vmatpush.bf16.msra.mxu0 0
  %2230 = vmatpush.bf16.msra.mxu0 %v2218
  %2231 = vmatpush.bf16.msra.mxu0 %v2217
  %2232 = vmatpush.bf16.msra.mxu0 %v2216
  %2233 = vmatpush.bf16.msra.mxu0 %v2215
  %2234 = vmatmul.bf16.gmra.mxu0 %v2224
  %v2235 = vpop.f32.mrf.mxu0
  %v2236 = vadd.f32 %v2197, %v2235
  %v2237 = vpop.f32.mrf.mxu0
  %v2238 = vadd.f32 %v2197, %v2237
  %2239 = vdwg.mxu0
  %s2240 = scalar_lea.vmem %s7, 128
  %v2241 = vld [vmem:[%s2240] sm:$0xf]
  %v2242 = vld [vmem:[%s2240 + $0x4] sm:$0xf]
  %v2243 = vld [vmem:[%s2240 + $0x8] sm:$0xf]
  %v2244 = vld [vmem:[%s2240 + $0xc] sm:$0xf]
  %v2245 = vld [vmem:[%s2240 + $0x10] sm:$0xf]
  %v2246 = vld [vmem:[%s2240 + $0x14] sm:$0xf]
  %v2247 = vld [vmem:[%s2240 + $0x18] sm:$0xf]
  %v2248 = vld [vmem:[%s2240 + $0x1c] sm:$0xf]
  %s2249 = scalar_lea.vmem %s10, 4
  %v2250 = vld [vmem:[%s2249] sm:$0x1]
  %v2252 = vperm.slane %v2250, 0
  %v2262 = vunpack.c.l.b16 %v2241
  %v2263 = vunpack.c.l.b16 %v2242
  %v2264 = vunpack.c.l.b16 %v2243
  %v2265 = vunpack.c.l.b16 %v2244
  %v2266 = vunpack.c.l.b16 %v2245
  %v2267 = vunpack.c.l.b16 %v2246
  %v2268 = vunpack.c.l.b16 %v2247
  %v2269 = vunpack.c.l.b16 %v2248
  %v2270 = vpack.c.b16 %v2263, %v2262
  %v2271 = vpack.c.b16 %v2265, %v2264
  %v2272 = vpack.c.b16 %v2267, %v2266
  %v2273 = vpack.c.b16 %v2269, %v2268
  %2278 = vmatpush.bf16.msra.mxu0 0
  %2279 = vmatpush.bf16.msra.mxu0 0
  %2280 = vmatpush.bf16.msra.mxu0 0
  %2281 = vmatpush.bf16.msra.mxu0 0
  %2282 = vmatpush.bf16.msra.mxu0 %v2273
  %2283 = vmatpush.bf16.msra.mxu0 %v2272
  %2284 = vmatpush.bf16.msra.mxu0 %v2271
  %2285 = vmatpush.bf16.msra.mxu0 %v2270
  %2286 = vmatmul.bf16.gmra.mxu0 %v2224
  %v2287 = vpop.f32.mrf.mxu0
  %v2288 = vadd.f32 %v2252, %v2287
  %v2289 = vpop.f32.mrf.mxu0
  %v2290 = vadd.f32 %v2252, %v2289
  %2291 = vdwg.mxu0
  %s2292 = scalar_lea.vmem %s8, 128
  %v2293 = vld [vmem:[%s2292] sm:$0xf]
  %v2294 = vld [vmem:[%s2292 + $0x4] sm:$0xf]
  %v2295 = vld [vmem:[%s2292 + $0x8] sm:$0xf]
  %v2296 = vld [vmem:[%s2292 + $0xc] sm:$0xf]
  %v2297 = vld [vmem:[%s2292 + $0x10] sm:$0xf]
  %v2298 = vld [vmem:[%s2292 + $0x14] sm:$0xf]
  %v2299 = vld [vmem:[%s2292 + $0x18] sm:$0xf]
  %v2300 = vld [vmem:[%s2292 + $0x1c] sm:$0xf]
  %s2301 = scalar_lea.vmem %s11, 4
  %v2302 = vld [vmem:[%s2301] sm:$0x1]
  %v2304 = vperm.slane %v2302, 0
  %v2314 = vunpack.c.l.b16 %v2293
  %v2315 = vunpack.c.l.b16 %v2294
  %v2316 = vunpack.c.l.b16 %v2295
  %v2317 = vunpack.c.l.b16 %v2296
  %v2318 = vunpack.c.l.b16 %v2297
  %v2319 = vunpack.c.l.b16 %v2298
  %v2320 = vunpack.c.l.b16 %v2299
  %v2321 = vunpack.c.l.b16 %v2300
  %v2322 = vpack.c.b16 %v2315, %v2314
  %v2323 = vpack.c.b16 %v2317, %v2316
  %v2324 = vpack.c.b16 %v2319, %v2318
  %v2325 = vpack.c.b16 %v2321, %v2320
  %2330 = vmatpush.bf16.msra.mxu0 0
  %2331 = vmatpush.bf16.msra.mxu0 0
  %2332 = vmatpush.bf16.msra.mxu0 0
  %2333 = vmatpush.bf16.msra.mxu0 0
  %2334 = vmatpush.bf16.msra.mxu0 %v2325
  %2335 = vmatpush.bf16.msra.mxu0 %v2324
  %2336 = vmatpush.bf16.msra.mxu0 %v2323
  %2337 = vmatpush.bf16.msra.mxu0 %v2322
  %2338 = vmatmul.bf16.gmra.mxu0 %v2224
  %v2339 = vpop.f32.mrf.mxu0
  %v2340 = vadd.f32 %v2304, %v2339
  %v2341 = vpop.f32.mrf.mxu0
  %v2342 = vadd.f32 %v2304, %v2341
  %2343 = vdwg.mxu0
  %v2344 = vpack.c.bf16 %v2342, %v2340
  %s2345 = scalar_lea.vmem %s6, 160
  %v2346 = vld [vmem:[%s2345] sm:$0xf]
  %v2347 = vld [vmem:[%s2345 + $0x4] sm:$0xf]
  %v2348 = vld [vmem:[%s2345 + $0x8] sm:$0xf]
  %v2349 = vld [vmem:[%s2345 + $0xc] sm:$0xf]
  %v2350 = vld [vmem:[%s2345 + $0x10] sm:$0xf]
  %v2351 = vld [vmem:[%s2345 + $0x14] sm:$0xf]
  %v2352 = vld [vmem:[%s2345 + $0x18] sm:$0xf]
  %v2353 = vld [vmem:[%s2345 + $0x1c] sm:$0xf]
  %s2354 = scalar_lea.vmem %s9, 5
  %v2355 = vld [vmem:[%s2354] sm:$0x1]
  %v2357 = vperm.slane %v2355, 0
  %v2367 = vunpack.c.l.b16 %v2346
  %v2368 = vunpack.c.l.b16 %v2347
  %v2369 = vunpack.c.l.b16 %v2348
  %v2370 = vunpack.c.l.b16 %v2349
  %v2371 = vunpack.c.l.b16 %v2350
  %v2372 = vunpack.c.l.b16 %v2351
  %v2373 = vunpack.c.l.b16 %v2352
  %v2374 = vunpack.c.l.b16 %v2353
  %v2375 = vpack.c.b16 %v2368, %v2367
  %v2376 = vpack.c.b16 %v2370, %v2369
  %v2377 = vpack.c.b16 %v2372, %v2371
  %v2378 = vpack.c.b16 %v2374, %v2373
  %2383 = vmatpush.bf16.msra.mxu0 0
  %2384 = vmatpush.bf16.msra.mxu0 0
  %2385 = vmatpush.bf16.msra.mxu0 0
  %2386 = vmatpush.bf16.msra.mxu0 0
  %2387 = vmatpush.bf16.msra.mxu0 %v2378
  %2388 = vmatpush.bf16.msra.mxu0 %v2377
  %2389 = vmatpush.bf16.msra.mxu0 %v2376
  %2390 = vmatpush.bf16.msra.mxu0 %v2375
  %2391 = vmatmul.bf16.gmra.mxu0 %v2224
  %v2392 = vpop.f32.mrf.mxu0
  %v2393 = vadd.f32 %v2357, %v2392
  %v2394 = vpop.f32.mrf.mxu0
  %v2395 = vadd.f32 %v2357, %v2394
  %2396 = vdwg.mxu0
  %s2397 = scalar_lea.vmem %s7, 160
  %v2398 = vld [vmem:[%s2397] sm:$0xf]
  %v2399 = vld [vmem:[%s2397 + $0x4] sm:$0xf]
  %v2400 = vld [vmem:[%s2397 + $0x8] sm:$0xf]
  %v2401 = vld [vmem:[%s2397 + $0xc] sm:$0xf]
  %v2402 = vld [vmem:[%s2397 + $0x10] sm:$0xf]
  %v2403 = vld [vmem:[%s2397 + $0x14] sm:$0xf]
  %v2404 = vld [vmem:[%s2397 + $0x18] sm:$0xf]
  %v2405 = vld [vmem:[%s2397 + $0x1c] sm:$0xf]
  %s2406 = scalar_lea.vmem %s10, 5
  %v2407 = vld [vmem:[%s2406] sm:$0x1]
  %v2409 = vperm.slane %v2407, 0
  %v2419 = vunpack.c.l.b16 %v2398
  %v2420 = vunpack.c.l.b16 %v2399
  %v2421 = vunpack.c.l.b16 %v2400
  %v2422 = vunpack.c.l.b16 %v2401
  %v2423 = vunpack.c.l.b16 %v2402
  %v2424 = vunpack.c.l.b16 %v2403
  %v2425 = vunpack.c.l.b16 %v2404
  %v2426 = vunpack.c.l.b16 %v2405
  %v2427 = vpack.c.b16 %v2420, %v2419
  %v2428 = vpack.c.b16 %v2422, %v2421
  %v2429 = vpack.c.b16 %v2424, %v2423
  %v2430 = vpack.c.b16 %v2426, %v2425
  %2435 = vmatpush.bf16.msra.mxu0 0
  %2436 = vmatpush.bf16.msra.mxu0 0
  %2437 = vmatpush.bf16.msra.mxu0 0
  %2438 = vmatpush.bf16.msra.mxu0 0
  %2439 = vmatpush.bf16.msra.mxu0 %v2430
  %2440 = vmatpush.bf16.msra.mxu0 %v2429
  %2441 = vmatpush.bf16.msra.mxu0 %v2428
  %2442 = vmatpush.bf16.msra.mxu0 %v2427
  %2443 = vmatmul.bf16.gmra.mxu0 %v2224
  %v2444 = vpop.f32.mrf.mxu0
  %v2445 = vadd.f32 %v2409, %v2444
  %v2446 = vpop.f32.mrf.mxu0
  %v2447 = vadd.f32 %v2409, %v2446
  %2448 = vdwg.mxu0
  %s2449 = scalar_lea.vmem %s8, 160
  %v2450 = vld [vmem:[%s2449] sm:$0xf]
  %v2451 = vld [vmem:[%s2449 + $0x4] sm:$0xf]
  %v2452 = vld [vmem:[%s2449 + $0x8] sm:$0xf]
  %v2453 = vld [vmem:[%s2449 + $0xc] sm:$0xf]
  %v2454 = vld [vmem:[%s2449 + $0x10] sm:$0xf]
  %v2455 = vld [vmem:[%s2449 + $0x14] sm:$0xf]
  %v2456 = vld [vmem:[%s2449 + $0x18] sm:$0xf]
  %v2457 = vld [vmem:[%s2449 + $0x1c] sm:$0xf]
  %s2458 = scalar_lea.vmem %s11, 5
  %v2459 = vld [vmem:[%s2458] sm:$0x1]
  %v2461 = vperm.slane %v2459, 0
  %v2471 = vunpack.c.l.b16 %v2450
  %v2472 = vunpack.c.l.b16 %v2451
  %v2473 = vunpack.c.l.b16 %v2452
  %v2474 = vunpack.c.l.b16 %v2453
  %v2475 = vunpack.c.l.b16 %v2454
  %v2476 = vunpack.c.l.b16 %v2455
  %v2477 = vunpack.c.l.b16 %v2456
  %v2478 = vunpack.c.l.b16 %v2457
  %v2479 = vpack.c.b16 %v2472, %v2471
  %v2480 = vpack.c.b16 %v2474, %v2473
  %v2481 = vpack.c.b16 %v2476, %v2475
  %v2482 = vpack.c.b16 %v2478, %v2477
  %2487 = vmatpush.bf16.msra.mxu0 0
  %2488 = vmatpush.bf16.msra.mxu0 0
  %2489 = vmatpush.bf16.msra.mxu0 0
  %2490 = vmatpush.bf16.msra.mxu0 0
  %2491 = vmatpush.bf16.msra.mxu0 %v2482
  %2492 = vmatpush.bf16.msra.mxu0 %v2481
  %2493 = vmatpush.bf16.msra.mxu0 %v2480
  %2494 = vmatpush.bf16.msra.mxu0 %v2479
  %2495 = vmatmul.bf16.gmra.mxu0 %v2224
  %v2496 = vpop.f32.mrf.mxu0
  %v2497 = vadd.f32 %v2461, %v2496
  %v2498 = vpop.f32.mrf.mxu0
  %v2499 = vadd.f32 %v2461, %v2498
  %2500 = vdwg.mxu0
  %v2501 = vpack.c.bf16 %v2499, %v2497
  %s2502 = scalar_lea.vmem %s6, 192
  %v2503 = vld [vmem:[%s2502] sm:$0xf]
  %v2504 = vld [vmem:[%s2502 + $0x4] sm:$0xf]
  %v2505 = vld [vmem:[%s2502 + $0x8] sm:$0xf]
  %v2506 = vld [vmem:[%s2502 + $0xc] sm:$0xf]
  %v2507 = vld [vmem:[%s2502 + $0x10] sm:$0xf]
  %v2508 = vld [vmem:[%s2502 + $0x14] sm:$0xf]
  %v2509 = vld [vmem:[%s2502 + $0x18] sm:$0xf]
  %v2510 = vld [vmem:[%s2502 + $0x1c] sm:$0xf]
  %s2511 = scalar_lea.vmem %s9, 6
  %v2512 = vld [vmem:[%s2511] sm:$0x1]
  %v2514 = vperm.slane %v2512, 0
  %v2524 = vunpack.c.l.b16 %v2503
  %v2525 = vunpack.c.l.b16 %v2504
  %v2526 = vunpack.c.l.b16 %v2505
  %v2527 = vunpack.c.l.b16 %v2506
  %v2528 = vunpack.c.l.b16 %v2507
  %v2529 = vunpack.c.l.b16 %v2508
  %v2530 = vunpack.c.l.b16 %v2509
  %v2531 = vunpack.c.l.b16 %v2510
  %v2532 = vpack.c.b16 %v2525, %v2524
  %v2533 = vpack.c.b16 %v2527, %v2526
  %v2534 = vpack.c.b16 %v2529, %v2528
  %v2535 = vpack.c.b16 %v2531, %v2530
  %2540 = vmatpush.bf16.msra.mxu0 0
  %2541 = vmatpush.bf16.msra.mxu0 0
  %2542 = vmatpush.bf16.msra.mxu0 0
  %2543 = vmatpush.bf16.msra.mxu0 0
  %2544 = vmatpush.bf16.msra.mxu0 %v2535
  %2545 = vmatpush.bf16.msra.mxu0 %v2534
  %2546 = vmatpush.bf16.msra.mxu0 %v2533
  %2547 = vmatpush.bf16.msra.mxu0 %v2532
  %2548 = vmatmul.bf16.gmra.mxu0 %v2224
  %v2549 = vpop.f32.mrf.mxu0
  %v2550 = vadd.f32 %v2514, %v2549
  %v2551 = vpop.f32.mrf.mxu0
  %v2552 = vadd.f32 %v2514, %v2551
  %2553 = vdwg.mxu0
  %s2554 = scalar_lea.vmem %s7, 192
  %v2555 = vld [vmem:[%s2554] sm:$0xf]
  %v2556 = vld [vmem:[%s2554 + $0x4] sm:$0xf]
  %v2557 = vld [vmem:[%s2554 + $0x8] sm:$0xf]
  %v2558 = vld [vmem:[%s2554 + $0xc] sm:$0xf]
  %v2559 = vld [vmem:[%s2554 + $0x10] sm:$0xf]
  %v2560 = vld [vmem:[%s2554 + $0x14] sm:$0xf]
  %v2561 = vld [vmem:[%s2554 + $0x18] sm:$0xf]
  %v2562 = vld [vmem:[%s2554 + $0x1c] sm:$0xf]
  %s2563 = scalar_lea.vmem %s10, 6
  %v2564 = vld [vmem:[%s2563] sm:$0x1]
  %v2566 = vperm.slane %v2564, 0
  %v2576 = vunpack.c.l.b16 %v2555
  %v2577 = vunpack.c.l.b16 %v2556
  %v2578 = vunpack.c.l.b16 %v2557
  %v2579 = vunpack.c.l.b16 %v2558
  %v2580 = vunpack.c.l.b16 %v2559
  %v2581 = vunpack.c.l.b16 %v2560
  %v2582 = vunpack.c.l.b16 %v2561
  %v2583 = vunpack.c.l.b16 %v2562
  %v2584 = vpack.c.b16 %v2577, %v2576
  %v2585 = vpack.c.b16 %v2579, %v2578
  %v2586 = vpack.c.b16 %v2581, %v2580
  %v2587 = vpack.c.b16 %v2583, %v2582
  %2592 = vmatpush.bf16.msra.mxu0 0
  %2593 = vmatpush.bf16.msra.mxu0 0
  %2594 = vmatpush.bf16.msra.mxu0 0
  %2595 = vmatpush.bf16.msra.mxu0 0
  %2596 = vmatpush.bf16.msra.mxu0 %v2587
  %2597 = vmatpush.bf16.msra.mxu0 %v2586
  %2598 = vmatpush.bf16.msra.mxu0 %v2585
  %2599 = vmatpush.bf16.msra.mxu0 %v2584
  %2600 = vmatmul.bf16.gmra.mxu0 %v2224
  %v2601 = vpop.f32.mrf.mxu0
  %v2602 = vadd.f32 %v2566, %v2601
  %v2603 = vpop.f32.mrf.mxu0
  %v2604 = vadd.f32 %v2566, %v2603
  %2605 = vdwg.mxu0
  %s2606 = scalar_lea.vmem %s8, 192
  %v2607 = vld [vmem:[%s2606] sm:$0xf]
  %v2608 = vld [vmem:[%s2606 + $0x4] sm:$0xf]
  %v2609 = vld [vmem:[%s2606 + $0x8] sm:$0xf]
  %v2610 = vld [vmem:[%s2606 + $0xc] sm:$0xf]
  %v2611 = vld [vmem:[%s2606 + $0x10] sm:$0xf]
  %v2612 = vld [vmem:[%s2606 + $0x14] sm:$0xf]
  %v2613 = vld [vmem:[%s2606 + $0x18] sm:$0xf]
  %v2614 = vld [vmem:[%s2606 + $0x1c] sm:$0xf]
  %s2615 = scalar_lea.vmem %s11, 6
  %v2616 = vld [vmem:[%s2615] sm:$0x1]
  %v2618 = vperm.slane %v2616, 0
  %v2628 = vunpack.c.l.b16 %v2607
  %v2629 = vunpack.c.l.b16 %v2608
  %v2630 = vunpack.c.l.b16 %v2609
  %v2631 = vunpack.c.l.b16 %v2610
  %v2632 = vunpack.c.l.b16 %v2611
  %v2633 = vunpack.c.l.b16 %v2612
  %v2634 = vunpack.c.l.b16 %v2613
  %v2635 = vunpack.c.l.b16 %v2614
  %v2636 = vpack.c.b16 %v2629, %v2628
  %v2637 = vpack.c.b16 %v2631, %v2630
  %v2638 = vpack.c.b16 %v2633, %v2632
  %v2639 = vpack.c.b16 %v2635, %v2634
  %2644 = vmatpush.bf16.msra.mxu0 0
  %2645 = vmatpush.bf16.msra.mxu0 0
  %2646 = vmatpush.bf16.msra.mxu0 0
  %2647 = vmatpush.bf16.msra.mxu0 0
  %2648 = vmatpush.bf16.msra.mxu0 %v2639
  %2649 = vmatpush.bf16.msra.mxu0 %v2638
  %2650 = vmatpush.bf16.msra.mxu0 %v2637
  %2651 = vmatpush.bf16.msra.mxu0 %v2636
  %2652 = vmatmul.bf16.gmra.mxu0 %v2224
  %v2653 = vpop.f32.mrf.mxu0
  %v2654 = vadd.f32 %v2618, %v2653
  %v2655 = vpop.f32.mrf.mxu0
  %v2656 = vadd.f32 %v2618, %v2655
  %2657 = vdwg.mxu0
  %v2658 = vpack.c.bf16 %v2656, %v2654
  %s2659 = scalar_lea.vmem %s6, 224
  %v2660 = vld [vmem:[%s2659] sm:$0xf]
  %v2661 = vld [vmem:[%s2659 + $0x4] sm:$0xf]
  %v2662 = vld [vmem:[%s2659 + $0x8] sm:$0xf]
  %v2663 = vld [vmem:[%s2659 + $0xc] sm:$0xf]
  %v2664 = vld [vmem:[%s2659 + $0x10] sm:$0xf]
  %v2665 = vld [vmem:[%s2659 + $0x14] sm:$0xf]
  %v2666 = vld [vmem:[%s2659 + $0x18] sm:$0xf]
  %v2667 = vld [vmem:[%s2659 + $0x1c] sm:$0xf]
  %s2668 = scalar_lea.vmem %s9, 7
  %v2669 = vld [vmem:[%s2668] sm:$0x1]
  %v2671 = vperm.slane %v2669, 0
  %v2681 = vunpack.c.l.b16 %v2660
  %v2682 = vunpack.c.l.b16 %v2661
  %v2683 = vunpack.c.l.b16 %v2662
  %v2684 = vunpack.c.l.b16 %v2663
  %v2685 = vunpack.c.l.b16 %v2664
  %v2686 = vunpack.c.l.b16 %v2665
  %v2687 = vunpack.c.l.b16 %v2666
  %v2688 = vunpack.c.l.b16 %v2667
  %v2689 = vpack.c.b16 %v2682, %v2681
  %v2690 = vpack.c.b16 %v2684, %v2683
  %v2691 = vpack.c.b16 %v2686, %v2685
  %v2692 = vpack.c.b16 %v2688, %v2687
  %2697 = vmatpush.bf16.msra.mxu0 0
  %2698 = vmatpush.bf16.msra.mxu0 0
  %2699 = vmatpush.bf16.msra.mxu0 0
  %2700 = vmatpush.bf16.msra.mxu0 0
  %2701 = vmatpush.bf16.msra.mxu0 %v2692
  %2702 = vmatpush.bf16.msra.mxu0 %v2691
  %2703 = vmatpush.bf16.msra.mxu0 %v2690
  %2704 = vmatpush.bf16.msra.mxu0 %v2689
  %2705 = vmatmul.bf16.gmra.mxu0 %v2224
  %v2706 = vpop.f32.mrf.mxu0
  %v2707 = vadd.f32 %v2671, %v2706
  %v2708 = vpop.f32.mrf.mxu0
  %v2709 = vadd.f32 %v2671, %v2708
  %2710 = vdwg.mxu0
  %s2711 = scalar_lea.vmem %s7, 224
  %v2712 = vld [vmem:[%s2711] sm:$0xf]
  %v2713 = vld [vmem:[%s2711 + $0x4] sm:$0xf]
  %v2714 = vld [vmem:[%s2711 + $0x8] sm:$0xf]
  %v2715 = vld [vmem:[%s2711 + $0xc] sm:$0xf]
  %v2716 = vld [vmem:[%s2711 + $0x10] sm:$0xf]
  %v2717 = vld [vmem:[%s2711 + $0x14] sm:$0xf]
  %v2718 = vld [vmem:[%s2711 + $0x18] sm:$0xf]
  %v2719 = vld [vmem:[%s2711 + $0x1c] sm:$0xf]
  %s2720 = scalar_lea.vmem %s10, 7
  %v2721 = vld [vmem:[%s2720] sm:$0x1]
  %v2723 = vperm.slane %v2721, 0
  %v2733 = vunpack.c.l.b16 %v2712
  %v2734 = vunpack.c.l.b16 %v2713
  %v2735 = vunpack.c.l.b16 %v2714
  %v2736 = vunpack.c.l.b16 %v2715
  %v2737 = vunpack.c.l.b16 %v2716
  %v2738 = vunpack.c.l.b16 %v2717
  %v2739 = vunpack.c.l.b16 %v2718
  %v2740 = vunpack.c.l.b16 %v2719
  %v2741 = vpack.c.b16 %v2734, %v2733
  %v2742 = vpack.c.b16 %v2736, %v2735
  %v2743 = vpack.c.b16 %v2738, %v2737
  %v2744 = vpack.c.b16 %v2740, %v2739
  %2749 = vmatpush.bf16.msra.mxu0 0
  %2750 = vmatpush.bf16.msra.mxu0 0
  %2751 = vmatpush.bf16.msra.mxu0 0
  %2752 = vmatpush.bf16.msra.mxu0 0
  %2753 = vmatpush.bf16.msra.mxu0 %v2744
  %2754 = vmatpush.bf16.msra.mxu0 %v2743
  %2755 = vmatpush.bf16.msra.mxu0 %v2742
  %2756 = vmatpush.bf16.msra.mxu0 %v2741
  %2757 = vmatmul.bf16.gmra.mxu0 %v2224
  %v2758 = vpop.f32.mrf.mxu0
  %v2759 = vadd.f32 %v2723, %v2758
  %v2760 = vpop.f32.mrf.mxu0
  %v2761 = vadd.f32 %v2723, %v2760
  %2762 = vdwg.mxu0
  %s2763 = scalar_lea.vmem %s8, 224
  %v2764 = vld [vmem:[%s2763] sm:$0xf]
  %v2765 = vld [vmem:[%s2763 + $0x4] sm:$0xf]
  %v2766 = vld [vmem:[%s2763 + $0x8] sm:$0xf]
  %v2767 = vld [vmem:[%s2763 + $0xc] sm:$0xf]
  %v2768 = vld [vmem:[%s2763 + $0x10] sm:$0xf]
  %v2769 = vld [vmem:[%s2763 + $0x14] sm:$0xf]
  %v2770 = vld [vmem:[%s2763 + $0x18] sm:$0xf]
  %v2771 = vld [vmem:[%s2763 + $0x1c] sm:$0xf]
  %s2772 = scalar_lea.vmem %s11, 7
  %v2773 = vld [vmem:[%s2772] sm:$0x1]
  %v2775 = vperm.slane %v2773, 0
  %v2785 = vunpack.c.l.b16 %v2764
  %v2786 = vunpack.c.l.b16 %v2765
  %v2787 = vunpack.c.l.b16 %v2766
  %v2788 = vunpack.c.l.b16 %v2767
  %v2789 = vunpack.c.l.b16 %v2768
  %v2790 = vunpack.c.l.b16 %v2769
  %v2791 = vunpack.c.l.b16 %v2770
  %v2792 = vunpack.c.l.b16 %v2771
  %v2793 = vpack.c.b16 %v2786, %v2785
  %v2794 = vpack.c.b16 %v2788, %v2787
  %v2795 = vpack.c.b16 %v2790, %v2789
  %v2796 = vpack.c.b16 %v2792, %v2791
  %2801 = vmatpush.bf16.msra.mxu0 0
  %2802 = vmatpush.bf16.msra.mxu0 0
  %2803 = vmatpush.bf16.msra.mxu0 0
  %2804 = vmatpush.bf16.msra.mxu0 0
  %2805 = vmatpush.bf16.msra.mxu0 %v2796
  %2806 = vmatpush.bf16.msra.mxu0 %v2795
  %2807 = vmatpush.bf16.msra.mxu0 %v2794
  %2808 = vmatpush.bf16.msra.mxu0 %v2793
  %2809 = vmatmul.bf16.gmra.mxu0 %v2224
  %v2810 = vpop.f32.mrf.mxu0
  %v2811 = vadd.f32 %v2775, %v2810
  %v2812 = vpop.f32.mrf.mxu0
  %v2813 = vadd.f32 %v2775, %v2812
  %2814 = vdwg.mxu0
  %v2815 = vpack.c.bf16 %v2813, %v2811
  %v2816 = vpack.c.bf16 %v2238, %v2236
  %v2817 = vpack.c.bf16 %v2290, %v2288
  %v2819 = vsel %vm1279, %v2816, 0
  %v2822 = vsel %vm1279, %v2817, 0
  %2824 = vmatpush.bf16.xpose.msra.mxu0 0
  %2825 = vmatpush.bf16.xpose.msra.mxu0 0
  %2826 = vmatpush.bf16.xpose.msra.mxu0 0
  %2827 = vmatpush.bf16.xpose.msra.mxu0 0
  %2828 = vmatpush.bf16.xpose.msra.mxu0 0
  %2829 = vmatpush.bf16.xpose.msra.mxu0 0
  %2830 = vmatpush.bf16.xpose.msra.mxu0 0
  %2831 = vmatpush.bf16.xpose.msra.mxu0 %v2822
  %2832 = vmatmul.bf16.gmra.mxu0 %v2819
  %v2833 = vpop.f32.mrf.mxu0
  %v2834 = vadd.f32 0.0, %v2833
  %v2835 = vpop.f32.mrf.mxu0
  %v2836 = vadd.f32 0.0, %v2835
  %2837 = vdwg.mxu0
  %v2838 = vmul.f32 %v2834, 0.25
  %v2839 = vmul.f32 %v2836, 0.25
  %v2840 = vadd.f32 %v2838, %v78
  %v2841 = vadd.f32 %v2839, %v79
  %v2842 = vpack.c.bf16 %v2395, %v2393
  %v2843 = vpack.c.bf16 %v2447, %v2445
  %v2845 = vsel %vm1279, %v2842, 0
  %v2848 = vsel %vm1279, %v2843, 0
  %2850 = vmatpush.bf16.xpose.msra.mxu0 0
  %2851 = vmatpush.bf16.xpose.msra.mxu0 0
  %2852 = vmatpush.bf16.xpose.msra.mxu0 0
  %2853 = vmatpush.bf16.xpose.msra.mxu0 0
  %2854 = vmatpush.bf16.xpose.msra.mxu0 0
  %2855 = vmatpush.bf16.xpose.msra.mxu0 0
  %2856 = vmatpush.bf16.xpose.msra.mxu0 0
  %2857 = vmatpush.bf16.xpose.msra.mxu0 %v2848
  %2858 = vmatmul.bf16.gmra.mxu0 %v2845
  %v2859 = vpop.f32.mrf.mxu0
  %v2860 = vadd.f32 0.0, %v2859
  %v2861 = vpop.f32.mrf.mxu0
  %v2862 = vadd.f32 0.0, %v2861
  %2863 = vdwg.mxu0
  %v2864 = vmul.f32 %v2860, 0.25
  %v2865 = vmul.f32 %v2862, 0.25
  %v2866 = vadd.f32 %v2864, %v78
  %v2867 = vadd.f32 %v2865, %v79
  %v2868 = vpack.c.bf16 %v2552, %v2550
  %v2869 = vpack.c.bf16 %v2604, %v2602
  %v2871 = vsel %vm1279, %v2868, 0
  %v2874 = vsel %vm1279, %v2869, 0
  %2876 = vmatpush.bf16.xpose.msra.mxu0 0
  %2877 = vmatpush.bf16.xpose.msra.mxu0 0
  %2878 = vmatpush.bf16.xpose.msra.mxu0 0
  %2879 = vmatpush.bf16.xpose.msra.mxu0 0
  %2880 = vmatpush.bf16.xpose.msra.mxu0 0
  %2881 = vmatpush.bf16.xpose.msra.mxu0 0
  %2882 = vmatpush.bf16.xpose.msra.mxu0 0
  %2883 = vmatpush.bf16.xpose.msra.mxu0 %v2874
  %2884 = vmatmul.bf16.gmra.mxu0 %v2871
  %v2885 = vpop.f32.mrf.mxu0
  %v2886 = vadd.f32 0.0, %v2885
  %v2887 = vpop.f32.mrf.mxu0
  %v2888 = vadd.f32 0.0, %v2887
  %2889 = vdwg.mxu0
  %v2890 = vmul.f32 %v2886, 0.25
  %v2891 = vmul.f32 %v2888, 0.25
  %v2892 = vadd.f32 %v2890, %v78
  %v2893 = vadd.f32 %v2891, %v79
  %v2894 = vpack.c.bf16 %v2709, %v2707
  %v2895 = vpack.c.bf16 %v2761, %v2759
  %v2897 = vsel %vm1279, %v2894, 0
  %v2900 = vsel %vm1279, %v2895, 0
  %2902 = vmatpush.bf16.xpose.msra.mxu0 0
  %2903 = vmatpush.bf16.xpose.msra.mxu0 0
  %2904 = vmatpush.bf16.xpose.msra.mxu0 0
  %2905 = vmatpush.bf16.xpose.msra.mxu0 0
  %2906 = vmatpush.bf16.xpose.msra.mxu0 0
  %2907 = vmatpush.bf16.xpose.msra.mxu0 0
  %2908 = vmatpush.bf16.xpose.msra.mxu0 0
  %2909 = vmatpush.bf16.xpose.msra.mxu0 %v2900
  %2910 = vmatmul.bf16.gmra.mxu0 %v2897
  %v2911 = vpop.f32.mrf.mxu0
  %v2912 = vadd.f32 0.0, %v2911
  %v2913 = vpop.f32.mrf.mxu0
  %v2914 = vadd.f32 0.0, %v2913
  %2915 = vdwg.mxu0
  %v2916 = vmul.f32 %v2912, 0.25
  %v2917 = vmul.f32 %v2914, 0.25
  %v2918 = vadd.f32 %v2916, %v78
  %v2919 = vadd.f32 %v2917, %v79
  %v2920 = vsel %vm1382, %v2840, -inf
  %2921 = vmax.xlane.f32.xlu0 %v2920
  %v2922 = vpop.xlane.xlu0 %2921
  %v2923 = vsel %vm1386, %v2841, -inf
  %2924 = vmax.xlane.f32.xlu0 %v2923
  %v2925 = vpop.xlane.xlu0 %2924
  %v2926 = vsub.f32 %v2840, %v2922
  %v2927 = vsub.f32 %v2841, %v2925
  %v2928 = vmul.f32 %v2926, 1.442695
  %v2929 = vpow.pop %v2928
  %v2930 = vmul.f32 %v2927, 1.442695
  %v2931 = vpow.pop %v2930
  %v2932 = vsel %vm1382, %v2929, 0.0
  %2933 = vadd.xlane.f32.xlu0 %v2932
  %v2934 = vpop.xlane.xlu0 %2933
  %v2935 = vsel %vm1386, %v2931, 0.0
  %2936 = vadd.xlane.f32.xlu0 %v2935
  %v2937 = vpop.xlane.xlu0 %2936
  %v2938 = vrcp.pop %v2934
  %v2939 = vmul.f32 %v2934, %v2938
  %v2940 = vsub.f32 1.0, %v2939
  %v2941 = vmul.f32 %v2938, %v2940
  %v2942 = vadd.f32 %v2938, %v2941
  %vm2943 = vweird.f32 %v2934
  %vm2944 = vweird.f32 %v2938
  %vm2945 = vmor %vm2943, %vm2944
  %v2946 = vsel %vm2945, %v2938, %v2942
  %v2947 = vand.u32 2147483647, %v2934
  %vm2948 = vcmp.eq.f32.partialorder %v2947, 8.507059e+37
  %v2949 = vand.u32 %v2934, 2147483648
  %v2950 = vor.u32 1.1754944e-38, %v2949
  %v2951 = vsel %vm2948, %v2950, %v2946
  %v2952 = vrcp.pop %v2937
  %v2953 = vmul.f32 %v2937, %v2952
  %v2954 = vsub.f32 1.0, %v2953
  %v2955 = vmul.f32 %v2952, %v2954
  %v2956 = vadd.f32 %v2952, %v2955
  %vm2957 = vweird.f32 %v2937
  %vm2958 = vweird.f32 %v2952
  %vm2959 = vmor %vm2957, %vm2958
  %v2960 = vsel %vm2959, %v2952, %v2956
  %v2961 = vand.u32 2147483647, %v2937
  %vm2962 = vcmp.eq.f32.partialorder %v2961, 8.507059e+37
  %v2963 = vand.u32 %v2937, 2147483648
  %v2964 = vor.u32 1.1754944e-38, %v2963
  %v2965 = vsel %vm2962, %v2964, %v2960
  %v2966 = vmul.f32 %v2929, %v2951
  %v2967 = vmul.f32 %v2931, %v2965
  %v2968 = vpack.c.bf16 %v2967, %v2966
  %v2969 = vsel %vm1382, %v2866, -inf
  %2970 = vmax.xlane.f32.xlu0 %v2969
  %v2971 = vpop.xlane.xlu0 %2970
  %v2972 = vsel %vm1386, %v2867, -inf
  %2973 = vmax.xlane.f32.xlu0 %v2972
  %v2974 = vpop.xlane.xlu0 %2973
  %v2975 = vsub.f32 %v2866, %v2971
  %v2976 = vsub.f32 %v2867, %v2974
  %v2977 = vmul.f32 %v2975, 1.442695
  %v2978 = vpow.pop %v2977
  %v2979 = vmul.f32 %v2976, 1.442695
  %v2980 = vpow.pop %v2979
  %v2981 = vsel %vm1382, %v2978, 0.0
  %2982 = vadd.xlane.f32.xlu0 %v2981
  %v2983 = vpop.xlane.xlu0 %2982
  %v2984 = vsel %vm1386, %v2980, 0.0
  %2985 = vadd.xlane.f32.xlu0 %v2984
  %v2986 = vpop.xlane.xlu0 %2985
  %v2987 = vrcp.pop %v2983
  %v2988 = vmul.f32 %v2983, %v2987
  %v2989 = vsub.f32 1.0, %v2988
  %v2990 = vmul.f32 %v2987, %v2989
  %v2991 = vadd.f32 %v2987, %v2990
  %vm2992 = vweird.f32 %v2983
  %vm2993 = vweird.f32 %v2987
  %vm2994 = vmor %vm2992, %vm2993
  %v2995 = vsel %vm2994, %v2987, %v2991
  %v2996 = vand.u32 2147483647, %v2983
  %vm2997 = vcmp.eq.f32.partialorder %v2996, 8.507059e+37
  %v2998 = vand.u32 %v2983, 2147483648
  %v2999 = vor.u32 1.1754944e-38, %v2998
  %v3000 = vsel %vm2997, %v2999, %v2995
  %v3001 = vrcp.pop %v2986
  %v3002 = vmul.f32 %v2986, %v3001
  %v3003 = vsub.f32 1.0, %v3002
  %v3004 = vmul.f32 %v3001, %v3003
  %v3005 = vadd.f32 %v3001, %v3004
  %vm3006 = vweird.f32 %v2986
  %vm3007 = vweird.f32 %v3001
  %vm3008 = vmor %vm3006, %vm3007
  %v3009 = vsel %vm3008, %v3001, %v3005
  %v3010 = vand.u32 2147483647, %v2986
  %vm3011 = vcmp.eq.f32.partialorder %v3010, 8.507059e+37
  %v3012 = vand.u32 %v2986, 2147483648
  %v3013 = vor.u32 1.1754944e-38, %v3012
  %v3014 = vsel %vm3011, %v3013, %v3009
  %v3015 = vmul.f32 %v2978, %v3000
  %v3016 = vmul.f32 %v2980, %v3014
  %v3017 = vpack.c.bf16 %v3016, %v3015
  %v3018 = vsel %vm1382, %v2892, -inf
  %3019 = vmax.xlane.f32.xlu0 %v3018
  %v3020 = vpop.xlane.xlu0 %3019
  %v3021 = vsel %vm1386, %v2893, -inf
  %3022 = vmax.xlane.f32.xlu0 %v3021
  %v3023 = vpop.xlane.xlu0 %3022
  %v3024 = vsub.f32 %v2892, %v3020
  %v3025 = vsub.f32 %v2893, %v3023
  %v3026 = vmul.f32 %v3024, 1.442695
  %v3027 = vpow.pop %v3026
  %v3028 = vmul.f32 %v3025, 1.442695
  %v3029 = vpow.pop %v3028
  %v3030 = vsel %vm1382, %v3027, 0.0
  %3031 = vadd.xlane.f32.xlu0 %v3030
  %v3032 = vpop.xlane.xlu0 %3031
  %v3033 = vsel %vm1386, %v3029, 0.0
  %3034 = vadd.xlane.f32.xlu0 %v3033
  %v3035 = vpop.xlane.xlu0 %3034
  %v3036 = vrcp.pop %v3032
  %v3037 = vmul.f32 %v3032, %v3036
  %v3038 = vsub.f32 1.0, %v3037
  %v3039 = vmul.f32 %v3036, %v3038
  %v3040 = vadd.f32 %v3036, %v3039
  %vm3041 = vweird.f32 %v3032
  %vm3042 = vweird.f32 %v3036
  %vm3043 = vmor %vm3041, %vm3042
  %v3044 = vsel %vm3043, %v3036, %v3040
  %v3045 = vand.u32 2147483647, %v3032
  %vm3046 = vcmp.eq.f32.partialorder %v3045, 8.507059e+37
  %v3047 = vand.u32 %v3032, 2147483648
  %v3048 = vor.u32 1.1754944e-38, %v3047
  %v3049 = vsel %vm3046, %v3048, %v3044
  %v3050 = vrcp.pop %v3035
  %v3051 = vmul.f32 %v3035, %v3050
  %v3052 = vsub.f32 1.0, %v3051
  %v3053 = vmul.f32 %v3050, %v3052
  %v3054 = vadd.f32 %v3050, %v3053
  %vm3055 = vweird.f32 %v3035
  %vm3056 = vweird.f32 %v3050
  %vm3057 = vmor %vm3055, %vm3056
  %v3058 = vsel %vm3057, %v3050, %v3054
  %v3059 = vand.u32 2147483647, %v3035
  %vm3060 = vcmp.eq.f32.partialorder %v3059, 8.507059e+37
  %v3061 = vand.u32 %v3035, 2147483648
  %v3062 = vor.u32 1.1754944e-38, %v3061
  %v3063 = vsel %vm3060, %v3062, %v3058
  %v3064 = vmul.f32 %v3027, %v3049
  %v3065 = vmul.f32 %v3029, %v3063
  %v3066 = vpack.c.bf16 %v3065, %v3064
  %v3067 = vsel %vm1382, %v2918, -inf
  %3068 = vmax.xlane.f32.xlu0 %v3067
  %v3069 = vpop.xlane.xlu0 %3068
  %v3070 = vsel %vm1386, %v2919, -inf
  %3071 = vmax.xlane.f32.xlu0 %v3070
  %v3072 = vpop.xlane.xlu0 %3071
  %v3073 = vsub.f32 %v2918, %v3069
  %v3074 = vsub.f32 %v2919, %v3072
  %v3075 = vmul.f32 %v3073, 1.442695
  %v3076 = vpow.pop %v3075
  %v3077 = vmul.f32 %v3074, 1.442695
  %v3078 = vpow.pop %v3077
  %v3079 = vsel %vm1382, %v3076, 0.0
  %3080 = vadd.xlane.f32.xlu0 %v3079
  %v3081 = vpop.xlane.xlu0 %3080
  %v3082 = vsel %vm1386, %v3078, 0.0
  %3083 = vadd.xlane.f32.xlu0 %v3082
  %v3084 = vpop.xlane.xlu0 %3083
  %v3085 = vrcp.pop %v3081
  %v3086 = vmul.f32 %v3081, %v3085
  %v3087 = vsub.f32 1.0, %v3086
  %v3088 = vmul.f32 %v3085, %v3087
  %v3089 = vadd.f32 %v3085, %v3088
  %vm3090 = vweird.f32 %v3081
  %vm3091 = vweird.f32 %v3085
  %vm3092 = vmor %vm3090, %vm3091
  %v3093 = vsel %vm3092, %v3085, %v3089
  %v3094 = vand.u32 2147483647, %v3081
  %vm3095 = vcmp.eq.f32.partialorder %v3094, 8.507059e+37
  %v3096 = vand.u32 %v3081, 2147483648
  %v3097 = vor.u32 1.1754944e-38, %v3096
  %v3098 = vsel %vm3095, %v3097, %v3093
  %v3099 = vrcp.pop %v3084
  %v3100 = vmul.f32 %v3084, %v3099
  %v3101 = vsub.f32 1.0, %v3100
  %v3102 = vmul.f32 %v3099, %v3101
  %v3103 = vadd.f32 %v3099, %v3102
  %vm3104 = vweird.f32 %v3084
  %vm3105 = vweird.f32 %v3099
  %vm3106 = vmor %vm3104, %vm3105
  %v3107 = vsel %vm3106, %v3099, %v3103
  %v3108 = vand.u32 2147483647, %v3084
  %vm3109 = vcmp.eq.f32.partialorder %v3108, 8.507059e+37
  %v3110 = vand.u32 %v3084, 2147483648
  %v3111 = vor.u32 1.1754944e-38, %v3110
  %v3112 = vsel %vm3109, %v3111, %v3107
  %v3113 = vmul.f32 %v3076, %v3098
  %v3114 = vmul.f32 %v3078, %v3112
  %v3115 = vpack.c.bf16 %v3114, %v3113
  %v3117 = vsel %vm1382, %v2968, 0
  %v3120 = vsel %vm1583, %v2344, 0
  %3122 = vmatpush.bf16.msra.mxu0 0
  %3123 = vmatpush.bf16.msra.mxu0 0
  %3124 = vmatpush.bf16.msra.mxu0 0
  %3125 = vmatpush.bf16.msra.mxu0 0
  %3126 = vmatpush.bf16.msra.mxu0 0
  %3127 = vmatpush.bf16.msra.mxu0 0
  %3128 = vmatpush.bf16.msra.mxu0 0
  %3129 = vmatpush.bf16.msra.mxu0 %v3120
  %3130 = vmatmul.bf16.gmra.mxu0 %v3117
  %v3131 = vpop.f32.mrf.mxu0
  %v3132 = vadd.f32 0.0, %v3131
  %v3133 = vpop.f32.mrf.mxu0
  %v3134 = vadd.f32 0.0, %v3133
  %3135 = vdwg.mxu0
  %v3136 = vpack.c.bf16 %v3134, %v3132
  %v3138 = vsel %vm1382, %v3017, 0
  %v3141 = vsel %vm1583, %v2501, 0
  %3143 = vmatpush.bf16.msra.mxu0 0
  %3144 = vmatpush.bf16.msra.mxu0 0
  %3145 = vmatpush.bf16.msra.mxu0 0
  %3146 = vmatpush.bf16.msra.mxu0 0
  %3147 = vmatpush.bf16.msra.mxu0 0
  %3148 = vmatpush.bf16.msra.mxu0 0
  %3149 = vmatpush.bf16.msra.mxu0 0
  %3150 = vmatpush.bf16.msra.mxu0 %v3141
  %3151 = vmatmul.bf16.gmra.mxu0 %v3138
  %v3152 = vpop.f32.mrf.mxu0
  %v3153 = vadd.f32 0.0, %v3152
  %v3154 = vpop.f32.mrf.mxu0
  %v3155 = vadd.f32 0.0, %v3154
  %3156 = vdwg.mxu0
  %v3157 = vpack.c.bf16 %v3155, %v3153
  %v3159 = vsel %vm1382, %v3066, 0
  %v3162 = vsel %vm1583, %v2658, 0
  %3164 = vmatpush.bf16.msra.mxu0 0
  %3165 = vmatpush.bf16.msra.mxu0 0
  %3166 = vmatpush.bf16.msra.mxu0 0
  %3167 = vmatpush.bf16.msra.mxu0 0
  %3168 = vmatpush.bf16.msra.mxu0 0
  %3169 = vmatpush.bf16.msra.mxu0 0
  %3170 = vmatpush.bf16.msra.mxu0 0
  %3171 = vmatpush.bf16.msra.mxu0 %v3162
  %3172 = vmatmul.bf16.gmra.mxu0 %v3159
  %v3173 = vpop.f32.mrf.mxu0
  %v3174 = vadd.f32 0.0, %v3173
  %v3175 = vpop.f32.mrf.mxu0
  %v3176 = vadd.f32 0.0, %v3175
  %3177 = vdwg.mxu0
  %v3178 = vpack.c.bf16 %v3176, %v3174
  %v3180 = vsel %vm1382, %v3115, 0
  %v3183 = vsel %vm1583, %v2815, 0
  %3185 = vmatpush.bf16.msra.mxu0 0
  %3186 = vmatpush.bf16.msra.mxu0 0
  %3187 = vmatpush.bf16.msra.mxu0 0
  %3188 = vmatpush.bf16.msra.mxu0 0
  %3189 = vmatpush.bf16.msra.mxu0 0
  %3190 = vmatpush.bf16.msra.mxu0 0
  %3191 = vmatpush.bf16.msra.mxu0 0
  %3192 = vmatpush.bf16.msra.mxu0 %v3183
  %3193 = vmatmul.bf16.gmra.mxu0 %v3180
  %v3194 = vpop.f32.mrf.mxu0
  %v3195 = vadd.f32 0.0, %v3194
  %v3196 = vpop.f32.mrf.mxu0
  %v3197 = vadd.f32 0.0, %v3196
  %3198 = vdwg.mxu0
  %v3199 = vpack.c.bf16 %v3197, %v3195
  %s3200 = scalar_lea.vmem %s13, 1
  %v3201 = vld [vmem:[%s3200] sm:$0x1]
  %s3202 = scalar_lea.vmem %s12, 32
  %v3203 = vld [vmem:[%s3202] sm:$0xf]
  %v3204 = vld [vmem:[%s3202 + $0x4] sm:$0xf]
  %v3207 = vunpack.c.l.b16 %v3203
  %v3208 = vunpack.c.l.b16 %v3204
  %v3209 = vpack.c.b16 %v3208, %v3207
  %v3212 = vsel %vm1279, %v3136, 0
  %3214 = vmatpush.bf16.msra.mxu0 0
  %3215 = vmatpush.bf16.msra.mxu0 0
  %3216 = vmatpush.bf16.msra.mxu0 0
  %3217 = vmatpush.bf16.msra.mxu0 0
  %3218 = vmatpush.bf16.msra.mxu0 0
  %3219 = vmatpush.bf16.msra.mxu0 0
  %3220 = vmatpush.bf16.msra.mxu0 0
  %3221 = vmatpush.bf16.msra.mxu0 %v3209
  %3222 = vmatmul.bf16.gmra.mxu0 %v3212
  %v3223 = vpop.f32.mrf.mxu0
  %v3224 = vadd.f32 0.0, %v3223
  %v3225 = vpop.f32.mrf.mxu0
  %v3226 = vadd.f32 0.0, %v3225
  %3227 = vdwg.mxu0
  %v3229 = vperm.slane %v3201, 0
  %v3231 = vadd.f32 %v3229, %v3224
  %v3232 = vadd.f32 %v3229, %v3226
  %s3233 = scalar_lea.vmem %s12, 40
  %v3234 = vld [vmem:[%s3233] sm:$0xf]
  %v3235 = vld [vmem:[%s3233 + $0x4] sm:$0xf]
  %v3238 = vunpack.c.l.b16 %v3234
  %v3239 = vunpack.c.l.b16 %v3235
  %v3240 = vpack.c.b16 %v3239, %v3238
  %v3243 = vsel %vm1279, %v3157, 0
  %3245 = vmatpush.bf16.msra.mxu0 0
  %3246 = vmatpush.bf16.msra.mxu0 0
  %3247 = vmatpush.bf16.msra.mxu0 0
  %3248 = vmatpush.bf16.msra.mxu0 0
  %3249 = vmatpush.bf16.msra.mxu0 0
  %3250 = vmatpush.bf16.msra.mxu0 0
  %3251 = vmatpush.bf16.msra.mxu0 0
  %3252 = vmatpush.bf16.msra.mxu0 %v3240
  %3253 = vmatmul.bf16.gmra.mxu0 %v3243
  %v3254 = vpop.f32.mrf.mxu0
  %v3255 = vadd.f32 0.0, %v3254
  %v3256 = vpop.f32.mrf.mxu0
  %v3257 = vadd.f32 0.0, %v3256
  %3258 = vdwg.mxu0
  %v3259 = vadd.f32 %v3231, %v3255
  %v3260 = vadd.f32 %v3232, %v3257
  %s3261 = scalar_lea.vmem %s12, 48
  %v3262 = vld [vmem:[%s3261] sm:$0xf]
  %v3263 = vld [vmem:[%s3261 + $0x4] sm:$0xf]
  %v3266 = vunpack.c.l.b16 %v3262
  %v3267 = vunpack.c.l.b16 %v3263
  %v3268 = vpack.c.b16 %v3267, %v3266
  %v3271 = vsel %vm1279, %v3178, 0
  %3273 = vmatpush.bf16.msra.mxu0 0
  %3274 = vmatpush.bf16.msra.mxu0 0
  %3275 = vmatpush.bf16.msra.mxu0 0
  %3276 = vmatpush.bf16.msra.mxu0 0
  %3277 = vmatpush.bf16.msra.mxu0 0
  %3278 = vmatpush.bf16.msra.mxu0 0
  %3279 = vmatpush.bf16.msra.mxu0 0
  %3280 = vmatpush.bf16.msra.mxu0 %v3268
  %3281 = vmatmul.bf16.gmra.mxu0 %v3271
  %v3282 = vpop.f32.mrf.mxu0
  %v3283 = vadd.f32 0.0, %v3282
  %v3284 = vpop.f32.mrf.mxu0
  %v3285 = vadd.f32 0.0, %v3284
  %3286 = vdwg.mxu0
  %v3287 = vadd.f32 %v3259, %v3283
  %v3288 = vadd.f32 %v3260, %v3285
  %s3289 = scalar_lea.vmem %s12, 56
  %v3290 = vld [vmem:[%s3289] sm:$0xf]
  %v3291 = vld [vmem:[%s3289 + $0x4] sm:$0xf]
  %v3294 = vunpack.c.l.b16 %v3290
  %v3295 = vunpack.c.l.b16 %v3291
  %v3296 = vpack.c.b16 %v3295, %v3294
  %v3299 = vsel %vm1279, %v3199, 0
  %3301 = vmatpush.bf16.msra.mxu0 0
  %3302 = vmatpush.bf16.msra.mxu0 0
  %3303 = vmatpush.bf16.msra.mxu0 0
  %3304 = vmatpush.bf16.msra.mxu0 0
  %3305 = vmatpush.bf16.msra.mxu0 0
  %3306 = vmatpush.bf16.msra.mxu0 0
  %3307 = vmatpush.bf16.msra.mxu0 0
  %3308 = vmatpush.bf16.msra.mxu0 %v3296
  %3309 = vmatmul.bf16.gmra.mxu0 %v3299
  %v3310 = vpop.f32.mrf.mxu0
  %v3311 = vadd.f32 0.0, %v3310
  %v3312 = vpop.f32.mrf.mxu0
  %v3313 = vadd.f32 0.0, %v3312
  %3314 = vdwg.mxu0
  %v3315 = vadd.f32 %v3287, %v3311
  %v3316 = vadd.f32 %v3288, %v3313
  %v3317 = vadd.f32 %v2124, %v3315
  %v3318 = vadd.f32 %v2125, %v3316
  %s3319 = scalar_lea.vmem %s14, 1
  %v3320 = vld [vmem:[%s3319] sm:$0x1]
  %s3321 = scalar_lea.vmem %s15, 1
  %v3322 = vld [vmem:[%s3321] sm:$0x1]
  %v3323 = vsel %vm588, %v3317, 0.0
  %3324 = vadd.xlane.f32.xlu0 %v3323
  %v3325 = vpop.xlane.xlu0 %3324
  %v3326 = vsel %vm592, %v3318, 0.0
  %3327 = vadd.xlane.f32.xlu0 %v3326
  %v3328 = vpop.xlane.xlu0 %3327
  %v3329 = vmul.f32 %v3325, %v602
  %v3330 = vmul.f32 %v3328, %v602
  %v3331 = vsub.f32 %v3317, %v3329
  %v3332 = vsub.f32 %v3318, %v3330
  %v3333 = vmul.f32 %v3331, %v3331
  %v3334 = vmul.f32 %v3332, %v3332
  %v3335 = vsel %vm588, %v3333, 0.0
  %3336 = vadd.xlane.f32.xlu0 %v3335
  %v3337 = vpop.xlane.xlu0 %3336
  %v3338 = vsel %vm592, %v3334, 0.0
  %3339 = vadd.xlane.f32.xlu0 %v3338
  %v3340 = vpop.xlane.xlu0 %3339
  %v3341 = vmul.f32 %v3337, %v602
  %v3342 = vmul.f32 %v3340, %v602
  %v3343 = vadd.f32 %v3341, 1e-06
  %v3344 = vadd.f32 %v3342, 1e-06
  %v3345 = vrsqrt.pop %v3343
  %v3346 = vmul.f32 %v3345, %v3343
  %v3347 = vmul.f32 %v3346, %v3345
  %v3348 = vmul.f32 0.5, %v3347
  %v3349 = vsub.f32 1.5, %v3348
  %v3350 = vmul.f32 %v3345, %v3349
  %vm3351 = vweird.f32 %v3343
  %vm3352 = vweird.f32 %v3345
  %vm3353 = vmor %vm3351, %vm3352
  %v3354 = vsel %vm3353, %v3345, %v3350
  %v3355 = vrsqrt.pop %v3344
  %v3356 = vmul.f32 %v3355, %v3344
  %v3357 = vmul.f32 %v3356, %v3355
  %v3358 = vmul.f32 0.5, %v3357
  %v3359 = vsub.f32 1.5, %v3358
  %v3360 = vmul.f32 %v3355, %v3359
  %vm3361 = vweird.f32 %v3344
  %vm3362 = vweird.f32 %v3355
  %vm3363 = vmor %vm3361, %vm3362
  %v3364 = vsel %vm3363, %v3355, %v3360
  %v3365 = vmul.f32 %v3331, %v3354
  %v3366 = vmul.f32 %v3332, %v3364
  %v3368 = vperm.slane %v3320, 0
  %v3370 = vmul.f32 %v3365, %v3368
  %v3371 = vmul.f32 %v3366, %v3368
  %v3373 = vperm.slane %v3322, 0
  %v3375 = vadd.f32 %v3370, %v3373
  %v3376 = vadd.f32 %v3371, %v3373
  %s3377 = scalar_lea.vmem %s16, 64
  %v3378 = vld [vmem:[%s3377] sm:$0xff]
  %v3379 = vld [vmem:[%s3377 + $0x8] sm:$0xff]
  %v3380 = vld [vmem:[%s3377 + $0x10] sm:$0xff]
  %v3381 = vld [vmem:[%s3377 + $0x18] sm:$0xff]
  %v3382 = vld [vmem:[%s3377 + $0x20] sm:$0xff]
  %v3383 = vld [vmem:[%s3377 + $0x28] sm:$0xff]
  %v3384 = vld [vmem:[%s3377 + $0x30] sm:$0xff]
  %v3385 = vld [vmem:[%s3377 + $0x38] sm:$0xff]
  %v3386 = vpack.c.bf16 %v3376, %v3375
  %s3387 = scalar_lea.vmem %s17, 2
  %v3388 = vld [vmem:[%s3387] sm:$0x3]
  %v3390 = vperm.slane %v3388, 0
  %v3391 = vperm.slane %v3388, 1
  %v3402 = vunpack.c.l.b16 %v3378
  %v3403 = vunpack.c.h.b16 %v3378
  %v3404 = vunpack.c.l.b16 %v3379
  %v3405 = vunpack.c.h.b16 %v3379
  %v3406 = vunpack.c.l.b16 %v3380
  %v3407 = vunpack.c.h.b16 %v3380
  %v3408 = vunpack.c.l.b16 %v3381
  %v3409 = vunpack.c.h.b16 %v3381
  %v3410 = vunpack.c.l.b16 %v3382
  %v3411 = vunpack.c.h.b16 %v3382
  %v3412 = vunpack.c.l.b16 %v3383
  %v3413 = vunpack.c.h.b16 %v3383
  %v3414 = vunpack.c.l.b16 %v3384
  %v3415 = vunpack.c.h.b16 %v3384
  %v3416 = vunpack.c.l.b16 %v3385
  %v3417 = vunpack.c.h.b16 %v3385
  %v3418 = vpack.c.b16 %v3404, %v3402
  %v3419 = vpack.c.b16 %v3405, %v3403
  %v3420 = vpack.c.b16 %v3408, %v3406
  %v3421 = vpack.c.b16 %v3409, %v3407
  %v3422 = vpack.c.b16 %v3412, %v3410
  %v3423 = vpack.c.b16 %v3413, %v3411
  %v3424 = vpack.c.b16 %v3416, %v3414
  %v3425 = vpack.c.b16 %v3417, %v3415
  %v3435 = vsel %vm588, %v3386, 0
  %3437 = vmatpush.bf16.msra.mxu0 0
  %3438 = vmatpush.bf16.msra.mxu0 0
  %3439 = vmatpush.bf16.msra.mxu0 0
  %3440 = vmatpush.bf16.msra.mxu0 0
  %3441 = vmatpush.bf16.msra.mxu0 %v3424
  %3442 = vmatpush.bf16.msra.mxu0 %v3422
  %3443 = vmatpush.bf16.msra.mxu0 %v3420
  %3444 = vmatpush.bf16.msra.mxu0 %v3418
  %3445 = vmatmul.bf16.gmra.mxu0 %v3435
  %v3446 = vpop.f32.mrf.mxu0
  %v3447 = vadd.f32 %v3390, %v3446
  %v3448 = vpop.f32.mrf.mxu0
  %v3449 = vadd.f32 %v3390, %v3448
  %3450 = vdwg.mxu0
  %3451 = vmatpush.bf16.msra.mxu0 0
  %3452 = vmatpush.bf16.msra.mxu0 0
  %3453 = vmatpush.bf16.msra.mxu0 0
  %3454 = vmatpush.bf16.msra.mxu0 0
  %3455 = vmatpush.bf16.msra.mxu0 %v3425
  %3456 = vmatpush.bf16.msra.mxu0 %v3423
  %3457 = vmatpush.bf16.msra.mxu0 %v3421
  %3458 = vmatpush.bf16.msra.mxu0 %v3419
  %3459 = vmatmul.bf16.gmra.mxu0 %v3435
  %v3460 = vpop.f32.mrf.mxu0
  %v3461 = vadd.f32 %v3391, %v3460
  %v3462 = vpop.f32.mrf.mxu0
  %v3463 = vadd.f32 %v3391, %v3462
  %3464 = vdwg.mxu0
  %v3465 = vmul.f32 %v3447, 0.5
  %v3466 = vmul.f32 %v3461, 0.5
  %v3467 = vmul.f32 %v3449, 0.5
  %v3468 = vmul.f32 %v3463, 0.5
  %v3469 = vmul.f32 %v3447, 0.044715
  %v3470 = vmul.f32 %v3461, 0.044715
  %v3471 = vmul.f32 %v3449, 0.044715
  %v3472 = vmul.f32 %v3463, 0.044715
  %v3473 = vmul.f32 %v3469, %v3447
  %v3474 = vmul.f32 %v3470, %v3461
  %v3475 = vmul.f32 %v3471, %v3449
  %v3476 = vmul.f32 %v3472, %v3463
  %v3477 = vmul.f32 %v3473, %v3447
  %v3478 = vmul.f32 %v3474, %v3461
  %v3479 = vmul.f32 %v3475, %v3449
  %v3480 = vmul.f32 %v3476, %v3463
  %v3481 = vadd.f32 %v3447, %v3477
  %v3482 = vadd.f32 %v3461, %v3478
  %v3483 = vadd.f32 %v3449, %v3479
  %v3484 = vadd.f32 %v3463, %v3480
  %v3485 = vmul.f32 %v3481, 0.7978846
  %v3486 = vmul.f32 %v3482, 0.7978846
  %v3487 = vmul.f32 %v3483, 0.7978846
  %v3488 = vmul.f32 %v3484, 0.7978846
  %v3489 = vtanh.pop %v3485
  %v3490 = vtanh.pop %v3486
  %v3491 = vtanh.pop %v3487
  %v3492 = vtanh.pop %v3488
  %v3493 = vadd.f32 %v3489, 1.0
  %v3494 = vadd.f32 %v3490, 1.0
  %v3495 = vadd.f32 %v3491, 1.0
  %v3496 = vadd.f32 %v3492, 1.0
  %v3497 = vmul.f32 %v3465, %v3493
  %v3498 = vmul.f32 %v3466, %v3494
  %v3499 = vmul.f32 %v3467, %v3495
  %v3500 = vmul.f32 %v3468, %v3496
  %s3501 = scalar_lea.vmem %s18, 128
  %v3502 = vld [vmem:[%s3501] sm:$0xf]
  %v3503 = vld [vmem:[%s3501 + $0x4] sm:$0xf]
  %v3504 = vld [vmem:[%s3501 + $0x8] sm:$0xf]
  %v3505 = vld [vmem:[%s3501 + $0xc] sm:$0xf]
  %v3506 = vld [vmem:[%s3501 + $0x10] sm:$0xf]
  %v3507 = vld [vmem:[%s3501 + $0x14] sm:$0xf]
  %v3508 = vld [vmem:[%s3501 + $0x18] sm:$0xf]
  %v3509 = vld [vmem:[%s3501 + $0x1c] sm:$0xf]
  %v3510 = vld [vmem:[%s3501 + $0x20] sm:$0xf]
  %v3511 = vld [vmem:[%s3501 + $0x24] sm:$0xf]
  %v3512 = vld [vmem:[%s3501 + $0x28] sm:$0xf]
  %v3513 = vld [vmem:[%s3501 + $0x2c] sm:$0xf]
  %v3514 = vld [vmem:[%s3501 + $0x30] sm:$0xf]
  %v3515 = vld [vmem:[%s3501 + $0x34] sm:$0xf]
  %v3516 = vld [vmem:[%s3501 + $0x38] sm:$0xf]
  %v3517 = vld [vmem:[%s3501 + $0x3c] sm:$0xf]
  %v3518 = vld [vmem:[%s3501 + $0x40] sm:$0xf]
  %v3519 = vld [vmem:[%s3501 + $0x44] sm:$0xf]
  %v3520 = vld [vmem:[%s3501 + $0x48] sm:$0xf]
  %v3521 = vld [vmem:[%s3501 + $0x4c] sm:$0xf]
  %v3522 = vld [vmem:[%s3501 + $0x50] sm:$0xf]
  %v3523 = vld [vmem:[%s3501 + $0x54] sm:$0xf]
  %v3524 = vld [vmem:[%s3501 + $0x58] sm:$0xf]
  %v3525 = vld [vmem:[%s3501 + $0x5c] sm:$0xf]
  %v3526 = vld [vmem:[%s3501 + $0x60] sm:$0xf]
  %v3527 = vld [vmem:[%s3501 + $0x64] sm:$0xf]
  %v3528 = vld [vmem:[%s3501 + $0x68] sm:$0xf]
  %v3529 = vld [vmem:[%s3501 + $0x6c] sm:$0xf]
  %v3530 = vld [vmem:[%s3501 + $0x70] sm:$0xf]
  %v3531 = vld [vmem:[%s3501 + $0x74] sm:$0xf]
  %v3532 = vld [vmem:[%s3501 + $0x78] sm:$0xf]
  %v3533 = vld [vmem:[%s3501 + $0x7c] sm:$0xf]
  %v3534 = vpack.c.bf16 %v3499, %v3497
  %v3535 = vpack.c.bf16 %v3500, %v3498
  %v3568 = vunpack.c.l.b16 %v3502
  %v3569 = vunpack.c.l.b16 %v3503
  %v3570 = vunpack.c.l.b16 %v3504
  %v3571 = vunpack.c.l.b16 %v3505
  %v3572 = vunpack.c.l.b16 %v3506
  %v3573 = vunpack.c.l.b16 %v3507
  %v3574 = vunpack.c.l.b16 %v3508
  %v3575 = vunpack.c.l.b16 %v3509
  %v3576 = vunpack.c.l.b16 %v3510
  %v3577 = vunpack.c.l.b16 %v3511
  %v3578 = vunpack.c.l.b16 %v3512
  %v3579 = vunpack.c.l.b16 %v3513
  %v3580 = vunpack.c.l.b16 %v3514
  %v3581 = vunpack.c.l.b16 %v3515
  %v3582 = vunpack.c.l.b16 %v3516
  %v3583 = vunpack.c.l.b16 %v3517
  %v3584 = vunpack.c.l.b16 %v3518
  %v3585 = vunpack.c.l.b16 %v3519
  %v3586 = vunpack.c.l.b16 %v3520
  %v3587 = vunpack.c.l.b16 %v3521
  %v3588 = vunpack.c.l.b16 %v3522
  %v3589 = vunpack.c.l.b16 %v3523
  %v3590 = vunpack.c.l.b16 %v3524
  %v3591 = vunpack.c.l.b16 %v3525
  %v3592 = vunpack.c.l.b16 %v3526
  %v3593 = vunpack.c.l.b16 %v3527
  %v3594 = vunpack.c.l.b16 %v3528
  %v3595 = vunpack.c.l.b16 %v3529
  %v3596 = vunpack.c.l.b16 %v3530
  %v3597 = vunpack.c.l.b16 %v3531
  %v3598 = vunpack.c.l.b16 %v3532
  %v3599 = vunpack.c.l.b16 %v3533
  %v3600 = vpack.c.b16 %v3569, %v3568
  %v3601 = vpack.c.b16 %v3571, %v3570
  %v3602 = vpack.c.b16 %v3573, %v3572
  %v3603 = vpack.c.b16 %v3575, %v3574
  %v3604 = vpack.c.b16 %v3577, %v3576
  %v3605 = vpack.c.b16 %v3579, %v3578
  %v3606 = vpack.c.b16 %v3581, %v3580
  %v3607 = vpack.c.b16 %v3583, %v3582
  %v3608 = vpack.c.b16 %v3585, %v3584
  %v3609 = vpack.c.b16 %v3587, %v3586
  %v3610 = vpack.c.b16 %v3589, %v3588
  %v3611 = vpack.c.b16 %v3591, %v3590
  %v3612 = vpack.c.b16 %v3593, %v3592
  %v3613 = vpack.c.b16 %v3595, %v3594
  %v3614 = vpack.c.b16 %v3597, %v3596
  %v3615 = vpack.c.b16 %v3599, %v3598
  %3632 = vmatpush.bf16.msra.mxu0 %v3607
  %3633 = vmatpush.bf16.msra.mxu0 %v3606
  %3634 = vmatpush.bf16.msra.mxu0 %v3605
  %3635 = vmatpush.bf16.msra.mxu0 %v3604
  %3636 = vmatpush.bf16.msra.mxu0 %v3603
  %3637 = vmatpush.bf16.msra.mxu0 %v3602
  %3638 = vmatpush.bf16.msra.mxu0 %v3601
  %3639 = vmatpush.bf16.msra.mxu0 %v3600
  %3640 = vmatmul.bf16.gmra.mxu0 %v3534
  %v3641 = vpop.f32.mrf.mxu0
  %v3642 = vadd.f32 0.0, %v3641
  %v3643 = vpop.f32.mrf.mxu0
  %v3644 = vadd.f32 0.0, %v3643
  %3645 = vdwg.mxu0
  %3646 = vmatpush.bf16.msra.mxu0 %v3615
  %3647 = vmatpush.bf16.msra.mxu0 %v3614
  %3648 = vmatpush.bf16.msra.mxu0 %v3613
  %3649 = vmatpush.bf16.msra.mxu0 %v3612
  %3650 = vmatpush.bf16.msra.mxu0 %v3611
  %3651 = vmatpush.bf16.msra.mxu0 %v3610
  %3652 = vmatpush.bf16.msra.mxu0 %v3609
  %3653 = vmatpush.bf16.msra.mxu0 %v3608
  %3654 = vmatmul.bf16.gmra.mxu0 %v3535
  %v3655 = vpop.f32.mrf.mxu0
  %v3656 = vadd.f32 %v3642, %v3655
  %v3657 = vpop.f32.mrf.mxu0
  %v3658 = vadd.f32 %v3644, %v3657
  %3659 = vdwg.mxu0
  %v3660 = vadd.f32 %v3317, %v3656
  %v3661 = vadd.f32 %v3318, %v3658
  %s3662 = scalar_lea.vmem %s19, 1
  %v3663 = vld [vmem:[%s3662] sm:$0x1]
  %v3665 = vperm.slane %v3663, 0
  %v3667 = vadd.f32 %v3660, %v3665
  %v3668 = vadd.f32 %v3661, %v3665
  %v3669 = vld [vmem:[%s20] sm:$0x1]
  %v3670 = vld [vmem:[%s21] sm:$0x1]
  %v3671 = vsel %vm588, %v3667, 0.0
  %3672 = vadd.xlane.f32.xlu0 %v3671
  %v3673 = vpop.xlane.xlu0 %3672
  %v3674 = vsel %vm592, %v3668, 0.0
  %3675 = vadd.xlane.f32.xlu0 %v3674
  %v3676 = vpop.xlane.xlu0 %3675
  %v3677 = vmul.f32 %v3673, %v602
  %v3678 = vmul.f32 %v3676, %v602
  %v3679 = vsub.f32 %v3667, %v3677
  %v3680 = vsub.f32 %v3668, %v3678
  %v3681 = vmul.f32 %v3679, %v3679
  %v3682 = vmul.f32 %v3680, %v3680
  %v3683 = vsel %vm588, %v3681, 0.0
  %3684 = vadd.xlane.f32.xlu0 %v3683
  %v3685 = vpop.xlane.xlu0 %3684
  %v3686 = vsel %vm592, %v3682, 0.0
  %3687 = vadd.xlane.f32.xlu0 %v3686
  %v3688 = vpop.xlane.xlu0 %3687
  %v3689 = vmul.f32 %v3685, %v602
  %v3690 = vmul.f32 %v3688, %v602
  %v3691 = vadd.f32 %v3689, 1e-06
  %v3692 = vadd.f32 %v3690, 1e-06
  %v3693 = vrsqrt.pop %v3691
  %v3694 = vmul.f32 %v3693, %v3691
  %v3695 = vmul.f32 %v3694, %v3693
  %v3696 = vmul.f32 0.5, %v3695
  %v3697 = vsub.f32 1.5, %v3696
  %v3698 = vmul.f32 %v3693, %v3697
  %vm3699 = vweird.f32 %v3691
  %vm3700 = vweird.f32 %v3693
  %vm3701 = vmor %vm3699, %vm3700
  %v3702 = vsel %vm3701, %v3693, %v3698
  %v3703 = vrsqrt.pop %v3692
  %v3704 = vmul.f32 %v3703, %v3692
  %v3705 = vmul.f32 %v3704, %v3703
  %v3706 = vmul.f32 0.5, %v3705
  %v3707 = vsub.f32 1.5, %v3706
  %v3708 = vmul.f32 %v3703, %v3707
  %vm3709 = vweird.f32 %v3692
  %vm3710 = vweird.f32 %v3703
  %vm3711 = vmor %vm3709, %vm3710
  %v3712 = vsel %vm3711, %v3703, %v3708
  %v3713 = vmul.f32 %v3679, %v3702
  %v3714 = vmul.f32 %v3680, %v3712
  %v3716 = vperm.slane %v3669, 0
  %v3718 = vmul.f32 %v3713, %v3716
  %v3719 = vmul.f32 %v3714, %v3716
  %v3721 = vperm.slane %v3670, 0
  %v3723 = vadd.f32 %v3718, %v3721
  %v3724 = vadd.f32 %v3719, %v3721
  %v3725 = vld [vmem:[%s22] sm:$0xf]
  %v3726 = vld [vmem:[%s22 + $0x4] sm:$0xf]
  %v3727 = vld [vmem:[%s22 + $0x8] sm:$0xf]
  %v3728 = vld [vmem:[%s22 + $0xc] sm:$0xf]
  %v3729 = vld [vmem:[%s22 + $0x10] sm:$0xf]
  %v3730 = vld [vmem:[%s22 + $0x14] sm:$0xf]
  %v3731 = vld [vmem:[%s22 + $0x18] sm:$0xf]
  %v3732 = vld [vmem:[%s22 + $0x1c] sm:$0xf]
  %v3733 = vpack.c.bf16 %v3724, %v3723
  %v3734 = vld [vmem:[%s23] sm:$0x1]
  %v3736 = vperm.slane %v3734, 0
  %v3746 = vunpack.c.l.b16 %v3725
  %v3747 = vunpack.c.l.b16 %v3726
  %v3748 = vunpack.c.l.b16 %v3727
  %v3749 = vunpack.c.l.b16 %v3728
  %v3750 = vunpack.c.l.b16 %v3729
  %v3751 = vunpack.c.l.b16 %v3730
  %v3752 = vunpack.c.l.b16 %v3731
  %v3753 = vunpack.c.l.b16 %v3732
  %v3754 = vpack.c.b16 %v3747, %v3746
  %v3755 = vpack.c.b16 %v3749, %v3748
  %v3756 = vpack.c.b16 %v3751, %v3750
  %v3757 = vpack.c.b16 %v3753, %v3752
  %v3763 = vsel %vm588, %v3733, 0
  %3765 = vmatpush.bf16.msra.mxu0 0
  %3766 = vmatpush.bf16.msra.mxu0 0
  %3767 = vmatpush.bf16.msra.mxu0 0
  %3768 = vmatpush.bf16.msra.mxu0 0
  %3769 = vmatpush.bf16.msra.mxu0 %v3757
  %3770 = vmatpush.bf16.msra.mxu0 %v3756
  %3771 = vmatpush.bf16.msra.mxu0 %v3755
  %3772 = vmatpush.bf16.msra.mxu0 %v3754
  %3773 = vmatmul.bf16.gmra.mxu0 %v3763
  %v3774 = vpop.f32.mrf.mxu0
  %v3775 = vadd.f32 %v3736, %v3774
  %v3776 = vpop.f32.mrf.mxu0
  %v3777 = vadd.f32 %v3736, %v3776
  %3778 = vdwg.mxu0
  %3779 = vst [vmem:[%s24] sm:$0xff] %v3775
  %3780 = vst [vmem:[%s24 + $0x8] sm:$0x3] %v3777
  // Predicated region
  $region98: #{vit_forward.1} parent=0 // pred_check
    _
  $region99: #{vit_forward.1} parent=0 // pred_check_branch
    %3782 = sbr.rel (0) target = $region101
  $region100: #{vit_forward.1} parent=0 // pred_region
    _
  $region101: #{vit_forward.1} parent=0 // pred_fallthru
    _
  // Predicated region
  $region102: #{vit_forward.1} parent=0 // pred_check
    _
  $region103: #{vit_forward.1} parent=0 // pred_check_branch
    %3784 = sbr.rel (0) target = $region105
  $region104: #{vit_forward.1} parent=0 // pred_region
    _
  $region105: #{vit_forward.1} parent=0 // pred_fallthru
    _

</llo_original>
